<compile_context>
chip_gen: v7x
topology: tpu7x:2x2x1
jax: 0.10.0
libtpu: 0.0.40
codegen_flags: <defaults>
</compile_context>

<pallas_src>
import jax
import jax.numpy as jnp
from jax import lax
from jax.experimental import pallas as pl
from jax.experimental.pallas import tpu as pltpu

EPS = 1e-12
HIDDEN = 768


def _add_layernorm_kernel(x_ref, y_ref, g_ref, b_ref, o_ref):
    # Elementwise residual add (VPU), fused with the normalization.
    s = x_ref[...] + y_ref[...]                         # (row_tile, H) f32
    inv_h = 1.0 / HIDDEN
    # Two independent lane reductions (both XLU) that can overlap with each
    # other and with the VPU add; avoids the serial two-pass variance chain.
    mean = jnp.sum(s, axis=-1, keepdims=True) * inv_h
    mean_sq = jnp.sum(s * s, axis=-1, keepdims=True) * inv_h
    # Biased variance (matches torch.nn.LayerNorm); clamp guards tiny negative
    # values from f32 rounding in E[s^2] - mean^2.
    var = jnp.maximum(mean_sq - mean * mean, 0.0)
    inv = lax.rsqrt(var + EPS)                          # EUP
    o_ref[...] = (s - mean) * inv * g_ref[...] + b_ref[...]


def _num_grid_steps(rows):
    # v7x has 2 TensorCores per chip -> balanced 2-step parallel grid.
    # v5e/v6e have a single TC -> one big block (grid=(1,)) minimizes per-step
    # pipeline overhead on this tiny, mem-bound kernel.
    steps = 1
    try:
        kind = jax.devices()[0].device_kind.lower()
        if "v7" in kind:
            steps = 2
    except Exception:
        steps = 1
    if rows % steps != 0 or (rows // steps) % 8 != 0:
        steps = 1
    return steps


def add_layernorm(x, y, gamma, beta):
    """x, y: [B, S, H]; gamma, beta: [H]. Returns LayerNorm(x + y) over the last dim."""
    B, S, H = x.shape
    assert H == HIDDEN
    rows = B * S
    assert rows % 8 == 0, "rows must be a multiple of 8 (sublane tiling)"

    x2 = x.reshape(rows, H)
    y2 = y.reshape(rows, H)
    g2 = gamma.reshape(1, H)
    b2 = beta.reshape(1, H)

    steps = _num_grid_steps(rows)
    row_tile = rows // steps

    out = pl.pallas_call(
        _add_layernorm_kernel,
        out_shape=jax.ShapeDtypeStruct((rows, H), x.dtype),
        grid=(steps,),
        in_specs=[
            pl.BlockSpec((row_tile, H), lambda i: (i, 0)),
            pl.BlockSpec((row_tile, H), lambda i: (i, 0)),
            pl.BlockSpec((1, H), lambda i: (0, 0)),  # gamma (grid-invariant)
            pl.BlockSpec((1, H), lambda i: (0, 0)),  # beta  (grid-invariant)
        ],
        out_specs=pl.BlockSpec((row_tile, H), lambda i: (i, 0)),
        compiler_params=pltpu.CompilerParams(
            dimension_semantics=("parallel",),
        ),
    )(x2, y2, g2, b2)

    return out.reshape(B, S, H)


if __name__ == "__main__":
    key = jax.random.PRNGKey(0)
    k1, k2, k3, k4 = jax.random.split(key, 4)

    # Shapes implied by the module: [1, 384, 768], LayerNorm over the 768 axis.
    B, S, H = 1, 384, HIDDEN
    x177 = jax.random.normal(k1, (B, S, H), dtype=jnp.float32)
    x207 = jax.random.normal(k2, (B, S, H), dtype=jnp.float32)

    # torch default affine params are ones/zeros; use non-trivial deterministic
    # values to actually exercise the affine path.
    gamma = 1.0 + 0.02 * jax.random.normal(k3, (H,), dtype=jnp.float32)
    beta = 0.02 * jax.random.normal(k4, (H,), dtype=jnp.float32)

    out = add_layernorm(x177, x207, gamma, beta)
    out = jax.block_until_ready(out)

    # Reference check in plain JAX (two-pass centered variance, like torch).
    s = x177 + x207
    mu = jnp.mean(s, axis=-1, keepdims=True)
    var = jnp.mean((s - mu) ** 2, axis=-1, keepdims=True)
    ref = (s - mu) / jnp.sqrt(var + EPS) * gamma + beta
    assert jnp.allclose(out, ref, atol=1e-5, rtol=1e-5), "mismatch vs reference"

    print("KERNEL_OK")
</pallas_src>

<mosaic_0001>
module attributes {stable_mosaic.version = 11 : i64} {
  func.func @_add_layernorm_kernel(%arg0: i32, %arg1: memref<384x768xf32, #tpu.memory_space<vmem>>, %arg2: memref<384x768xf32, #tpu.memory_space<vmem>>, %arg3: memref<1x768xf32, #tpu.memory_space<vmem>>, %arg4: memref<1x768xf32, #tpu.memory_space<vmem>>, %arg5: memref<384x768xf32, #tpu.memory_space<vmem>>) attributes {dimension_semantics = [#tpu.dimension_semantics<parallel>], iteration_bounds = array<i64: 1>, scalar_prefetch = 0 : i64, scratch_operands = 0 : i64, tpu.core_type = #tpu.core_type<tc>, window_params = [{transform_indices = @transform_0, window_bounds = array<i64: 384, 768>}, {transform_indices = @transform_1, window_bounds = array<i64: 384, 768>}, {pipeline_mode = #tpu.pipeline_mode<synchronous>, transform_indices = @transform_2, window_bounds = array<i64: 1, 768>}, {pipeline_mode = #tpu.pipeline_mode<synchronous>, transform_indices = @transform_3, window_bounds = array<i64: 1, 768>}, {transform_indices = @transform_4, window_bounds = array<i64: 384, 768>}]} {
    %c0 = arith.constant 0 : index
    %c0_0 = arith.constant 0 : index
    %0 = vector.load %arg1[%c0, %c0_0] : memref<384x768xf32, #tpu.memory_space<vmem>>, vector<384x768xf32>
    %c0_1 = arith.constant 0 : index
    %c0_2 = arith.constant 0 : index
    %1 = vector.load %arg2[%c0_1, %c0_2] : memref<384x768xf32, #tpu.memory_space<vmem>>, vector<384x768xf32>
    %2 = arith.addf %0, %1 : vector<384x768xf32>
    %cst = arith.constant dense<0.000000e+00> : vector<384xf32>
    %3 = vector.multi_reduction <add>, %2, %cst [1] : vector<384x768xf32> to vector<384xf32>
    %4 = vector.shape_cast %3 : vector<384xf32> to vector<384x1xf32>
    %cst_3 = arith.constant 0.00130208337 : f32
    %5 = vector.broadcast %cst_3 : f32 to vector<384x1xf32>
    %6 = arith.mulf %4, %5 : vector<384x1xf32>
    %7 = arith.mulf %2, %2 : vector<384x768xf32>
    %cst_4 = arith.constant dense<0.000000e+00> : vector<384xf32>
    %8 = vector.multi_reduction <add>, %7, %cst_4 [1] : vector<384x768xf32> to vector<384xf32>
    %9 = vector.shape_cast %8 : vector<384xf32> to vector<384x1xf32>
    %cst_5 = arith.constant 0.00130208337 : f32
    %10 = vector.broadcast %cst_5 : f32 to vector<384x1xf32>
    %11 = arith.mulf %9, %10 : vector<384x1xf32>
    %12 = arith.mulf %6, %6 : vector<384x1xf32>
    %13 = arith.subf %11, %12 : vector<384x1xf32>
    %cst_6 = arith.constant 0.000000e+00 : f32
    %14 = vector.broadcast %cst_6 : f32 to vector<384x1xf32>
    %15 = arith.maximumf %13, %14 : vector<384x1xf32>
    %cst_7 = arith.constant 9.99999996E-13 : f32
    %16 = vector.broadcast %cst_7 : f32 to vector<384x1xf32>
    %17 = arith.addf %15, %16 : vector<384x1xf32>
    %18 = math.rsqrt %17 : vector<384x1xf32>
    %19 = vector.broadcast %6 : vector<384x1xf32> to vector<384x768xf32>
    %20 = arith.subf %2, %19 : vector<384x768xf32>
    %21 = vector.broadcast %18 : vector<384x1xf32> to vector<384x768xf32>
    %22 = arith.mulf %20, %21 : vector<384x768xf32>
    %c0_8 = arith.constant 0 : index
    %c0_9 = arith.constant 0 : index
    %23 = vector.load %arg3[%c0_8, %c0_9] : memref<1x768xf32, #tpu.memory_space<vmem>>, vector<1x768xf32>
    %24 = vector.broadcast %23 : vector<1x768xf32> to vector<384x768xf32>
    %25 = arith.mulf %22, %24 : vector<384x768xf32>
    %c0_10 = arith.constant 0 : index
    %c0_11 = arith.constant 0 : index
    %26 = vector.load %arg4[%c0_10, %c0_11] : memref<1x768xf32, #tpu.memory_space<vmem>>, vector<1x768xf32>
    %27 = vector.broadcast %26 : vector<1x768xf32> to vector<384x768xf32>
    %28 = arith.addf %25, %27 : vector<384x768xf32>
    %c0_12 = arith.constant 0 : index
    %c0_13 = arith.constant 0 : index
    %29 = vector.load %arg5[%c0_12, %c0_13] : memref<384x768xf32, #tpu.memory_space<vmem>>, vector<384x768xf32>
    tpu.vector_store %arg5[%c0_12, %c0_13], %28 {strides = array<i32>} : memref<384x768xf32, #tpu.memory_space<vmem>>, vector<384x768xf32>,
    return
  }
  func.func @transform_0(%arg0: i32) -> (i32, i32) {
    %c0_i32 = arith.constant 0 : i32
    %c0_i32_0 = arith.constant 0 : i32
    return %arg0, %c0_i32 : i32, i32
  }
  func.func @transform_1(%arg0: i32) -> (i32, i32) {
    %c0_i32 = arith.constant 0 : i32
    %c0_i32_0 = arith.constant 0 : i32
    return %arg0, %c0_i32 : i32, i32
  }
  func.func @transform_2(%arg0: i32) -> (i32, i32) {
    %c0_i32 = arith.constant 0 : i32
    %c0_i32_0 = arith.constant 0 : i32
    %c0_i32_1 = arith.constant 0 : i32
    return %c0_i32, %c0_i32_0 : i32, i32
  }
  func.func @transform_3(%arg0: i32) -> (i32, i32) {
    %c0_i32 = arith.constant 0 : i32
    %c0_i32_0 = arith.constant 0 : i32
    %c0_i32_1 = arith.constant 0 : i32
    return %c0_i32, %c0_i32_0 : i32, i32
  }
  func.func @transform_4(%arg0: i32) -> (i32, i32) {
    %c0_i32 = arith.constant 0 : i32
    %c0_i32_0 = arith.constant 0 : i32
    return %arg0, %c0_i32 : i32, i32
  }
}

</mosaic_0001>

<llo_original>
// kernel: tpu_custom_call.1
$region0: #{tpu_custom_call.1}
  #allocation0 [shape = 'u32[]', space=smem, size = 0x4, offset = 0x4, fixed_abs, tag = 'smem constant byte address 0x4 - core index']
  #allocation1 [shape = 'u32[144,128]{1,0:T(1,128)}', space=vmem, size = 0x12000, scoped, tag = 'internal scratch']
  %s0 = inlined_call_operand.hbm [shape: f32[384,768], index: 0, kind: input, shape index: {}]
  %s1 = inlined_call_operand.hbm [shape: f32[384,768], index: 1, kind: input, shape index: {}]
  %s2 = inlined_call_operand.hbm [shape: f32[1,768], index: 2, kind: input, shape index: {}]
  %s3 = inlined_call_operand.hbm [shape: f32[1,768], index: 3, kind: input, shape index: {}]
  %s4 = inlined_call_operand.hbm [shape: f32[384,768], index: 4, kind: output, shape index: {}]
  %s5 = sld [smem:[#allocation0]]
  $region42: #{tpu_custom_call.1} parent=0
    _
  %s7 = ssub.s32 1, %s5
  %s8 = scalar_select 0, %s7, %s5
  $region1: #{tpu_custom_call.1} parent=0
    #allocation2 [shape = 'u8[1179648]{0}', space=vmem, size = 0x120000, scoped, tag = 'input window, operand 0, single buffered']
    #allocation3 [shape = 's32[1]{0}', space=sflag, size = 0x4, scoped, tag = 'scoped memory for tpu_custom_call.1']
    #allocation4 [shape = 's32[1]{0}', space=sflag, size = 0x4, scoped, tag = 'scoped memory for tpu_custom_call.1']
    #allocation5 [shape = 'u8[1179648]{0}', space=vmem, size = 0x120000, scoped, tag = 'input window, operand 1, single buffered']
    #allocation6 [shape = 's32[1]{0}', space=sflag, size = 0x4, scoped, tag = 'scoped memory for tpu_custom_call.1']
    #allocation7 [shape = 'u8[3072]{0}', space=vmem, size = 0xc00, scoped, tag = 'input window, operand 2, single buffered']
    #allocation8 [shape = 'u8[3072]{0}', space=vmem, size = 0xc00, scoped, tag = 'input window, operand 3, single buffered']
    #allocation9 [shape = 's32[1]{0}', space=sflag, size = 0x4, scoped, tag = 'scoped memory for tpu_custom_call.1']
    #allocation10 [shape = 'u8[1179648]{0}', space=vmem, size = 0x120000, scoped, tag = 'output window, operand 0, single buffered']
    %9 = vsyncpa [#allocation3], 0
    %10 = vsyncpa [#allocation6], 0
    %11 = vsyncpa [#allocation9], 0
    %12 = vsyncpa [#allocation4], 0
    // Predicated region
    $region2: #{tpu_custom_call.1} parent=1 // pred_check
      _
    $region3: #{tpu_custom_call.1} parent=1 // pred_check_branch
      %14 = sbr.rel (0) target = $region5
    $region4: #{tpu_custom_call.1} parent=1 // pred_region
      %s16 = ssub.s32 36864, 36864
      %17 = vsyncadd [#allocation3], %s16
      %s18 = sshll.u32 [#allocation2], 4
      %s19 = int_to_ptr.vmem [resolvable:$true] %s18
      %24 = dma.hbm_to_vmem [thread:$0]  %s0, 36864, %s19, [#allocation3], 768, 768, 48
    $region5: #{tpu_custom_call.1} parent=1 // pred_fallthru
      _
    // Predicated region
    $region6: #{tpu_custom_call.1} parent=1 // pred_check
      _
    $region7: #{tpu_custom_call.1} parent=1 // pred_check_branch
      %26 = sbr.rel (0) target = $region9
    $region8: #{tpu_custom_call.1} parent=1 // pred_region
      %s28 = ssub.s32 36864, 36864
      %29 = vsyncadd [#allocation6], %s28
      %s30 = sshll.u32 [#allocation5], 4
      %s31 = int_to_ptr.vmem [resolvable:$true] %s30
      %36 = dma.hbm_to_vmem [thread:$0]  %s1, 36864, %s31, [#allocation6], 768, 768, 48
    $region9: #{tpu_custom_call.1} parent=1 // pred_fallthru
      _
    // Predicated region
    $region10: #{tpu_custom_call.1} parent=1 // pred_check
      _
    $region11: #{tpu_custom_call.1} parent=1 // pred_check_branch
      %38 = sbr.rel (0) target = $region13
    $region12: #{tpu_custom_call.1} parent=1 // pred_region
      %s40 = ssub.s32 96, 96
      %41 = vsyncadd [#allocation6], %s40
      %s43 = sshll.u32 [#allocation7], 4
      %s44 = int_to_ptr.vmem [resolvable:$true] %s43
      %46 = dma.hbm_to_vmem [thread:$0]  %s2, 96, %s44, [#allocation6]
    $region13: #{tpu_custom_call.1} parent=1 // pred_fallthru
      _
    // Predicated region
    $region14: #{tpu_custom_call.1} parent=1 // pred_check
      _
    $region15: #{tpu_custom_call.1} parent=1 // pred_check_branch
      %48 = sbr.rel (0) target = $region17
    $region16: #{tpu_custom_call.1} parent=1 // pred_region
      %s50 = ssub.s32 96, 96
      %51 = vsyncadd [#allocation9], %s50
      %s53 = sshll.u32 [#allocation8], 4
      %s54 = int_to_ptr.vmem [resolvable:$true] %s53
      %56 = dma.hbm_to_vmem [thread:$0]  %s3, 96, %s54, [#allocation9]
    $region17: #{tpu_custom_call.1} parent=1 // pred_fallthru
      _
    // Predicated region
    $region18: #{tpu_custom_call.1} parent=1 // pred_check
      _
    $region19: #{tpu_custom_call.1} parent=1 // pred_check_branch
      %58 = sbr.rel (0) target = $region21
    $region20: #{tpu_custom_call.1} parent=1 // pred_region
      %59 = dma.done [#allocation3], 36864
    $region21: #{tpu_custom_call.1} parent=1 // pred_fallthru
      _
    // Predicated region
    $region22: #{tpu_custom_call.1} parent=1 // pred_check
      _
    $region23: #{tpu_custom_call.1} parent=1 // pred_check_branch
      %61 = sbr.rel (0) target = $region25
    $region24: #{tpu_custom_call.1} parent=1 // pred_region
      %62 = dma.done [#allocation6], 36864
    $region25: #{tpu_custom_call.1} parent=1 // pred_fallthru
      _
    // Predicated region
    $region26: #{tpu_custom_call.1} parent=1 // pred_check
      _
    $region27: #{tpu_custom_call.1} parent=1 // pred_check_branch
      %64 = sbr.rel (0) target = $region29
    $region28: #{tpu_custom_call.1} parent=1 // pred_region
      %65 = dma.done [#allocation6], 96
    $region29: #{tpu_custom_call.1} parent=1 // pred_fallthru
      _
    // Predicated region
    $region30: #{tpu_custom_call.1} parent=1 // pred_check
      _
    $region31: #{tpu_custom_call.1} parent=1 // pred_check_branch
      %67 = sbr.rel (0) target = $region33
    $region32: #{tpu_custom_call.1} parent=1 // pred_region
      %68 = dma.done [#allocation9], 96
    $region33: #{tpu_custom_call.1} parent=1 // pred_fallthru
      _
    %v69 = vld [vmem:[#allocation2] sm:$0xff]
    %v70 = vld [vmem:[#allocation2 + $0x8] sm:$0xff]
    %v71 = vld [vmem:[#allocation2 + $0x10] sm:$0xff]
    %v72 = vld [vmem:[#allocation2 + $0x18] sm:$0xff]
    %v73 = vld [vmem:[#allocation2 + $0x20] sm:$0xff]
    %v74 = vld [vmem:[#allocation2 + $0x28] sm:$0xff]
    %v75 = vld [vmem:[#allocation2 + $0x30] sm:$0xff]
    %v76 = vld [vmem:[#allocation2 + $0x38] sm:$0xff]
    %v77 = vld [vmem:[#allocation2 + $0x40] sm:$0xff]
    %v78 = vld [vmem:[#allocation2 + $0x48] sm:$0xff]
    %v79 = vld [vmem:[#allocation2 + $0x50] sm:$0xff]
    %v80 = vld [vmem:[#allocation2 + $0x58] sm:$0xff]
    %v81 = vld [vmem:[#allocation2 + $0x60] sm:$0xff]
    %v82 = vld [vmem:[#allocation2 + $0x68] sm:$0xff]
    %v83 = vld [vmem:[#allocation2 + $0x70] sm:$0xff]
    %v84 = vld [vmem:[#allocation2 + $0x78] sm:$0xff]
    %v85 = vld [vmem:[#allocation2 + $0x80] sm:$0xff]
    %v86 = vld [vmem:[#allocation2 + $0x88] sm:$0xff]
    %v87 = vld [vmem:[#allocation2 + $0x90] sm:$0xff]
    %v88 = vld [vmem:[#allocation2 + $0x98] sm:$0xff]
    %v89 = vld [vmem:[#allocation2 + $0xa0] sm:$0xff]
    %v90 = vld [vmem:[#allocation2 + $0xa8] sm:$0xff]
    %v91 = vld [vmem:[#allocation2 + $0xb0] sm:$0xff]
    %v92 = vld [vmem:[#allocation2 + $0xb8] sm:$0xff]
    %v93 = vld [vmem:[#allocation2 + $0xc0] sm:$0xff]
    %v94 = vld [vmem:[#allocation2 + $0xc8] sm:$0xff]
    %v95 = vld [vmem:[#allocation2 + $0xd0] sm:$0xff]
    %v96 = vld [vmem:[#allocation2 + $0xd8] sm:$0xff]
    %v97 = vld [vmem:[#allocation2 + $0xe0] sm:$0xff]
    %v98 = vld [vmem:[#allocation2 + $0xe8] sm:$0xff]
    %v99 = vld [vmem:[#allocation2 + $0xf0] sm:$0xff]
    %v100 = vld [vmem:[#allocation2 + $0xf8] sm:$0xff]
    %v101 = vld [vmem:[#allocation2 + $0x100] sm:$0xff]
    %v102 = vld [vmem:[#allocation2 + $0x108] sm:$0xff]
    %v103 = vld [vmem:[#allocation2 + $0x110] sm:$0xff]
    %v104 = vld [vmem:[#allocation2 + $0x118] sm:$0xff]
    %v105 = vld [vmem:[#allocation2 + $0x120] sm:$0xff]
    %v106 = vld [vmem:[#allocation2 + $0x128] sm:$0xff]
    %v107 = vld [vmem:[#allocation2 + $0x130] sm:$0xff]
    %v108 = vld [vmem:[#allocation2 + $0x138] sm:$0xff]
    %v109 = vld [vmem:[#allocation2 + $0x140] sm:$0xff]
    %v110 = vld [vmem:[#allocation2 + $0x148] sm:$0xff]
    %v111 = vld [vmem:[#allocation2 + $0x150] sm:$0xff]
    %v112 = vld [vmem:[#allocation2 + $0x158] sm:$0xff]
    %v113 = vld [vmem:[#allocation2 + $0x160] sm:$0xff]
    %v114 = vld [vmem:[#allocation2 + $0x168] sm:$0xff]
    %v115 = vld [vmem:[#allocation2 + $0x170] sm:$0xff]
    %v116 = vld [vmem:[#allocation2 + $0x178] sm:$0xff]
    %v117 = vld [vmem:[#allocation2 + $0x180] sm:$0xff]
    %v118 = vld [vmem:[#allocation2 + $0x188] sm:$0xff]
    %v119 = vld [vmem:[#allocation2 + $0x190] sm:$0xff]
    %v120 = vld [vmem:[#allocation2 + $0x198] sm:$0xff]
    %v121 = vld [vmem:[#allocation2 + $0x1a0] sm:$0xff]
    %v122 = vld [vmem:[#allocation2 + $0x1a8] sm:$0xff]
    %v123 = vld [vmem:[#allocation2 + $0x1b0] sm:$0xff]
    %v124 = vld [vmem:[#allocation2 + $0x1b8] sm:$0xff]
    %v125 = vld [vmem:[#allocation2 + $0x1c0] sm:$0xff]
    %v126 = vld [vmem:[#allocation2 + $0x1c8] sm:$0xff]
    %v127 = vld [vmem:[#allocation2 + $0x1d0] sm:$0xff]
    %v128 = vld [vmem:[#allocation2 + $0x1d8] sm:$0xff]
    %v129 = vld [vmem:[#allocation2 + $0x1e0] sm:$0xff]
    %v130 = vld [vmem:[#allocation2 + $0x1e8] sm:$0xff]
    %v131 = vld [vmem:[#allocation2 + $0x1f0] sm:$0xff]
    %v132 = vld [vmem:[#allocation2 + $0x1f8] sm:$0xff]
    %v133 = vld [vmem:[#allocation2 + $0x200] sm:$0xff]
    %v134 = vld [vmem:[#allocation2 + $0x208] sm:$0xff]
    %v135 = vld [vmem:[#allocation2 + $0x210] sm:$0xff]
    %v136 = vld [vmem:[#allocation2 + $0x218] sm:$0xff]
    %v137 = vld [vmem:[#allocation2 + $0x220] sm:$0xff]
    %v138 = vld [vmem:[#allocation2 + $0x228] sm:$0xff]
    %v139 = vld [vmem:[#allocation2 + $0x230] sm:$0xff]
    %v140 = vld [vmem:[#allocation2 + $0x238] sm:$0xff]
    %v141 = vld [vmem:[#allocation2 + $0x240] sm:$0xff]
    %v142 = vld [vmem:[#allocation2 + $0x248] sm:$0xff]
    %v143 = vld [vmem:[#allocation2 + $0x250] sm:$0xff]
    %v144 = vld [vmem:[#allocation2 + $0x258] sm:$0xff]
    %v145 = vld [vmem:[#allocation2 + $0x260] sm:$0xff]
    %v146 = vld [vmem:[#allocation2 + $0x268] sm:$0xff]
    %v147 = vld [vmem:[#allocation2 + $0x270] sm:$0xff]
    %v148 = vld [vmem:[#allocation2 + $0x278] sm:$0xff]
    %v149 = vld [vmem:[#allocation2 + $0x280] sm:$0xff]
    %v150 = vld [vmem:[#allocation2 + $0x288] sm:$0xff]
    %v151 = vld [vmem:[#allocation2 + $0x290] sm:$0xff]
    %v152 = vld [vmem:[#allocation2 + $0x298] sm:$0xff]
    %v153 = vld [vmem:[#allocation2 + $0x2a0] sm:$0xff]
    %v154 = vld [vmem:[#allocation2 + $0x2a8] sm:$0xff]
    %v155 = vld [vmem:[#allocation2 + $0x2b0] sm:$0xff]
    %v156 = vld [vmem:[#allocation2 + $0x2b8] sm:$0xff]
    %v157 = vld [vmem:[#allocation2 + $0x2c0] sm:$0xff]
    %v158 = vld [vmem:[#allocation2 + $0x2c8] sm:$0xff]
    %v159 = vld [vmem:[#allocation2 + $0x2d0] sm:$0xff]
    %v160 = vld [vmem:[#allocation2 + $0x2d8] sm:$0xff]
    %v161 = vld [vmem:[#allocation2 + $0x2e0] sm:$0xff]
    %v162 = vld [vmem:[#allocation2 + $0x2e8] sm:$0xff]
    %v163 = vld [vmem:[#allocation2 + $0x2f0] sm:$0xff]
    %v164 = vld [vmem:[#allocation2 + $0x2f8] sm:$0xff]
    %v165 = vld [vmem:[#allocation2 + $0x300] sm:$0xff]
    %v166 = vld [vmem:[#allocation2 + $0x308] sm:$0xff]
    %v167 = vld [vmem:[#allocation2 + $0x310] sm:$0xff]
    %v168 = vld [vmem:[#allocation2 + $0x318] sm:$0xff]
    %v169 = vld [vmem:[#allocation2 + $0x320] sm:$0xff]
    %v170 = vld [vmem:[#allocation2 + $0x328] sm:$0xff]
    %v171 = vld [vmem:[#allocation2 + $0x330] sm:$0xff]
    %v172 = vld [vmem:[#allocation2 + $0x338] sm:$0xff]
    %v173 = vld [vmem:[#allocation2 + $0x340] sm:$0xff]
    %v174 = vld [vmem:[#allocation2 + $0x348] sm:$0xff]
    %v175 = vld [vmem:[#allocation2 + $0x350] sm:$0xff]
    %v176 = vld [vmem:[#allocation2 + $0x358] sm:$0xff]
    %v177 = vld [vmem:[#allocation2 + $0x360] sm:$0xff]
    %v178 = vld [vmem:[#allocation2 + $0x368] sm:$0xff]
    %v179 = vld [vmem:[#allocation2 + $0x370] sm:$0xff]
    %v180 = vld [vmem:[#allocation2 + $0x378] sm:$0xff]
    %v181 = vld [vmem:[#allocation2 + $0x380] sm:$0xff]
    %v182 = vld [vmem:[#allocation2 + $0x388] sm:$0xff]
    %v183 = vld [vmem:[#allocation2 + $0x390] sm:$0xff]
    %v184 = vld [vmem:[#allocation2 + $0x398] sm:$0xff]
    %v185 = vld [vmem:[#allocation2 + $0x3a0] sm:$0xff]
    %v186 = vld [vmem:[#allocation2 + $0x3a8] sm:$0xff]
    %v187 = vld [vmem:[#allocation2 + $0x3b0] sm:$0xff]
    %v188 = vld [vmem:[#allocation2 + $0x3b8] sm:$0xff]
    %v189 = vld [vmem:[#allocation2 + $0x3c0] sm:$0xff]
    %v190 = vld [vmem:[#allocation2 + $0x3c8] sm:$0xff]
    %v191 = vld [vmem:[#allocation2 + $0x3d0] sm:$0xff]
    %v192 = vld [vmem:[#allocation2 + $0x3d8] sm:$0xff]
    %v193 = vld [vmem:[#allocation2 + $0x3e0] sm:$0xff]
    %v194 = vld [vmem:[#allocation2 + $0x3e8] sm:$0xff]
    %v195 = vld [vmem:[#allocation2 + $0x3f0] sm:$0xff]
    %v196 = vld [vmem:[#allocation2 + $0x3f8] sm:$0xff]
    %v197 = vld [vmem:[#allocation2 + $0x400] sm:$0xff]
    %v198 = vld [vmem:[#allocation2 + $0x408] sm:$0xff]
    %v199 = vld [vmem:[#allocation2 + $0x410] sm:$0xff]
    %v200 = vld [vmem:[#allocation2 + $0x418] sm:$0xff]
    %v201 = vld [vmem:[#allocation2 + $0x420] sm:$0xff]
    %v202 = vld [vmem:[#allocation2 + $0x428] sm:$0xff]
    %v203 = vld [vmem:[#allocation2 + $0x430] sm:$0xff]
    %v204 = vld [vmem:[#allocation2 + $0x438] sm:$0xff]
    %v205 = vld [vmem:[#allocation2 + $0x440] sm:$0xff]
    %v206 = vld [vmem:[#allocation2 + $0x448] sm:$0xff]
    %v207 = vld [vmem:[#allocation2 + $0x450] sm:$0xff]
    %v208 = vld [vmem:[#allocation2 + $0x458] sm:$0xff]
    %v209 = vld [vmem:[#allocation2 + $0x460] sm:$0xff]
    %v210 = vld [vmem:[#allocation2 + $0x468] sm:$0xff]
    %v211 = vld [vmem:[#allocation2 + $0x470] sm:$0xff]
    %v212 = vld [vmem:[#allocation2 + $0x478] sm:$0xff]
    %v213 = vld [vmem:[#allocation2 + $0x480] sm:$0xff]
    %v214 = vld [vmem:[#allocation2 + $0x488] sm:$0xff]
    %v215 = vld [vmem:[#allocation2 + $0x490] sm:$0xff]
    %v216 = vld [vmem:[#allocation2 + $0x498] sm:$0xff]
    %v217 = vld [vmem:[#allocation2 + $0x4a0] sm:$0xff]
    %v218 = vld [vmem:[#allocation2 + $0x4a8] sm:$0xff]
    %v219 = vld [vmem:[#allocation2 + $0x4b0] sm:$0xff]
    %v220 = vld [vmem:[#allocation2 + $0x4b8] sm:$0xff]
    %v221 = vld [vmem:[#allocation2 + $0x4c0] sm:$0xff]
    %v222 = vld [vmem:[#allocation2 + $0x4c8] sm:$0xff]
    %v223 = vld [vmem:[#allocation2 + $0x4d0] sm:$0xff]
    %v224 = vld [vmem:[#allocation2 + $0x4d8] sm:$0xff]
    %v225 = vld [vmem:[#allocation2 + $0x4e0] sm:$0xff]
    %v226 = vld [vmem:[#allocation2 + $0x4e8] sm:$0xff]
    %v227 = vld [vmem:[#allocation2 + $0x4f0] sm:$0xff]
    %v228 = vld [vmem:[#allocation2 + $0x4f8] sm:$0xff]
    %v229 = vld [vmem:[#allocation2 + $0x500] sm:$0xff]
    %v230 = vld [vmem:[#allocation2 + $0x508] sm:$0xff]
    %v231 = vld [vmem:[#allocation2 + $0x510] sm:$0xff]
    %v232 = vld [vmem:[#allocation2 + $0x518] sm:$0xff]
    %v233 = vld [vmem:[#allocation2 + $0x520] sm:$0xff]
    %v234 = vld [vmem:[#allocation2 + $0x528] sm:$0xff]
    %v235 = vld [vmem:[#allocation2 + $0x530] sm:$0xff]
    %v236 = vld [vmem:[#allocation2 + $0x538] sm:$0xff]
    %v237 = vld [vmem:[#allocation2 + $0x540] sm:$0xff]
    %v238 = vld [vmem:[#allocation2 + $0x548] sm:$0xff]
    %v239 = vld [vmem:[#allocation2 + $0x550] sm:$0xff]
    %v240 = vld [vmem:[#allocation2 + $0x558] sm:$0xff]
    %v241 = vld [vmem:[#allocation2 + $0x560] sm:$0xff]
    %v242 = vld [vmem:[#allocation2 + $0x568] sm:$0xff]
    %v243 = vld [vmem:[#allocation2 + $0x570] sm:$0xff]
    %v244 = vld [vmem:[#allocation2 + $0x578] sm:$0xff]
    %v245 = vld [vmem:[#allocation2 + $0x580] sm:$0xff]
    %v246 = vld [vmem:[#allocation2 + $0x588] sm:$0xff]
    %v247 = vld [vmem:[#allocation2 + $0x590] sm:$0xff]
    %v248 = vld [vmem:[#allocation2 + $0x598] sm:$0xff]
    %v249 = vld [vmem:[#allocation2 + $0x5a0] sm:$0xff]
    %v250 = vld [vmem:[#allocation2 + $0x5a8] sm:$0xff]
    %v251 = vld [vmem:[#allocation2 + $0x5b0] sm:$0xff]
    %v252 = vld [vmem:[#allocation2 + $0x5b8] sm:$0xff]
    %v253 = vld [vmem:[#allocation2 + $0x5c0] sm:$0xff]
    %v254 = vld [vmem:[#allocation2 + $0x5c8] sm:$0xff]
    %v255 = vld [vmem:[#allocation2 + $0x5d0] sm:$0xff]
    %v256 = vld [vmem:[#allocation2 + $0x5d8] sm:$0xff]
    %v257 = vld [vmem:[#allocation2 + $0x5e0] sm:$0xff]
    %v258 = vld [vmem:[#allocation2 + $0x5e8] sm:$0xff]
    %v259 = vld [vmem:[#allocation2 + $0x5f0] sm:$0xff]
    %v260 = vld [vmem:[#allocation2 + $0x5f8] sm:$0xff]
    %v261 = vld [vmem:[#allocation2 + $0x600] sm:$0xff]
    %v262 = vld [vmem:[#allocation2 + $0x608] sm:$0xff]
    %v263 = vld [vmem:[#allocation2 + $0x610] sm:$0xff]
    %v264 = vld [vmem:[#allocation2 + $0x618] sm:$0xff]
    %v265 = vld [vmem:[#allocation2 + $0x620] sm:$0xff]
    %v266 = vld [vmem:[#allocation2 + $0x628] sm:$0xff]
    %v267 = vld [vmem:[#allocation2 + $0x630] sm:$0xff]
    %v268 = vld [vmem:[#allocation2 + $0x638] sm:$0xff]
    %v269 = vld [vmem:[#allocation2 + $0x640] sm:$0xff]
    %v270 = vld [vmem:[#allocation2 + $0x648] sm:$0xff]
    %v271 = vld [vmem:[#allocation2 + $0x650] sm:$0xff]
    %v272 = vld [vmem:[#allocation2 + $0x658] sm:$0xff]
    %v273 = vld [vmem:[#allocation2 + $0x660] sm:$0xff]
    %v274 = vld [vmem:[#allocation2 + $0x668] sm:$0xff]
    %v275 = vld [vmem:[#allocation2 + $0x670] sm:$0xff]
    %v276 = vld [vmem:[#allocation2 + $0x678] sm:$0xff]
    %v277 = vld [vmem:[#allocation2 + $0x680] sm:$0xff]
    %v278 = vld [vmem:[#allocation2 + $0x688] sm:$0xff]
    %v279 = vld [vmem:[#allocation2 + $0x690] sm:$0xff]
    %v280 = vld [vmem:[#allocation2 + $0x698] sm:$0xff]
    %v281 = vld [vmem:[#allocation2 + $0x6a0] sm:$0xff]
    %v282 = vld [vmem:[#allocation2 + $0x6a8] sm:$0xff]
    %v283 = vld [vmem:[#allocation2 + $0x6b0] sm:$0xff]
    %v284 = vld [vmem:[#allocation2 + $0x6b8] sm:$0xff]
    %v285 = vld [vmem:[#allocation2 + $0x6c0] sm:$0xff]
    %v286 = vld [vmem:[#allocation2 + $0x6c8] sm:$0xff]
    %v287 = vld [vmem:[#allocation2 + $0x6d0] sm:$0xff]
    %v288 = vld [vmem:[#allocation2 + $0x6d8] sm:$0xff]
    %v289 = vld [vmem:[#allocation2 + $0x6e0] sm:$0xff]
    %v290 = vld [vmem:[#allocation2 + $0x6e8] sm:$0xff]
    %v291 = vld [vmem:[#allocation2 + $0x6f0] sm:$0xff]
    %v292 = vld [vmem:[#allocation2 + $0x6f8] sm:$0xff]
    %v293 = vld [vmem:[#allocation2 + $0x700] sm:$0xff]
    %v294 = vld [vmem:[#allocation2 + $0x708] sm:$0xff]
    %v295 = vld [vmem:[#allocation2 + $0x710] sm:$0xff]
    %v296 = vld [vmem:[#allocation2 + $0x718] sm:$0xff]
    %v297 = vld [vmem:[#allocation2 + $0x720] sm:$0xff]
    %v298 = vld [vmem:[#allocation2 + $0x728] sm:$0xff]
    %v299 = vld [vmem:[#allocation2 + $0x730] sm:$0xff]
    %v300 = vld [vmem:[#allocation2 + $0x738] sm:$0xff]
    %v301 = vld [vmem:[#allocation2 + $0x740] sm:$0xff]
    %v302 = vld [vmem:[#allocation2 + $0x748] sm:$0xff]
    %v303 = vld [vmem:[#allocation2 + $0x750] sm:$0xff]
    %v304 = vld [vmem:[#allocation2 + $0x758] sm:$0xff]
    %v305 = vld [vmem:[#allocation2 + $0x760] sm:$0xff]
    %v306 = vld [vmem:[#allocation2 + $0x768] sm:$0xff]
    %v307 = vld [vmem:[#allocation2 + $0x770] sm:$0xff]
    %v308 = vld [vmem:[#allocation2 + $0x778] sm:$0xff]
    %v309 = vld [vmem:[#allocation2 + $0x780] sm:$0xff]
    %v310 = vld [vmem:[#allocation2 + $0x788] sm:$0xff]
    %v311 = vld [vmem:[#allocation2 + $0x790] sm:$0xff]
    %v312 = vld [vmem:[#allocation2 + $0x798] sm:$0xff]
    %v313 = vld [vmem:[#allocation2 + $0x7a0] sm:$0xff]
    %v314 = vld [vmem:[#allocation2 + $0x7a8] sm:$0xff]
    %v315 = vld [vmem:[#allocation2 + $0x7b0] sm:$0xff]
    %v316 = vld [vmem:[#allocation2 + $0x7b8] sm:$0xff]
    %v317 = vld [vmem:[#allocation2 + $0x7c0] sm:$0xff]
    %v318 = vld [vmem:[#allocation2 + $0x7c8] sm:$0xff]
    %v319 = vld [vmem:[#allocation2 + $0x7d0] sm:$0xff]
    %v320 = vld [vmem:[#allocation2 + $0x7d8] sm:$0xff]
    %v321 = vld [vmem:[#allocation2 + $0x7e0] sm:$0xff]
    %v322 = vld [vmem:[#allocation2 + $0x7e8] sm:$0xff]
    %v323 = vld [vmem:[#allocation2 + $0x7f0] sm:$0xff]
    %v324 = vld [vmem:[#allocation2 + $0x7f8] sm:$0xff]
    %v325 = vld [vmem:[#allocation2 + $0x800] sm:$0xff]
    %v326 = vld [vmem:[#allocation2 + $0x808] sm:$0xff]
    %v327 = vld [vmem:[#allocation2 + $0x810] sm:$0xff]
    %v328 = vld [vmem:[#allocation2 + $0x818] sm:$0xff]
    %v329 = vld [vmem:[#allocation2 + $0x820] sm:$0xff]
    %v330 = vld [vmem:[#allocation2 + $0x828] sm:$0xff]
    %v331 = vld [vmem:[#allocation2 + $0x830] sm:$0xff]
    %v332 = vld [vmem:[#allocation2 + $0x838] sm:$0xff]
    %v333 = vld [vmem:[#allocation2 + $0x840] sm:$0xff]
    %v334 = vld [vmem:[#allocation2 + $0x848] sm:$0xff]
    %v335 = vld [vmem:[#allocation2 + $0x850] sm:$0xff]
    %v336 = vld [vmem:[#allocation2 + $0x858] sm:$0xff]
    %v337 = vld [vmem:[#allocation2 + $0x860] sm:$0xff]
    %v338 = vld [vmem:[#allocation2 + $0x868] sm:$0xff]
    %v339 = vld [vmem:[#allocation2 + $0x870] sm:$0xff]
    %v340 = vld [vmem:[#allocation2 + $0x878] sm:$0xff]
    %v341 = vld [vmem:[#allocation2 + $0x880] sm:$0xff]
    %v342 = vld [vmem:[#allocation2 + $0x888] sm:$0xff]
    %v343 = vld [vmem:[#allocation2 + $0x890] sm:$0xff]
    %v344 = vld [vmem:[#allocation2 + $0x898] sm:$0xff]
    %v345 = vld [vmem:[#allocation2 + $0x8a0] sm:$0xff]
    %v346 = vld [vmem:[#allocation2 + $0x8a8] sm:$0xff]
    %v347 = vld [vmem:[#allocation2 + $0x8b0] sm:$0xff]
    %v348 = vld [vmem:[#allocation2 + $0x8b8] sm:$0xff]
    %v349 = vld [vmem:[#allocation2 + $0x8c0] sm:$0xff]
    %v350 = vld [vmem:[#allocation2 + $0x8c8] sm:$0xff]
    %v351 = vld [vmem:[#allocation2 + $0x8d0] sm:$0xff]
    %v352 = vld [vmem:[#allocation2 + $0x8d8] sm:$0xff]
    %v353 = vld [vmem:[#allocation2 + $0x8e0] sm:$0xff]
    %v354 = vld [vmem:[#allocation2 + $0x8e8] sm:$0xff]
    %v355 = vld [vmem:[#allocation2 + $0x8f0] sm:$0xff]
    %v356 = vld [vmem:[#allocation2 + $0x8f8] sm:$0xff]
    %v357 = vld [vmem:[#allocation5] sm:$0xff]
    %v358 = vld [vmem:[#allocation5 + $0x8] sm:$0xff]
    %v359 = vld [vmem:[#allocation5 + $0x10] sm:$0xff]
    %v360 = vld [vmem:[#allocation5 + $0x18] sm:$0xff]
    %v361 = vld [vmem:[#allocation5 + $0x20] sm:$0xff]
    %v362 = vld [vmem:[#allocation5 + $0x28] sm:$0xff]
    %v363 = vld [vmem:[#allocation5 + $0x30] sm:$0xff]
    %v364 = vld [vmem:[#allocation5 + $0x38] sm:$0xff]
    %v365 = vld [vmem:[#allocation5 + $0x40] sm:$0xff]
    %v366 = vld [vmem:[#allocation5 + $0x48] sm:$0xff]
    %v367 = vld [vmem:[#allocation5 + $0x50] sm:$0xff]
    %v368 = vld [vmem:[#allocation5 + $0x58] sm:$0xff]
    %v369 = vld [vmem:[#allocation5 + $0x60] sm:$0xff]
    %v370 = vld [vmem:[#allocation5 + $0x68] sm:$0xff]
    %v371 = vld [vmem:[#allocation5 + $0x70] sm:$0xff]
    %v372 = vld [vmem:[#allocation5 + $0x78] sm:$0xff]
    %v373 = vld [vmem:[#allocation5 + $0x80] sm:$0xff]
    %v374 = vld [vmem:[#allocation5 + $0x88] sm:$0xff]
    %v375 = vld [vmem:[#allocation5 + $0x90] sm:$0xff]
    %v376 = vld [vmem:[#allocation5 + $0x98] sm:$0xff]
    %v377 = vld [vmem:[#allocation5 + $0xa0] sm:$0xff]
    %v378 = vld [vmem:[#allocation5 + $0xa8] sm:$0xff]
    %v379 = vld [vmem:[#allocation5 + $0xb0] sm:$0xff]
    %v380 = vld [vmem:[#allocation5 + $0xb8] sm:$0xff]
    %v381 = vld [vmem:[#allocation5 + $0xc0] sm:$0xff]
    %v382 = vld [vmem:[#allocation5 + $0xc8] sm:$0xff]
    %v383 = vld [vmem:[#allocation5 + $0xd0] sm:$0xff]
    %v384 = vld [vmem:[#allocation5 + $0xd8] sm:$0xff]
    %v385 = vld [vmem:[#allocation5 + $0xe0] sm:$0xff]
    %v386 = vld [vmem:[#allocation5 + $0xe8] sm:$0xff]
    %v387 = vld [vmem:[#allocation5 + $0xf0] sm:$0xff]
    %v388 = vld [vmem:[#allocation5 + $0xf8] sm:$0xff]
    %v389 = vld [vmem:[#allocation5 + $0x100] sm:$0xff]
    %v390 = vld [vmem:[#allocation5 + $0x108] sm:$0xff]
    %v391 = vld [vmem:[#allocation5 + $0x110] sm:$0xff]
    %v392 = vld [vmem:[#allocation5 + $0x118] sm:$0xff]
    %v393 = vld [vmem:[#allocation5 + $0x120] sm:$0xff]
    %v394 = vld [vmem:[#allocation5 + $0x128] sm:$0xff]
    %v395 = vld [vmem:[#allocation5 + $0x130] sm:$0xff]
    %v396 = vld [vmem:[#allocation5 + $0x138] sm:$0xff]
    %v397 = vld [vmem:[#allocation5 + $0x140] sm:$0xff]
    %v398 = vld [vmem:[#allocation5 + $0x148] sm:$0xff]
    %v399 = vld [vmem:[#allocation5 + $0x150] sm:$0xff]
    %v400 = vld [vmem:[#allocation5 + $0x158] sm:$0xff]
    %v401 = vld [vmem:[#allocation5 + $0x160] sm:$0xff]
    %v402 = vld [vmem:[#allocation5 + $0x168] sm:$0xff]
    %v403 = vld [vmem:[#allocation5 + $0x170] sm:$0xff]
    %v404 = vld [vmem:[#allocation5 + $0x178] sm:$0xff]
    %v405 = vld [vmem:[#allocation5 + $0x180] sm:$0xff]
    %v406 = vld [vmem:[#allocation5 + $0x188] sm:$0xff]
    %v407 = vld [vmem:[#allocation5 + $0x190] sm:$0xff]
    %v408 = vld [vmem:[#allocation5 + $0x198] sm:$0xff]
    %v409 = vld [vmem:[#allocation5 + $0x1a0] sm:$0xff]
    %v410 = vld [vmem:[#allocation5 + $0x1a8] sm:$0xff]
    %v411 = vld [vmem:[#allocation5 + $0x1b0] sm:$0xff]
    %v412 = vld [vmem:[#allocation5 + $0x1b8] sm:$0xff]
    %v413 = vld [vmem:[#allocation5 + $0x1c0] sm:$0xff]
    %v414 = vld [vmem:[#allocation5 + $0x1c8] sm:$0xff]
    %v415 = vld [vmem:[#allocation5 + $0x1d0] sm:$0xff]
    %v416 = vld [vmem:[#allocation5 + $0x1d8] sm:$0xff]
    %v417 = vld [vmem:[#allocation5 + $0x1e0] sm:$0xff]
    %v418 = vld [vmem:[#allocation5 + $0x1e8] sm:$0xff]
    %v419 = vld [vmem:[#allocation5 + $0x1f0] sm:$0xff]
    %v420 = vld [vmem:[#allocation5 + $0x1f8] sm:$0xff]
    %v421 = vld [vmem:[#allocation5 + $0x200] sm:$0xff]
    %v422 = vld [vmem:[#allocation5 + $0x208] sm:$0xff]
    %v423 = vld [vmem:[#allocation5 + $0x210] sm:$0xff]
    %v424 = vld [vmem:[#allocation5 + $0x218] sm:$0xff]
    %v425 = vld [vmem:[#allocation5 + $0x220] sm:$0xff]
    %v426 = vld [vmem:[#allocation5 + $0x228] sm:$0xff]
    %v427 = vld [vmem:[#allocation5 + $0x230] sm:$0xff]
    %v428 = vld [vmem:[#allocation5 + $0x238] sm:$0xff]
    %v429 = vld [vmem:[#allocation5 + $0x240] sm:$0xff]
    %v430 = vld [vmem:[#allocation5 + $0x248] sm:$0xff]
    %v431 = vld [vmem:[#allocation5 + $0x250] sm:$0xff]
    %v432 = vld [vmem:[#allocation5 + $0x258] sm:$0xff]
    %v433 = vld [vmem:[#allocation5 + $0x260] sm:$0xff]
    %v434 = vld [vmem:[#allocation5 + $0x268] sm:$0xff]
    %v435 = vld [vmem:[#allocation5 + $0x270] sm:$0xff]
    %v436 = vld [vmem:[#allocation5 + $0x278] sm:$0xff]
    %v437 = vld [vmem:[#allocation5 + $0x280] sm:$0xff]
    %v438 = vld [vmem:[#allocation5 + $0x288] sm:$0xff]
    %v439 = vld [vmem:[#allocation5 + $0x290] sm:$0xff]
    %v440 = vld [vmem:[#allocation5 + $0x298] sm:$0xff]
    %v441 = vld [vmem:[#allocation5 + $0x2a0] sm:$0xff]
    %v442 = vld [vmem:[#allocation5 + $0x2a8] sm:$0xff]
    %v443 = vld [vmem:[#allocation5 + $0x2b0] sm:$0xff]
    %v444 = vld [vmem:[#allocation5 + $0x2b8] sm:$0xff]
    %v445 = vld [vmem:[#allocation5 + $0x2c0] sm:$0xff]
    %v446 = vld [vmem:[#allocation5 + $0x2c8] sm:$0xff]
    %v447 = vld [vmem:[#allocation5 + $0x2d0] sm:$0xff]
    %v448 = vld [vmem:[#allocation5 + $0x2d8] sm:$0xff]
    %v449 = vld [vmem:[#allocation5 + $0x2e0] sm:$0xff]
    %v450 = vld [vmem:[#allocation5 + $0x2e8] sm:$0xff]
    %v451 = vld [vmem:[#allocation5 + $0x2f0] sm:$0xff]
    %v452 = vld [vmem:[#allocation5 + $0x2f8] sm:$0xff]
    %v453 = vld [vmem:[#allocation5 + $0x300] sm:$0xff]
    %v454 = vld [vmem:[#allocation5 + $0x308] sm:$0xff]
    %v455 = vld [vmem:[#allocation5 + $0x310] sm:$0xff]
    %v456 = vld [vmem:[#allocation5 + $0x318] sm:$0xff]
    %v457 = vld [vmem:[#allocation5 + $0x320] sm:$0xff]
    %v458 = vld [vmem:[#allocation5 + $0x328] sm:$0xff]
    %v459 = vld [vmem:[#allocation5 + $0x330] sm:$0xff]
    %v460 = vld [vmem:[#allocation5 + $0x338] sm:$0xff]
    %v461 = vld [vmem:[#allocation5 + $0x340] sm:$0xff]
    %v462 = vld [vmem:[#allocation5 + $0x348] sm:$0xff]
    %v463 = vld [vmem:[#allocation5 + $0x350] sm:$0xff]
    %v464 = vld [vmem:[#allocation5 + $0x358] sm:$0xff]
    %v465 = vld [vmem:[#allocation5 + $0x360] sm:$0xff]
    %v466 = vld [vmem:[#allocation5 + $0x368] sm:$0xff]
    %v467 = vld [vmem:[#allocation5 + $0x370] sm:$0xff]
    %v468 = vld [vmem:[#allocation5 + $0x378] sm:$0xff]
    %v469 = vld [vmem:[#allocation5 + $0x380] sm:$0xff]
    %v470 = vld [vmem:[#allocation5 + $0x388] sm:$0xff]
    %v471 = vld [vmem:[#allocation5 + $0x390] sm:$0xff]
    %v472 = vld [vmem:[#allocation5 + $0x398] sm:$0xff]
    %v473 = vld [vmem:[#allocation5 + $0x3a0] sm:$0xff]
    %v474 = vld [vmem:[#allocation5 + $0x3a8] sm:$0xff]
    %v475 = vld [vmem:[#allocation5 + $0x3b0] sm:$0xff]
    %v476 = vld [vmem:[#allocation5 + $0x3b8] sm:$0xff]
    %v477 = vld [vmem:[#allocation5 + $0x3c0] sm:$0xff]
    %v478 = vld [vmem:[#allocation5 + $0x3c8] sm:$0xff]
    %v479 = vld [vmem:[#allocation5 + $0x3d0] sm:$0xff]
    %v480 = vld [vmem:[#allocation5 + $0x3d8] sm:$0xff]
    %v481 = vld [vmem:[#allocation5 + $0x3e0] sm:$0xff]
    %v482 = vld [vmem:[#allocation5 + $0x3e8] sm:$0xff]
    %v483 = vld [vmem:[#allocation5 + $0x3f0] sm:$0xff]
    %v484 = vld [vmem:[#allocation5 + $0x3f8] sm:$0xff]
    %v485 = vld [vmem:[#allocation5 + $0x400] sm:$0xff]
    %v486 = vld [vmem:[#allocation5 + $0x408] sm:$0xff]
    %v487 = vld [vmem:[#allocation5 + $0x410] sm:$0xff]
    %v488 = vld [vmem:[#allocation5 + $0x418] sm:$0xff]
    %v489 = vld [vmem:[#allocation5 + $0x420] sm:$0xff]
    %v490 = vld [vmem:[#allocation5 + $0x428] sm:$0xff]
    %v491 = vld [vmem:[#allocation5 + $0x430] sm:$0xff]
    %v492 = vld [vmem:[#allocation5 + $0x438] sm:$0xff]
    %v493 = vld [vmem:[#allocation5 + $0x440] sm:$0xff]
    %v494 = vld [vmem:[#allocation5 + $0x448] sm:$0xff]
    %v495 = vld [vmem:[#allocation5 + $0x450] sm:$0xff]
    %v496 = vld [vmem:[#allocation5 + $0x458] sm:$0xff]
    %v497 = vld [vmem:[#allocation5 + $0x460] sm:$0xff]
    %v498 = vld [vmem:[#allocation5 + $0x468] sm:$0xff]
    %v499 = vld [vmem:[#allocation5 + $0x470] sm:$0xff]
    %v500 = vld [vmem:[#allocation5 + $0x478] sm:$0xff]
    %v501 = vld [vmem:[#allocation5 + $0x480] sm:$0xff]
    %v502 = vld [vmem:[#allocation5 + $0x488] sm:$0xff]
    %v503 = vld [vmem:[#allocation5 + $0x490] sm:$0xff]
    %v504 = vld [vmem:[#allocation5 + $0x498] sm:$0xff]
    %v505 = vld [vmem:[#allocation5 + $0x4a0] sm:$0xff]
    %v506 = vld [vmem:[#allocation5 + $0x4a8] sm:$0xff]
    %v507 = vld [vmem:[#allocation5 + $0x4b0] sm:$0xff]
    %v508 = vld [vmem:[#allocation5 + $0x4b8] sm:$0xff]
    %v509 = vld [vmem:[#allocation5 + $0x4c0] sm:$0xff]
    %v510 = vld [vmem:[#allocation5 + $0x4c8] sm:$0xff]
    %v511 = vld [vmem:[#allocation5 + $0x4d0] sm:$0xff]
    %v512 = vld [vmem:[#allocation5 + $0x4d8] sm:$0xff]
    %v513 = vld [vmem:[#allocation5 + $0x4e0] sm:$0xff]
    %v514 = vld [vmem:[#allocation5 + $0x4e8] sm:$0xff]
    %v515 = vld [vmem:[#allocation5 + $0x4f0] sm:$0xff]
    %v516 = vld [vmem:[#allocation5 + $0x4f8] sm:$0xff]
    %v517 = vld [vmem:[#allocation5 + $0x500] sm:$0xff]
    %v518 = vld [vmem:[#allocation5 + $0x508] sm:$0xff]
    %v519 = vld [vmem:[#allocation5 + $0x510] sm:$0xff]
    %v520 = vld [vmem:[#allocation5 + $0x518] sm:$0xff]
    %v521 = vld [vmem:[#allocation5 + $0x520] sm:$0xff]
    %v522 = vld [vmem:[#allocation5 + $0x528] sm:$0xff]
    %v523 = vld [vmem:[#allocation5 + $0x530] sm:$0xff]
    %v524 = vld [vmem:[#allocation5 + $0x538] sm:$0xff]
    %v525 = vld [vmem:[#allocation5 + $0x540] sm:$0xff]
    %v526 = vld [vmem:[#allocation5 + $0x548] sm:$0xff]
    %v527 = vld [vmem:[#allocation5 + $0x550] sm:$0xff]
    %v528 = vld [vmem:[#allocation5 + $0x558] sm:$0xff]
    %v529 = vld [vmem:[#allocation5 + $0x560] sm:$0xff]
    %v530 = vld [vmem:[#allocation5 + $0x568] sm:$0xff]
    %v531 = vld [vmem:[#allocation5 + $0x570] sm:$0xff]
    %v532 = vld [vmem:[#allocation5 + $0x578] sm:$0xff]
    %v533 = vld [vmem:[#allocation5 + $0x580] sm:$0xff]
    %v534 = vld [vmem:[#allocation5 + $0x588] sm:$0xff]
    %v535 = vld [vmem:[#allocation5 + $0x590] sm:$0xff]
    %v536 = vld [vmem:[#allocation5 + $0x598] sm:$0xff]
    %v537 = vld [vmem:[#allocation5 + $0x5a0] sm:$0xff]
    %v538 = vld [vmem:[#allocation5 + $0x5a8] sm:$0xff]
    %v539 = vld [vmem:[#allocation5 + $0x5b0] sm:$0xff]
    %v540 = vld [vmem:[#allocation5 + $0x5b8] sm:$0xff]
    %v541 = vld [vmem:[#allocation5 + $0x5c0] sm:$0xff]
    %v542 = vld [vmem:[#allocation5 + $0x5c8] sm:$0xff]
    %v543 = vld [vmem:[#allocation5 + $0x5d0] sm:$0xff]
    %v544 = vld [vmem:[#allocation5 + $0x5d8] sm:$0xff]
    %v545 = vld [vmem:[#allocation5 + $0x5e0] sm:$0xff]
    %v546 = vld [vmem:[#allocation5 + $0x5e8] sm:$0xff]
    %v547 = vld [vmem:[#allocation5 + $0x5f0] sm:$0xff]
    %v548 = vld [vmem:[#allocation5 + $0x5f8] sm:$0xff]
    %v549 = vld [vmem:[#allocation5 + $0x600] sm:$0xff]
    %v550 = vld [vmem:[#allocation5 + $0x608] sm:$0xff]
    %v551 = vld [vmem:[#allocation5 + $0x610] sm:$0xff]
    %v552 = vld [vmem:[#allocation5 + $0x618] sm:$0xff]
    %v553 = vld [vmem:[#allocation5 + $0x620] sm:$0xff]
    %v554 = vld [vmem:[#allocation5 + $0x628] sm:$0xff]
    %v555 = vld [vmem:[#allocation5 + $0x630] sm:$0xff]
    %v556 = vld [vmem:[#allocation5 + $0x638] sm:$0xff]
    %v557 = vld [vmem:[#allocation5 + $0x640] sm:$0xff]
    %v558 = vld [vmem:[#allocation5 + $0x648] sm:$0xff]
    %v559 = vld [vmem:[#allocation5 + $0x650] sm:$0xff]
    %v560 = vld [vmem:[#allocation5 + $0x658] sm:$0xff]
    %v561 = vld [vmem:[#allocation5 + $0x660] sm:$0xff]
    %v562 = vld [vmem:[#allocation5 + $0x668] sm:$0xff]
    %v563 = vld [vmem:[#allocation5 + $0x670] sm:$0xff]
    %v564 = vld [vmem:[#allocation5 + $0x678] sm:$0xff]
    %v565 = vld [vmem:[#allocation5 + $0x680] sm:$0xff]
    %v566 = vld [vmem:[#allocation5 + $0x688] sm:$0xff]
    %v567 = vld [vmem:[#allocation5 + $0x690] sm:$0xff]
    %v568 = vld [vmem:[#allocation5 + $0x698] sm:$0xff]
    %v569 = vld [vmem:[#allocation5 + $0x6a0] sm:$0xff]
    %v570 = vld [vmem:[#allocation5 + $0x6a8] sm:$0xff]
    %v571 = vld [vmem:[#allocation5 + $0x6b0] sm:$0xff]
    %v572 = vld [vmem:[#allocation5 + $0x6b8] sm:$0xff]
    %v573 = vld [vmem:[#allocation5 + $0x6c0] sm:$0xff]
    %v574 = vld [vmem:[#allocation5 + $0x6c8] sm:$0xff]
    %v575 = vld [vmem:[#allocation5 + $0x6d0] sm:$0xff]
    %v576 = vld [vmem:[#allocation5 + $0x6d8] sm:$0xff]
    %v577 = vld [vmem:[#allocation5 + $0x6e0] sm:$0xff]
    %v578 = vld [vmem:[#allocation5 + $0x6e8] sm:$0xff]
    %v579 = vld [vmem:[#allocation5 + $0x6f0] sm:$0xff]
    %v580 = vld [vmem:[#allocation5 + $0x6f8] sm:$0xff]
    %v581 = vld [vmem:[#allocation5 + $0x700] sm:$0xff]
    %v582 = vld [vmem:[#allocation5 + $0x708] sm:$0xff]
    %v583 = vld [vmem:[#allocation5 + $0x710] sm:$0xff]
    %v584 = vld [vmem:[#allocation5 + $0x718] sm:$0xff]
    %v585 = vld [vmem:[#allocation5 + $0x720] sm:$0xff]
    %v586 = vld [vmem:[#allocation5 + $0x728] sm:$0xff]
    %v587 = vld [vmem:[#allocation5 + $0x730] sm:$0xff]
    %v588 = vld [vmem:[#allocation5 + $0x738] sm:$0xff]
    %v589 = vld [vmem:[#allocation5 + $0x740] sm:$0xff]
    %v590 = vld [vmem:[#allocation5 + $0x748] sm:$0xff]
    %v591 = vld [vmem:[#allocation5 + $0x750] sm:$0xff]
    %v592 = vld [vmem:[#allocation5 + $0x758] sm:$0xff]
    %v593 = vld [vmem:[#allocation5 + $0x760] sm:$0xff]
    %v594 = vld [vmem:[#allocation5 + $0x768] sm:$0xff]
    %v595 = vld [vmem:[#allocation5 + $0x770] sm:$0xff]
    %v596 = vld [vmem:[#allocation5 + $0x778] sm:$0xff]
    %v597 = vld [vmem:[#allocation5 + $0x780] sm:$0xff]
    %v598 = vld [vmem:[#allocation5 + $0x788] sm:$0xff]
    %v599 = vld [vmem:[#allocation5 + $0x790] sm:$0xff]
    %v600 = vld [vmem:[#allocation5 + $0x798] sm:$0xff]
    %v601 = vld [vmem:[#allocation5 + $0x7a0] sm:$0xff]
    %v602 = vld [vmem:[#allocation5 + $0x7a8] sm:$0xff]
    %v603 = vld [vmem:[#allocation5 + $0x7b0] sm:$0xff]
    %v604 = vld [vmem:[#allocation5 + $0x7b8] sm:$0xff]
    %v605 = vld [vmem:[#allocation5 + $0x7c0] sm:$0xff]
    %v606 = vld [vmem:[#allocation5 + $0x7c8] sm:$0xff]
    %v607 = vld [vmem:[#allocation5 + $0x7d0] sm:$0xff]
    %v608 = vld [vmem:[#allocation5 + $0x7d8] sm:$0xff]
    %v609 = vld [vmem:[#allocation5 + $0x7e0] sm:$0xff]
    %v610 = vld [vmem:[#allocation5 + $0x7e8] sm:$0xff]
    %v611 = vld [vmem:[#allocation5 + $0x7f0] sm:$0xff]
    %v612 = vld [vmem:[#allocation5 + $0x7f8] sm:$0xff]
    %v613 = vld [vmem:[#allocation5 + $0x800] sm:$0xff]
    %v614 = vld [vmem:[#allocation5 + $0x808] sm:$0xff]
    %v615 = vld [vmem:[#allocation5 + $0x810] sm:$0xff]
    %v616 = vld [vmem:[#allocation5 + $0x818] sm:$0xff]
    %v617 = vld [vmem:[#allocation5 + $0x820] sm:$0xff]
    %v618 = vld [vmem:[#allocation5 + $0x828] sm:$0xff]
    %v619 = vld [vmem:[#allocation5 + $0x830] sm:$0xff]
    %v620 = vld [vmem:[#allocation5 + $0x838] sm:$0xff]
    %v621 = vld [vmem:[#allocation5 + $0x840] sm:$0xff]
    %v622 = vld [vmem:[#allocation5 + $0x848] sm:$0xff]
    %v623 = vld [vmem:[#allocation5 + $0x850] sm:$0xff]
    %v624 = vld [vmem:[#allocation5 + $0x858] sm:$0xff]
    %v625 = vld [vmem:[#allocation5 + $0x860] sm:$0xff]
    %v626 = vld [vmem:[#allocation5 + $0x868] sm:$0xff]
    %v627 = vld [vmem:[#allocation5 + $0x870] sm:$0xff]
    %v628 = vld [vmem:[#allocation5 + $0x878] sm:$0xff]
    %v629 = vld [vmem:[#allocation5 + $0x880] sm:$0xff]
    %v630 = vld [vmem:[#allocation5 + $0x888] sm:$0xff]
    %v631 = vld [vmem:[#allocation5 + $0x890] sm:$0xff]
    %v632 = vld [vmem:[#allocation5 + $0x898] sm:$0xff]
    %v633 = vld [vmem:[#allocation5 + $0x8a0] sm:$0xff]
    %v634 = vld [vmem:[#allocation5 + $0x8a8] sm:$0xff]
    %v635 = vld [vmem:[#allocation5 + $0x8b0] sm:$0xff]
    %v636 = vld [vmem:[#allocation5 + $0x8b8] sm:$0xff]
    %v637 = vld [vmem:[#allocation5 + $0x8c0] sm:$0xff]
    %v638 = vld [vmem:[#allocation5 + $0x8c8] sm:$0xff]
    %v639 = vld [vmem:[#allocation5 + $0x8d0] sm:$0xff]
    %v640 = vld [vmem:[#allocation5 + $0x8d8] sm:$0xff]
    %v641 = vld [vmem:[#allocation5 + $0x8e0] sm:$0xff]
    %v642 = vld [vmem:[#allocation5 + $0x8e8] sm:$0xff]
    %v643 = vld [vmem:[#allocation5 + $0x8f0] sm:$0xff]
    %v644 = vld [vmem:[#allocation5 + $0x8f8] sm:$0xff]
    %v645 = vadd.f32 %v69, %v357
    %v646 = vadd.f32 %v70, %v358
    %v647 = vadd.f32 %v71, %v359
    %v648 = vadd.f32 %v72, %v360
    %v649 = vadd.f32 %v73, %v361
    %v650 = vadd.f32 %v74, %v362
    %v651 = vadd.f32 %v75, %v363
    %v652 = vadd.f32 %v76, %v364
    %v653 = vadd.f32 %v77, %v365
    %v654 = vadd.f32 %v78, %v366
    %v655 = vadd.f32 %v79, %v367
    %v656 = vadd.f32 %v80, %v368
    %v657 = vadd.f32 %v81, %v369
    %v658 = vadd.f32 %v82, %v370
    %v659 = vadd.f32 %v83, %v371
    %v660 = vadd.f32 %v84, %v372
    %v661 = vadd.f32 %v85, %v373
    %v662 = vadd.f32 %v86, %v374
    %v663 = vadd.f32 %v87, %v375
    %v664 = vadd.f32 %v88, %v376
    %v665 = vadd.f32 %v89, %v377
    %v666 = vadd.f32 %v90, %v378
    %v667 = vadd.f32 %v91, %v379
    %v668 = vadd.f32 %v92, %v380
    %v669 = vadd.f32 %v93, %v381
    %v670 = vadd.f32 %v94, %v382
    %v671 = vadd.f32 %v95, %v383
    %v672 = vadd.f32 %v96, %v384
    %v673 = vadd.f32 %v97, %v385
    %v674 = vadd.f32 %v98, %v386
    %v675 = vadd.f32 %v99, %v387
    %v676 = vadd.f32 %v100, %v388
    %v677 = vadd.f32 %v101, %v389
    %v678 = vadd.f32 %v102, %v390
    %v679 = vadd.f32 %v103, %v391
    %v680 = vadd.f32 %v104, %v392
    %v681 = vadd.f32 %v105, %v393
    %v682 = vadd.f32 %v106, %v394
    %v683 = vadd.f32 %v107, %v395
    %v684 = vadd.f32 %v108, %v396
    %v685 = vadd.f32 %v109, %v397
    %v686 = vadd.f32 %v110, %v398
    %v687 = vadd.f32 %v111, %v399
    %v688 = vadd.f32 %v112, %v400
    %v689 = vadd.f32 %v113, %v401
    %v690 = vadd.f32 %v114, %v402
    %v691 = vadd.f32 %v115, %v403
    %v692 = vadd.f32 %v116, %v404
    %v693 = vadd.f32 %v117, %v405
    %v694 = vadd.f32 %v118, %v406
    %v695 = vadd.f32 %v119, %v407
    %v696 = vadd.f32 %v120, %v408
    %v697 = vadd.f32 %v121, %v409
    %v698 = vadd.f32 %v122, %v410
    %v699 = vadd.f32 %v123, %v411
    %v700 = vadd.f32 %v124, %v412
    %v701 = vadd.f32 %v125, %v413
    %v702 = vadd.f32 %v126, %v414
    %v703 = vadd.f32 %v127, %v415
    %v704 = vadd.f32 %v128, %v416
    %v705 = vadd.f32 %v129, %v417
    %v706 = vadd.f32 %v130, %v418
    %v707 = vadd.f32 %v131, %v419
    %v708 = vadd.f32 %v132, %v420
    %v709 = vadd.f32 %v133, %v421
    %v710 = vadd.f32 %v134, %v422
    %v711 = vadd.f32 %v135, %v423
    %v712 = vadd.f32 %v136, %v424
    %v713 = vadd.f32 %v137, %v425
    %v714 = vadd.f32 %v138, %v426
    %v715 = vadd.f32 %v139, %v427
    %v716 = vadd.f32 %v140, %v428
    %v717 = vadd.f32 %v141, %v429
    %v718 = vadd.f32 %v142, %v430
    %v719 = vadd.f32 %v143, %v431
    %v720 = vadd.f32 %v144, %v432
    %v721 = vadd.f32 %v145, %v433
    %v722 = vadd.f32 %v146, %v434
    %v723 = vadd.f32 %v147, %v435
    %v724 = vadd.f32 %v148, %v436
    %v725 = vadd.f32 %v149, %v437
    %v726 = vadd.f32 %v150, %v438
    %v727 = vadd.f32 %v151, %v439
    %v728 = vadd.f32 %v152, %v440
    %v729 = vadd.f32 %v153, %v441
    %v730 = vadd.f32 %v154, %v442
    %v731 = vadd.f32 %v155, %v443
    %v732 = vadd.f32 %v156, %v444
    %v733 = vadd.f32 %v157, %v445
    %v734 = vadd.f32 %v158, %v446
    %v735 = vadd.f32 %v159, %v447
    %v736 = vadd.f32 %v160, %v448
    %v737 = vadd.f32 %v161, %v449
    %v738 = vadd.f32 %v162, %v450
    %v739 = vadd.f32 %v163, %v451
    %v740 = vadd.f32 %v164, %v452
    %v741 = vadd.f32 %v165, %v453
    %v742 = vadd.f32 %v166, %v454
    %v743 = vadd.f32 %v167, %v455
    %v744 = vadd.f32 %v168, %v456
    %v745 = vadd.f32 %v169, %v457
    %v746 = vadd.f32 %v170, %v458
    %v747 = vadd.f32 %v171, %v459
    %v748 = vadd.f32 %v172, %v460
    %v749 = vadd.f32 %v173, %v461
    %v750 = vadd.f32 %v174, %v462
    %v751 = vadd.f32 %v175, %v463
    %v752 = vadd.f32 %v176, %v464
    %v753 = vadd.f32 %v177, %v465
    %v754 = vadd.f32 %v178, %v466
    %v755 = vadd.f32 %v179, %v467
    %v756 = vadd.f32 %v180, %v468
    %v757 = vadd.f32 %v181, %v469
    %v758 = vadd.f32 %v182, %v470
    %v759 = vadd.f32 %v183, %v471
    %v760 = vadd.f32 %v184, %v472
    %v761 = vadd.f32 %v185, %v473
    %v762 = vadd.f32 %v186, %v474
    %v763 = vadd.f32 %v187, %v475
    %v764 = vadd.f32 %v188, %v476
    %v765 = vadd.f32 %v189, %v477
    %v766 = vadd.f32 %v190, %v478
    %v767 = vadd.f32 %v191, %v479
    %v768 = vadd.f32 %v192, %v480
    %v769 = vadd.f32 %v193, %v481
    %v770 = vadd.f32 %v194, %v482
    %v771 = vadd.f32 %v195, %v483
    %v772 = vadd.f32 %v196, %v484
    %v773 = vadd.f32 %v197, %v485
    %v774 = vadd.f32 %v198, %v486
    %v775 = vadd.f32 %v199, %v487
    %v776 = vadd.f32 %v200, %v488
    %v777 = vadd.f32 %v201, %v489
    %v778 = vadd.f32 %v202, %v490
    %v779 = vadd.f32 %v203, %v491
    %v780 = vadd.f32 %v204, %v492
    %v781 = vadd.f32 %v205, %v493
    %v782 = vadd.f32 %v206, %v494
    %v783 = vadd.f32 %v207, %v495
    %v784 = vadd.f32 %v208, %v496
    %v785 = vadd.f32 %v209, %v497
    %v786 = vadd.f32 %v210, %v498
    %v787 = vadd.f32 %v211, %v499
    %v788 = vadd.f32 %v212, %v500
    %v789 = vadd.f32 %v213, %v501
    %v790 = vadd.f32 %v214, %v502
    %v791 = vadd.f32 %v215, %v503
    %v792 = vadd.f32 %v216, %v504
    %v793 = vadd.f32 %v217, %v505
    %v794 = vadd.f32 %v218, %v506
    %v795 = vadd.f32 %v219, %v507
    %v796 = vadd.f32 %v220, %v508
    %v797 = vadd.f32 %v221, %v509
    %v798 = vadd.f32 %v222, %v510
    %v799 = vadd.f32 %v223, %v511
    %v800 = vadd.f32 %v224, %v512
    %v801 = vadd.f32 %v225, %v513
    %v802 = vadd.f32 %v226, %v514
    %v803 = vadd.f32 %v227, %v515
    %v804 = vadd.f32 %v228, %v516
    %v805 = vadd.f32 %v229, %v517
    %v806 = vadd.f32 %v230, %v518
    %v807 = vadd.f32 %v231, %v519
    %v808 = vadd.f32 %v232, %v520
    %v809 = vadd.f32 %v233, %v521
    %v810 = vadd.f32 %v234, %v522
    %v811 = vadd.f32 %v235, %v523
    %v812 = vadd.f32 %v236, %v524
    %v813 = vadd.f32 %v237, %v525
    %v814 = vadd.f32 %v238, %v526
    %v815 = vadd.f32 %v239, %v527
    %v816 = vadd.f32 %v240, %v528
    %v817 = vadd.f32 %v241, %v529
    %v818 = vadd.f32 %v242, %v530
    %v819 = vadd.f32 %v243, %v531
    %v820 = vadd.f32 %v244, %v532
    %v821 = vadd.f32 %v245, %v533
    %v822 = vadd.f32 %v246, %v534
    %v823 = vadd.f32 %v247, %v535
    %v824 = vadd.f32 %v248, %v536
    %v825 = vadd.f32 %v249, %v537
    %v826 = vadd.f32 %v250, %v538
    %v827 = vadd.f32 %v251, %v539
    %v828 = vadd.f32 %v252, %v540
    %v829 = vadd.f32 %v253, %v541
    %v830 = vadd.f32 %v254, %v542
    %v831 = vadd.f32 %v255, %v543
    %v832 = vadd.f32 %v256, %v544
    %v833 = vadd.f32 %v257, %v545
    %v834 = vadd.f32 %v258, %v546
    %v835 = vadd.f32 %v259, %v547
    %v836 = vadd.f32 %v260, %v548
    %v837 = vadd.f32 %v261, %v549
    %v838 = vadd.f32 %v262, %v550
    %v839 = vadd.f32 %v263, %v551
    %v840 = vadd.f32 %v264, %v552
    %v841 = vadd.f32 %v265, %v553
    %v842 = vadd.f32 %v266, %v554
    %v843 = vadd.f32 %v267, %v555
    %v844 = vadd.f32 %v268, %v556
    %v845 = vadd.f32 %v269, %v557
    %v846 = vadd.f32 %v270, %v558
    %v847 = vadd.f32 %v271, %v559
    %v848 = vadd.f32 %v272, %v560
    %v849 = vadd.f32 %v273, %v561
    %v850 = vadd.f32 %v274, %v562
    %v851 = vadd.f32 %v275, %v563
    %v852 = vadd.f32 %v276, %v564
    %v853 = vadd.f32 %v277, %v565
    %v854 = vadd.f32 %v278, %v566
    %v855 = vadd.f32 %v279, %v567
    %v856 = vadd.f32 %v280, %v568
    %v857 = vadd.f32 %v281, %v569
    %v858 = vadd.f32 %v282, %v570
    %v859 = vadd.f32 %v283, %v571
    %v860 = vadd.f32 %v284, %v572
    %v861 = vadd.f32 %v285, %v573
    %v862 = vadd.f32 %v286, %v574
    %v863 = vadd.f32 %v287, %v575
    %v864 = vadd.f32 %v288, %v576
    %v865 = vadd.f32 %v289, %v577
    %v866 = vadd.f32 %v290, %v578
    %v867 = vadd.f32 %v291, %v579
    %v868 = vadd.f32 %v292, %v580
    %v869 = vadd.f32 %v293, %v581
    %v870 = vadd.f32 %v294, %v582
    %v871 = vadd.f32 %v295, %v583
    %v872 = vadd.f32 %v296, %v584
    %v873 = vadd.f32 %v297, %v585
    %v874 = vadd.f32 %v298, %v586
    %v875 = vadd.f32 %v299, %v587
    %v876 = vadd.f32 %v300, %v588
    %v877 = vadd.f32 %v301, %v589
    %v878 = vadd.f32 %v302, %v590
    %v879 = vadd.f32 %v303, %v591
    %v880 = vadd.f32 %v304, %v592
    %v881 = vadd.f32 %v305, %v593
    %v882 = vadd.f32 %v306, %v594
    %v883 = vadd.f32 %v307, %v595
    %v884 = vadd.f32 %v308, %v596
    %v885 = vadd.f32 %v309, %v597
    %v886 = vadd.f32 %v310, %v598
    %v887 = vadd.f32 %v311, %v599
    %v888 = vadd.f32 %v312, %v600
    %v889 = vadd.f32 %v313, %v601
    %v890 = vadd.f32 %v314, %v602
    %v891 = vadd.f32 %v315, %v603
    %v892 = vadd.f32 %v316, %v604
    %v893 = vadd.f32 %v317, %v605
    %v894 = vadd.f32 %v318, %v606
    %v895 = vadd.f32 %v319, %v607
    %v896 = vadd.f32 %v320, %v608
    %v897 = vadd.f32 %v321, %v609
    %v898 = vadd.f32 %v322, %v610
    %v899 = vadd.f32 %v323, %v611
    %v900 = vadd.f32 %v324, %v612
    %v901 = vadd.f32 %v325, %v613
    %v902 = vadd.f32 %v326, %v614
    %v903 = vadd.f32 %v327, %v615
    %v904 = vadd.f32 %v328, %v616
    %v905 = vadd.f32 %v329, %v617
    %v906 = vadd.f32 %v330, %v618
    %v907 = vadd.f32 %v331, %v619
    %v908 = vadd.f32 %v332, %v620
    %v909 = vadd.f32 %v333, %v621
    %v910 = vadd.f32 %v334, %v622
    %v911 = vadd.f32 %v335, %v623
    %v912 = vadd.f32 %v336, %v624
    %v913 = vadd.f32 %v337, %v625
    %v914 = vadd.f32 %v338, %v626
    %v915 = vadd.f32 %v339, %v627
    %v916 = vadd.f32 %v340, %v628
    %v917 = vadd.f32 %v341, %v629
    %v918 = vadd.f32 %v342, %v630
    %v919 = vadd.f32 %v343, %v631
    %v920 = vadd.f32 %v344, %v632
    %v921 = vadd.f32 %v345, %v633
    %v922 = vadd.f32 %v346, %v634
    %v923 = vadd.f32 %v347, %v635
    %v924 = vadd.f32 %v348, %v636
    %v925 = vadd.f32 %v349, %v637
    %v926 = vadd.f32 %v350, %v638
    %v927 = vadd.f32 %v351, %v639
    %v928 = vadd.f32 %v352, %v640
    %v929 = vadd.f32 %v353, %v641
    %v930 = vadd.f32 %v354, %v642
    %v931 = vadd.f32 %v355, %v643
    %v932 = vadd.f32 %v356, %v644
    %v933 = vadd.f32 %v645, %v646
    %v934 = vadd.f32 %v933, %v647
    %v935 = vadd.f32 %v934, %v648
    %v936 = vadd.f32 %v935, %v649
    %v937 = vadd.f32 %v936, %v650
    %938 = vadd.xlane.f32.xlu0 %v937
    %v939 = vpop.xlane.xlu0 %938
    %v940 = vadd.f32 %v651, %v652
    %v941 = vadd.f32 %v940, %v653
    %v942 = vadd.f32 %v941, %v654
    %v943 = vadd.f32 %v942, %v655
    %v944 = vadd.f32 %v943, %v656
    %945 = vadd.xlane.f32.xlu0 %v944
    %v946 = vpop.xlane.xlu0 %945
    %v947 = vadd.f32 %v657, %v658
    %v948 = vadd.f32 %v947, %v659
    %v949 = vadd.f32 %v948, %v660
    %v950 = vadd.f32 %v949, %v661
    %v951 = vadd.f32 %v950, %v662
    %952 = vadd.xlane.f32.xlu0 %v951
    %v953 = vpop.xlane.xlu0 %952
    %v954 = vadd.f32 %v663, %v664
    %v955 = vadd.f32 %v954, %v665
    %v956 = vadd.f32 %v955, %v666
    %v957 = vadd.f32 %v956, %v667
    %v958 = vadd.f32 %v957, %v668
    %959 = vadd.xlane.f32.xlu0 %v958
    %v960 = vpop.xlane.xlu0 %959
    %v961 = vadd.f32 %v669, %v670
    %v962 = vadd.f32 %v961, %v671
    %v963 = vadd.f32 %v962, %v672
    %v964 = vadd.f32 %v963, %v673
    %v965 = vadd.f32 %v964, %v674
    %966 = vadd.xlane.f32.xlu0 %v965
    %v967 = vpop.xlane.xlu0 %966
    %v968 = vadd.f32 %v675, %v676
    %v969 = vadd.f32 %v968, %v677
    %v970 = vadd.f32 %v969, %v678
    %v971 = vadd.f32 %v970, %v679
    %v972 = vadd.f32 %v971, %v680
    %973 = vadd.xlane.f32.xlu0 %v972
    %v974 = vpop.xlane.xlu0 %973
    %v975 = vadd.f32 %v681, %v682
    %v976 = vadd.f32 %v975, %v683
    %v977 = vadd.f32 %v976, %v684
    %v978 = vadd.f32 %v977, %v685
    %v979 = vadd.f32 %v978, %v686
    %980 = vadd.xlane.f32.xlu0 %v979
    %v981 = vpop.xlane.xlu0 %980
    %v982 = vadd.f32 %v687, %v688
    %v983 = vadd.f32 %v982, %v689
    %v984 = vadd.f32 %v983, %v690
    %v985 = vadd.f32 %v984, %v691
    %v986 = vadd.f32 %v985, %v692
    %987 = vadd.xlane.f32.xlu0 %v986
    %v988 = vpop.xlane.xlu0 %987
    %v989 = vadd.f32 %v693, %v694
    %v990 = vadd.f32 %v989, %v695
    %v991 = vadd.f32 %v990, %v696
    %v992 = vadd.f32 %v991, %v697
    %v993 = vadd.f32 %v992, %v698
    %994 = vadd.xlane.f32.xlu0 %v993
    %v995 = vpop.xlane.xlu0 %994
    %v996 = vadd.f32 %v699, %v700
    %v997 = vadd.f32 %v996, %v701
    %v998 = vadd.f32 %v997, %v702
    %v999 = vadd.f32 %v998, %v703
    %v1000 = vadd.f32 %v999, %v704
    %1001 = vadd.xlane.f32.xlu0 %v1000
    %v1002 = vpop.xlane.xlu0 %1001
    %v1003 = vadd.f32 %v705, %v706
    %v1004 = vadd.f32 %v1003, %v707
    %v1005 = vadd.f32 %v1004, %v708
    %v1006 = vadd.f32 %v1005, %v709
    %v1007 = vadd.f32 %v1006, %v710
    %1008 = vadd.xlane.f32.xlu0 %v1007
    %v1009 = vpop.xlane.xlu0 %1008
    %v1010 = vadd.f32 %v711, %v712
    %v1011 = vadd.f32 %v1010, %v713
    %v1012 = vadd.f32 %v1011, %v714
    %v1013 = vadd.f32 %v1012, %v715
    %v1014 = vadd.f32 %v1013, %v716
    %1015 = vadd.xlane.f32.xlu0 %v1014
    %v1016 = vpop.xlane.xlu0 %1015
    %v1017 = vadd.f32 %v717, %v718
    %v1018 = vadd.f32 %v1017, %v719
    %v1019 = vadd.f32 %v1018, %v720
    %v1020 = vadd.f32 %v1019, %v721
    %v1021 = vadd.f32 %v1020, %v722
    %1022 = vadd.xlane.f32.xlu0 %v1021
    %v1023 = vpop.xlane.xlu0 %1022
    %v1024 = vadd.f32 %v723, %v724
    %v1025 = vadd.f32 %v1024, %v725
    %v1026 = vadd.f32 %v1025, %v726
    %v1027 = vadd.f32 %v1026, %v727
    %v1028 = vadd.f32 %v1027, %v728
    %1029 = vadd.xlane.f32.xlu0 %v1028
    %v1030 = vpop.xlane.xlu0 %1029
    %v1031 = vadd.f32 %v729, %v730
    %v1032 = vadd.f32 %v1031, %v731
    %v1033 = vadd.f32 %v1032, %v732
    %v1034 = vadd.f32 %v1033, %v733
    %v1035 = vadd.f32 %v1034, %v734
    %1036 = vadd.xlane.f32.xlu0 %v1035
    %v1037 = vpop.xlane.xlu0 %1036
    %v1038 = vadd.f32 %v735, %v736
    %v1039 = vadd.f32 %v1038, %v737
    %v1040 = vadd.f32 %v1039, %v738
    %v1041 = vadd.f32 %v1040, %v739
    %v1042 = vadd.f32 %v1041, %v740
    %1043 = vadd.xlane.f32.xlu0 %v1042
    %v1044 = vpop.xlane.xlu0 %1043
    %v1045 = vadd.f32 %v741, %v742
    %v1046 = vadd.f32 %v1045, %v743
    %v1047 = vadd.f32 %v1046, %v744
    %v1048 = vadd.f32 %v1047, %v745
    %v1049 = vadd.f32 %v1048, %v746
    %1050 = vadd.xlane.f32.xlu0 %v1049
    %v1051 = vpop.xlane.xlu0 %1050
    %v1052 = vadd.f32 %v747, %v748
    %v1053 = vadd.f32 %v1052, %v749
    %v1054 = vadd.f32 %v1053, %v750
    %v1055 = vadd.f32 %v1054, %v751
    %v1056 = vadd.f32 %v1055, %v752
    %1057 = vadd.xlane.f32.xlu0 %v1056
    %v1058 = vpop.xlane.xlu0 %1057
    %v1059 = vadd.f32 %v753, %v754
    %v1060 = vadd.f32 %v1059, %v755
    %v1061 = vadd.f32 %v1060, %v756
    %v1062 = vadd.f32 %v1061, %v757
    %v1063 = vadd.f32 %v1062, %v758
    %1064 = vadd.xlane.f32.xlu0 %v1063
    %v1065 = vpop.xlane.xlu0 %1064
    %v1066 = vadd.f32 %v759, %v760
    %v1067 = vadd.f32 %v1066, %v761
    %v1068 = vadd.f32 %v1067, %v762
    %v1069 = vadd.f32 %v1068, %v763
    %v1070 = vadd.f32 %v1069, %v764
    %1071 = vadd.xlane.f32.xlu0 %v1070
    %v1072 = vpop.xlane.xlu0 %1071
    %v1073 = vadd.f32 %v765, %v766
    %v1074 = vadd.f32 %v1073, %v767
    %v1075 = vadd.f32 %v1074, %v768
    %v1076 = vadd.f32 %v1075, %v769
    %v1077 = vadd.f32 %v1076, %v770
    %1078 = vadd.xlane.f32.xlu0 %v1077
    %v1079 = vpop.xlane.xlu0 %1078
    %v1080 = vadd.f32 %v771, %v772
    %v1081 = vadd.f32 %v1080, %v773
    %v1082 = vadd.f32 %v1081, %v774
    %v1083 = vadd.f32 %v1082, %v775
    %v1084 = vadd.f32 %v1083, %v776
    %1085 = vadd.xlane.f32.xlu0 %v1084
    %v1086 = vpop.xlane.xlu0 %1085
    %v1087 = vadd.f32 %v777, %v778
    %v1088 = vadd.f32 %v1087, %v779
    %v1089 = vadd.f32 %v1088, %v780
    %v1090 = vadd.f32 %v1089, %v781
    %v1091 = vadd.f32 %v1090, %v782
    %1092 = vadd.xlane.f32.xlu0 %v1091
    %v1093 = vpop.xlane.xlu0 %1092
    %v1094 = vadd.f32 %v783, %v784
    %v1095 = vadd.f32 %v1094, %v785
    %v1096 = vadd.f32 %v1095, %v786
    %v1097 = vadd.f32 %v1096, %v787
    %v1098 = vadd.f32 %v1097, %v788
    %1099 = vadd.xlane.f32.xlu0 %v1098
    %v1100 = vpop.xlane.xlu0 %1099
    %v1101 = vadd.f32 %v789, %v790
    %v1102 = vadd.f32 %v1101, %v791
    %v1103 = vadd.f32 %v1102, %v792
    %v1104 = vadd.f32 %v1103, %v793
    %v1105 = vadd.f32 %v1104, %v794
    %1106 = vadd.xlane.f32.xlu0 %v1105
    %v1107 = vpop.xlane.xlu0 %1106
    %v1108 = vadd.f32 %v795, %v796
    %v1109 = vadd.f32 %v1108, %v797
    %v1110 = vadd.f32 %v1109, %v798
    %v1111 = vadd.f32 %v1110, %v799
    %v1112 = vadd.f32 %v1111, %v800
    %1113 = vadd.xlane.f32.xlu0 %v1112
    %v1114 = vpop.xlane.xlu0 %1113
    %v1115 = vadd.f32 %v801, %v802
    %v1116 = vadd.f32 %v1115, %v803
    %v1117 = vadd.f32 %v1116, %v804
    %v1118 = vadd.f32 %v1117, %v805
    %v1119 = vadd.f32 %v1118, %v806
    %1120 = vadd.xlane.f32.xlu0 %v1119
    %v1121 = vpop.xlane.xlu0 %1120
    %v1122 = vadd.f32 %v807, %v808
    %v1123 = vadd.f32 %v1122, %v809
    %v1124 = vadd.f32 %v1123, %v810
    %v1125 = vadd.f32 %v1124, %v811
    %v1126 = vadd.f32 %v1125, %v812
    %1127 = vadd.xlane.f32.xlu0 %v1126
    %v1128 = vpop.xlane.xlu0 %1127
    %v1129 = vadd.f32 %v813, %v814
    %v1130 = vadd.f32 %v1129, %v815
    %v1131 = vadd.f32 %v1130, %v816
    %v1132 = vadd.f32 %v1131, %v817
    %v1133 = vadd.f32 %v1132, %v818
    %1134 = vadd.xlane.f32.xlu0 %v1133
    %v1135 = vpop.xlane.xlu0 %1134
    %v1136 = vadd.f32 %v819, %v820
    %v1137 = vadd.f32 %v1136, %v821
    %v1138 = vadd.f32 %v1137, %v822
    %v1139 = vadd.f32 %v1138, %v823
    %v1140 = vadd.f32 %v1139, %v824
    %1141 = vadd.xlane.f32.xlu0 %v1140
    %v1142 = vpop.xlane.xlu0 %1141
    %v1143 = vadd.f32 %v825, %v826
    %v1144 = vadd.f32 %v1143, %v827
    %v1145 = vadd.f32 %v1144, %v828
    %v1146 = vadd.f32 %v1145, %v829
    %v1147 = vadd.f32 %v1146, %v830
    %1148 = vadd.xlane.f32.xlu0 %v1147
    %v1149 = vpop.xlane.xlu0 %1148
    %v1150 = vadd.f32 %v831, %v832
    %v1151 = vadd.f32 %v1150, %v833
    %v1152 = vadd.f32 %v1151, %v834
    %v1153 = vadd.f32 %v1152, %v835
    %v1154 = vadd.f32 %v1153, %v836
    %1155 = vadd.xlane.f32.xlu0 %v1154
    %v1156 = vpop.xlane.xlu0 %1155
    %v1157 = vadd.f32 %v837, %v838
    %v1158 = vadd.f32 %v1157, %v839
    %v1159 = vadd.f32 %v1158, %v840
    %v1160 = vadd.f32 %v1159, %v841
    %v1161 = vadd.f32 %v1160, %v842
    %1162 = vadd.xlane.f32.xlu0 %v1161
    %v1163 = vpop.xlane.xlu0 %1162
    %v1164 = vadd.f32 %v843, %v844
    %v1165 = vadd.f32 %v1164, %v845
    %v1166 = vadd.f32 %v1165, %v846
    %v1167 = vadd.f32 %v1166, %v847
    %v1168 = vadd.f32 %v1167, %v848
    %1169 = vadd.xlane.f32.xlu0 %v1168
    %v1170 = vpop.xlane.xlu0 %1169
    %v1171 = vadd.f32 %v849, %v850
    %v1172 = vadd.f32 %v1171, %v851
    %v1173 = vadd.f32 %v1172, %v852
    %v1174 = vadd.f32 %v1173, %v853
    %v1175 = vadd.f32 %v1174, %v854
    %1176 = vadd.xlane.f32.xlu0 %v1175
    %v1177 = vpop.xlane.xlu0 %1176
    %v1178 = vadd.f32 %v855, %v856
    %v1179 = vadd.f32 %v1178, %v857
    %v1180 = vadd.f32 %v1179, %v858
    %v1181 = vadd.f32 %v1180, %v859
    %v1182 = vadd.f32 %v1181, %v860
    %1183 = vadd.xlane.f32.xlu0 %v1182
    %v1184 = vpop.xlane.xlu0 %1183
    %v1185 = vadd.f32 %v861, %v862
    %v1186 = vadd.f32 %v1185, %v863
    %v1187 = vadd.f32 %v1186, %v864
    %v1188 = vadd.f32 %v1187, %v865
    %v1189 = vadd.f32 %v1188, %v866
    %1190 = vadd.xlane.f32.xlu0 %v1189
    %v1191 = vpop.xlane.xlu0 %1190
    %v1192 = vadd.f32 %v867, %v868
    %v1193 = vadd.f32 %v1192, %v869
    %v1194 = vadd.f32 %v1193, %v870
    %v1195 = vadd.f32 %v1194, %v871
    %v1196 = vadd.f32 %v1195, %v872
    %1197 = vadd.xlane.f32.xlu0 %v1196
    %v1198 = vpop.xlane.xlu0 %1197
    %v1199 = vadd.f32 %v873, %v874
    %v1200 = vadd.f32 %v1199, %v875
    %v1201 = vadd.f32 %v1200, %v876
    %v1202 = vadd.f32 %v1201, %v877
    %v1203 = vadd.f32 %v1202, %v878
    %1204 = vadd.xlane.f32.xlu0 %v1203
    %v1205 = vpop.xlane.xlu0 %1204
    %v1206 = vadd.f32 %v879, %v880
    %v1207 = vadd.f32 %v1206, %v881
    %v1208 = vadd.f32 %v1207, %v882
    %v1209 = vadd.f32 %v1208, %v883
    %v1210 = vadd.f32 %v1209, %v884
    %1211 = vadd.xlane.f32.xlu0 %v1210
    %v1212 = vpop.xlane.xlu0 %1211
    %v1213 = vadd.f32 %v885, %v886
    %v1214 = vadd.f32 %v1213, %v887
    %v1215 = vadd.f32 %v1214, %v888
    %v1216 = vadd.f32 %v1215, %v889
    %v1217 = vadd.f32 %v1216, %v890
    %1218 = vadd.xlane.f32.xlu0 %v1217
    %v1219 = vpop.xlane.xlu0 %1218
    %v1220 = vadd.f32 %v891, %v892
    %v1221 = vadd.f32 %v1220, %v893
    %v1222 = vadd.f32 %v1221, %v894
    %v1223 = vadd.f32 %v1222, %v895
    %v1224 = vadd.f32 %v1223, %v896
    %1225 = vadd.xlane.f32.xlu0 %v1224
    %v1226 = vpop.xlane.xlu0 %1225
    %v1227 = vadd.f32 %v897, %v898
    %v1228 = vadd.f32 %v1227, %v899
    %v1229 = vadd.f32 %v1228, %v900
    %v1230 = vadd.f32 %v1229, %v901
    %v1231 = vadd.f32 %v1230, %v902
    %1232 = vadd.xlane.f32.xlu0 %v1231
    %v1233 = vpop.xlane.xlu0 %1232
    %v1234 = vadd.f32 %v903, %v904
    %v1235 = vadd.f32 %v1234, %v905
    %v1236 = vadd.f32 %v1235, %v906
    %v1237 = vadd.f32 %v1236, %v907
    %v1238 = vadd.f32 %v1237, %v908
    %1239 = vadd.xlane.f32.xlu0 %v1238
    %v1240 = vpop.xlane.xlu0 %1239
    %v1241 = vadd.f32 %v909, %v910
    %v1242 = vadd.f32 %v1241, %v911
    %v1243 = vadd.f32 %v1242, %v912
    %v1244 = vadd.f32 %v1243, %v913
    %v1245 = vadd.f32 %v1244, %v914
    %1246 = vadd.xlane.f32.xlu0 %v1245
    %v1247 = vpop.xlane.xlu0 %1246
    %v1248 = vadd.f32 %v915, %v916
    %v1249 = vadd.f32 %v1248, %v917
    %v1250 = vadd.f32 %v1249, %v918
    %v1251 = vadd.f32 %v1250, %v919
    %v1252 = vadd.f32 %v1251, %v920
    %1253 = vadd.xlane.f32.xlu0 %v1252
    %v1254 = vpop.xlane.xlu0 %1253
    %v1255 = vadd.f32 %v921, %v922
    %v1256 = vadd.f32 %v1255, %v923
    %v1257 = vadd.f32 %v1256, %v924
    %v1258 = vadd.f32 %v1257, %v925
    %v1259 = vadd.f32 %v1258, %v926
    %1260 = vadd.xlane.f32.xlu0 %v1259
    %v1261 = vpop.xlane.xlu0 %1260
    %v1262 = vadd.f32 %v927, %v928
    %v1263 = vadd.f32 %v1262, %v929
    %v1264 = vadd.f32 %v1263, %v930
    %v1265 = vadd.f32 %v1264, %v931
    %v1266 = vadd.f32 %v1265, %v932
    %1267 = vadd.xlane.f32.xlu0 %v1266
    %v1268 = vpop.xlane.xlu0 %1267
    %v1269 = vmul.f32 %v939, 0.0013020834
    %v1270 = vmul.f32 %v946, 0.0013020834
    %v1271 = vmul.f32 %v953, 0.0013020834
    %v1272 = vmul.f32 %v960, 0.0013020834
    %v1273 = vmul.f32 %v967, 0.0013020834
    %v1274 = vmul.f32 %v974, 0.0013020834
    %v1275 = vmul.f32 %v981, 0.0013020834
    %v1276 = vmul.f32 %v988, 0.0013020834
    %v1277 = vmul.f32 %v995, 0.0013020834
    %v1278 = vmul.f32 %v1002, 0.0013020834
    %v1279 = vmul.f32 %v1009, 0.0013020834
    %v1280 = vmul.f32 %v1016, 0.0013020834
    %v1281 = vmul.f32 %v1023, 0.0013020834
    %v1282 = vmul.f32 %v1030, 0.0013020834
    %v1283 = vmul.f32 %v1037, 0.0013020834
    %v1284 = vmul.f32 %v1044, 0.0013020834
    %v1285 = vmul.f32 %v1051, 0.0013020834
    %v1286 = vmul.f32 %v1058, 0.0013020834
    %v1287 = vmul.f32 %v1065, 0.0013020834
    %v1288 = vmul.f32 %v1072, 0.0013020834
    %v1289 = vmul.f32 %v1079, 0.0013020834
    %v1290 = vmul.f32 %v1086, 0.0013020834
    %v1291 = vmul.f32 %v1093, 0.0013020834
    %v1292 = vmul.f32 %v1100, 0.0013020834
    %v1293 = vmul.f32 %v1107, 0.0013020834
    %v1294 = vmul.f32 %v1114, 0.0013020834
    %v1295 = vmul.f32 %v1121, 0.0013020834
    %v1296 = vmul.f32 %v1128, 0.0013020834
    %v1297 = vmul.f32 %v1135, 0.0013020834
    %v1298 = vmul.f32 %v1142, 0.0013020834
    %v1299 = vmul.f32 %v1149, 0.0013020834
    %v1300 = vmul.f32 %v1156, 0.0013020834
    %v1301 = vmul.f32 %v1163, 0.0013020834
    %v1302 = vmul.f32 %v1170, 0.0013020834
    %v1303 = vmul.f32 %v1177, 0.0013020834
    %v1304 = vmul.f32 %v1184, 0.0013020834
    %v1305 = vmul.f32 %v1191, 0.0013020834
    %v1306 = vmul.f32 %v1198, 0.0013020834
    %v1307 = vmul.f32 %v1205, 0.0013020834
    %v1308 = vmul.f32 %v1212, 0.0013020834
    %v1309 = vmul.f32 %v1219, 0.0013020834
    %v1310 = vmul.f32 %v1226, 0.0013020834
    %v1311 = vmul.f32 %v1233, 0.0013020834
    %v1312 = vmul.f32 %v1240, 0.0013020834
    %v1313 = vmul.f32 %v1247, 0.0013020834
    %v1314 = vmul.f32 %v1254, 0.0013020834
    %v1315 = vmul.f32 %v1261, 0.0013020834
    %v1316 = vmul.f32 %v1268, 0.0013020834
    %v1317 = vmul.f32 %v645, %v645
    %v1318 = vmul.f32 %v646, %v646
    %v1319 = vmul.f32 %v647, %v647
    %v1320 = vmul.f32 %v648, %v648
    %v1321 = vmul.f32 %v649, %v649
    %v1322 = vmul.f32 %v650, %v650
    %v1323 = vmul.f32 %v651, %v651
    %v1324 = vmul.f32 %v652, %v652
    %v1325 = vmul.f32 %v653, %v653
    %v1326 = vmul.f32 %v654, %v654
    %v1327 = vmul.f32 %v655, %v655
    %v1328 = vmul.f32 %v656, %v656
    %v1329 = vmul.f32 %v657, %v657
    %v1330 = vmul.f32 %v658, %v658
    %v1331 = vmul.f32 %v659, %v659
    %v1332 = vmul.f32 %v660, %v660
    %v1333 = vmul.f32 %v661, %v661
    %v1334 = vmul.f32 %v662, %v662
    %v1335 = vmul.f32 %v663, %v663
    %v1336 = vmul.f32 %v664, %v664
    %v1337 = vmul.f32 %v665, %v665
    %v1338 = vmul.f32 %v666, %v666
    %v1339 = vmul.f32 %v667, %v667
    %v1340 = vmul.f32 %v668, %v668
    %v1341 = vmul.f32 %v669, %v669
    %v1342 = vmul.f32 %v670, %v670
    %v1343 = vmul.f32 %v671, %v671
    %v1344 = vmul.f32 %v672, %v672
    %v1345 = vmul.f32 %v673, %v673
    %v1346 = vmul.f32 %v674, %v674
    %v1347 = vmul.f32 %v675, %v675
    %v1348 = vmul.f32 %v676, %v676
    %v1349 = vmul.f32 %v677, %v677
    %v1350 = vmul.f32 %v678, %v678
    %v1351 = vmul.f32 %v679, %v679
    %v1352 = vmul.f32 %v680, %v680
    %v1353 = vmul.f32 %v681, %v681
    %v1354 = vmul.f32 %v682, %v682
    %v1355 = vmul.f32 %v683, %v683
    %v1356 = vmul.f32 %v684, %v684
    %v1357 = vmul.f32 %v685, %v685
    %v1358 = vmul.f32 %v686, %v686
    %v1359 = vmul.f32 %v687, %v687
    %v1360 = vmul.f32 %v688, %v688
    %v1361 = vmul.f32 %v689, %v689
    %v1362 = vmul.f32 %v690, %v690
    %v1363 = vmul.f32 %v691, %v691
    %v1364 = vmul.f32 %v692, %v692
    %v1365 = vmul.f32 %v693, %v693
    %v1366 = vmul.f32 %v694, %v694
    %v1367 = vmul.f32 %v695, %v695
    %v1368 = vmul.f32 %v696, %v696
    %v1369 = vmul.f32 %v697, %v697
    %v1370 = vmul.f32 %v698, %v698
    %v1371 = vmul.f32 %v699, %v699
    %v1372 = vmul.f32 %v700, %v700
    %v1373 = vmul.f32 %v701, %v701
    %v1374 = vmul.f32 %v702, %v702
    %v1375 = vmul.f32 %v703, %v703
    %v1376 = vmul.f32 %v704, %v704
    %v1377 = vmul.f32 %v705, %v705
    %v1378 = vmul.f32 %v706, %v706
    %v1379 = vmul.f32 %v707, %v707
    %v1380 = vmul.f32 %v708, %v708
    %v1381 = vmul.f32 %v709, %v709
    %v1382 = vmul.f32 %v710, %v710
    %v1383 = vmul.f32 %v711, %v711
    %v1384 = vmul.f32 %v712, %v712
    %v1385 = vmul.f32 %v713, %v713
    %v1386 = vmul.f32 %v714, %v714
    %v1387 = vmul.f32 %v715, %v715
    %v1388 = vmul.f32 %v716, %v716
    %v1389 = vmul.f32 %v717, %v717
    %v1390 = vmul.f32 %v718, %v718
    %v1391 = vmul.f32 %v719, %v719
    %v1392 = vmul.f32 %v720, %v720
    %v1393 = vmul.f32 %v721, %v721
    %v1394 = vmul.f32 %v722, %v722
    %v1395 = vmul.f32 %v723, %v723
    %v1396 = vmul.f32 %v724, %v724
    %v1397 = vmul.f32 %v725, %v725
    %v1398 = vmul.f32 %v726, %v726
    %v1399 = vmul.f32 %v727, %v727
    %v1400 = vmul.f32 %v728, %v728
    %v1401 = vmul.f32 %v729, %v729
    %v1402 = vmul.f32 %v730, %v730
    %v1403 = vmul.f32 %v731, %v731
    %v1404 = vmul.f32 %v732, %v732
    %v1405 = vmul.f32 %v733, %v733
    %v1406 = vmul.f32 %v734, %v734
    %v1407 = vmul.f32 %v735, %v735
    %v1408 = vmul.f32 %v736, %v736
    %v1409 = vmul.f32 %v737, %v737
    %v1410 = vmul.f32 %v738, %v738
    %v1411 = vmul.f32 %v739, %v739
    %v1412 = vmul.f32 %v740, %v740
    %v1413 = vmul.f32 %v741, %v741
    %v1414 = vmul.f32 %v742, %v742
    %v1415 = vmul.f32 %v743, %v743
    %v1416 = vmul.f32 %v744, %v744
    %v1417 = vmul.f32 %v745, %v745
    %v1418 = vmul.f32 %v746, %v746
    %v1419 = vmul.f32 %v747, %v747
    %v1420 = vmul.f32 %v748, %v748
    %v1421 = vmul.f32 %v749, %v749
    %v1422 = vmul.f32 %v750, %v750
    %v1423 = vmul.f32 %v751, %v751
    %v1424 = vmul.f32 %v752, %v752
    %v1425 = vmul.f32 %v753, %v753
    %v1426 = vmul.f32 %v754, %v754
    %v1427 = vmul.f32 %v755, %v755
    %v1428 = vmul.f32 %v756, %v756
    %v1429 = vmul.f32 %v757, %v757
    %v1430 = vmul.f32 %v758, %v758
    %v1431 = vmul.f32 %v759, %v759
    %v1432 = vmul.f32 %v760, %v760
    %v1433 = vmul.f32 %v761, %v761
    %v1434 = vmul.f32 %v762, %v762
    %v1435 = vmul.f32 %v763, %v763
    %v1436 = vmul.f32 %v764, %v764
    %v1437 = vmul.f32 %v765, %v765
    %v1438 = vmul.f32 %v766, %v766
    %v1439 = vmul.f32 %v767, %v767
    %v1440 = vmul.f32 %v768, %v768
    %v1441 = vmul.f32 %v769, %v769
    %v1442 = vmul.f32 %v770, %v770
    %v1443 = vmul.f32 %v771, %v771
    %v1444 = vmul.f32 %v772, %v772
    %v1445 = vmul.f32 %v773, %v773
    %v1446 = vmul.f32 %v774, %v774
    %v1447 = vmul.f32 %v775, %v775
    %v1448 = vmul.f32 %v776, %v776
    %v1449 = vmul.f32 %v777, %v777
    %v1450 = vmul.f32 %v778, %v778
    %v1451 = vmul.f32 %v779, %v779
    %v1452 = vmul.f32 %v780, %v780
    %v1453 = vmul.f32 %v781, %v781
    %v1454 = vmul.f32 %v782, %v782
    %v1455 = vmul.f32 %v783, %v783
    %v1456 = vmul.f32 %v784, %v784
    %v1457 = vmul.f32 %v785, %v785
    %v1458 = vmul.f32 %v786, %v786
    %v1459 = vmul.f32 %v787, %v787
    %v1460 = vmul.f32 %v788, %v788
    %v1461 = vmul.f32 %v789, %v789
    %v1462 = vmul.f32 %v790, %v790
    %v1463 = vmul.f32 %v791, %v791
    %v1464 = vmul.f32 %v792, %v792
    %v1465 = vmul.f32 %v793, %v793
    %v1466 = vmul.f32 %v794, %v794
    %v1467 = vmul.f32 %v795, %v795
    %v1468 = vmul.f32 %v796, %v796
    %v1469 = vmul.f32 %v797, %v797
    %v1470 = vmul.f32 %v798, %v798
    %v1471 = vmul.f32 %v799, %v799
    %v1472 = vmul.f32 %v800, %v800
    %v1473 = vmul.f32 %v801, %v801
    %v1474 = vmul.f32 %v802, %v802
    %v1475 = vmul.f32 %v803, %v803
    %v1476 = vmul.f32 %v804, %v804
    %v1477 = vmul.f32 %v805, %v805
    %v1478 = vmul.f32 %v806, %v806
    %v1479 = vmul.f32 %v807, %v807
    %v1480 = vmul.f32 %v808, %v808
    %v1481 = vmul.f32 %v809, %v809
    %v1482 = vmul.f32 %v810, %v810
    %v1483 = vmul.f32 %v811, %v811
    %v1484 = vmul.f32 %v812, %v812
    %v1485 = vmul.f32 %v813, %v813
    %v1486 = vmul.f32 %v814, %v814
    %v1487 = vmul.f32 %v815, %v815
    %v1488 = vmul.f32 %v816, %v816
    %v1489 = vmul.f32 %v817, %v817
    %v1490 = vmul.f32 %v818, %v818
    %v1491 = vmul.f32 %v819, %v819
    %v1492 = vmul.f32 %v820, %v820
    %v1493 = vmul.f32 %v821, %v821
    %v1494 = vmul.f32 %v822, %v822
    %v1495 = vmul.f32 %v823, %v823
    %v1496 = vmul.f32 %v824, %v824
    %v1497 = vmul.f32 %v825, %v825
    %v1498 = vmul.f32 %v826, %v826
    %v1499 = vmul.f32 %v827, %v827
    %v1500 = vmul.f32 %v828, %v828
    %v1501 = vmul.f32 %v829, %v829
    %v1502 = vmul.f32 %v830, %v830
    %v1503 = vmul.f32 %v831, %v831
    %v1504 = vmul.f32 %v832, %v832
    %v1505 = vmul.f32 %v833, %v833
    %v1506 = vmul.f32 %v834, %v834
    %v1507 = vmul.f32 %v835, %v835
    %v1508 = vmul.f32 %v836, %v836
    %v1509 = vmul.f32 %v837, %v837
    %v1510 = vmul.f32 %v838, %v838
    %v1511 = vmul.f32 %v839, %v839
    %v1512 = vmul.f32 %v840, %v840
    %v1513 = vmul.f32 %v841, %v841
    %v1514 = vmul.f32 %v842, %v842
    %v1515 = vmul.f32 %v843, %v843
    %v1516 = vmul.f32 %v844, %v844
    %v1517 = vmul.f32 %v845, %v845
    %v1518 = vmul.f32 %v846, %v846
    %v1519 = vmul.f32 %v847, %v847
    %v1520 = vmul.f32 %v848, %v848
    %v1521 = vmul.f32 %v849, %v849
    %v1522 = vmul.f32 %v850, %v850
    %v1523 = vmul.f32 %v851, %v851
    %v1524 = vmul.f32 %v852, %v852
    %v1525 = vmul.f32 %v853, %v853
    %v1526 = vmul.f32 %v854, %v854
    %v1527 = vmul.f32 %v855, %v855
    %v1528 = vmul.f32 %v856, %v856
    %v1529 = vmul.f32 %v857, %v857
    %v1530 = vmul.f32 %v858, %v858
    %v1531 = vmul.f32 %v859, %v859
    %v1532 = vmul.f32 %v860, %v860
    %v1533 = vmul.f32 %v861, %v861
    %v1534 = vmul.f32 %v862, %v862
    %v1535 = vmul.f32 %v863, %v863
    %v1536 = vmul.f32 %v864, %v864
    %v1537 = vmul.f32 %v865, %v865
    %v1538 = vmul.f32 %v866, %v866
    %v1539 = vmul.f32 %v867, %v867
    %v1540 = vmul.f32 %v868, %v868
    %v1541 = vmul.f32 %v869, %v869
    %v1542 = vmul.f32 %v870, %v870
    %v1543 = vmul.f32 %v871, %v871
    %v1544 = vmul.f32 %v872, %v872
    %v1545 = vmul.f32 %v873, %v873
    %v1546 = vmul.f32 %v874, %v874
    %v1547 = vmul.f32 %v875, %v875
    %v1548 = vmul.f32 %v876, %v876
    %v1549 = vmul.f32 %v877, %v877
    %v1550 = vmul.f32 %v878, %v878
    %v1551 = vmul.f32 %v879, %v879
    %v1552 = vmul.f32 %v880, %v880
    %v1553 = vmul.f32 %v881, %v881
    %v1554 = vmul.f32 %v882, %v882
    %v1555 = vmul.f32 %v883, %v883
    %v1556 = vmul.f32 %v884, %v884
    %v1557 = vmul.f32 %v885, %v885
    %v1558 = vmul.f32 %v886, %v886
    %v1559 = vmul.f32 %v887, %v887
    %v1560 = vmul.f32 %v888, %v888
    %v1561 = vmul.f32 %v889, %v889
    %v1562 = vmul.f32 %v890, %v890
    %v1563 = vmul.f32 %v891, %v891
    %v1564 = vmul.f32 %v892, %v892
    %v1565 = vmul.f32 %v893, %v893
    %v1566 = vmul.f32 %v894, %v894
    %v1567 = vmul.f32 %v895, %v895
    %v1568 = vmul.f32 %v896, %v896
    %v1569 = vmul.f32 %v897, %v897
    %v1570 = vmul.f32 %v898, %v898
    %v1571 = vmul.f32 %v899, %v899
    %v1572 = vmul.f32 %v900, %v900
    %v1573 = vmul.f32 %v901, %v901
    %v1574 = vmul.f32 %v902, %v902
    %v1575 = vmul.f32 %v903, %v903
    %v1576 = vmul.f32 %v904, %v904
    %v1577 = vmul.f32 %v905, %v905
    %v1578 = vmul.f32 %v906, %v906
    %v1579 = vmul.f32 %v907, %v907
    %v1580 = vmul.f32 %v908, %v908
    %v1581 = vmul.f32 %v909, %v909
    %v1582 = vmul.f32 %v910, %v910
    %v1583 = vmul.f32 %v911, %v911
    %v1584 = vmul.f32 %v912, %v912
    %v1585 = vmul.f32 %v913, %v913
    %v1586 = vmul.f32 %v914, %v914
    %v1587 = vmul.f32 %v915, %v915
    %v1588 = vmul.f32 %v916, %v916
    %v1589 = vmul.f32 %v917, %v917
    %v1590 = vmul.f32 %v918, %v918
    %v1591 = vmul.f32 %v919, %v919
    %v1592 = vmul.f32 %v920, %v920
    %v1593 = vmul.f32 %v921, %v921
    %v1594 = vmul.f32 %v922, %v922
    %v1595 = vmul.f32 %v923, %v923
    %v1596 = vmul.f32 %v924, %v924
    %v1597 = vmul.f32 %v925, %v925
    %v1598 = vmul.f32 %v926, %v926
    %v1599 = vmul.f32 %v927, %v927
    %v1600 = vmul.f32 %v928, %v928
    %v1601 = vmul.f32 %v929, %v929
    %v1602 = vmul.f32 %v930, %v930
    %v1603 = vmul.f32 %v931, %v931
    %v1604 = vmul.f32 %v932, %v932
    %v1605 = vadd.f32 %v1317, %v1318
    %v1606 = vadd.f32 %v1605, %v1319
    %v1607 = vadd.f32 %v1606, %v1320
    %v1608 = vadd.f32 %v1607, %v1321
    %v1609 = vadd.f32 %v1608, %v1322
    %1610 = vadd.xlane.f32.xlu0 %v1609
    %v1611 = vpop.xlane.xlu0 %1610
    %v1612 = vadd.f32 %v1323, %v1324
    %v1613 = vadd.f32 %v1612, %v1325
    %v1614 = vadd.f32 %v1613, %v1326
    %v1615 = vadd.f32 %v1614, %v1327
    %v1616 = vadd.f32 %v1615, %v1328
    %1617 = vadd.xlane.f32.xlu0 %v1616
    %v1618 = vpop.xlane.xlu0 %1617
    %v1619 = vadd.f32 %v1329, %v1330
    %v1620 = vadd.f32 %v1619, %v1331
    %v1621 = vadd.f32 %v1620, %v1332
    %v1622 = vadd.f32 %v1621, %v1333
    %v1623 = vadd.f32 %v1622, %v1334
    %1624 = vadd.xlane.f32.xlu0 %v1623
    %v1625 = vpop.xlane.xlu0 %1624
    %v1626 = vadd.f32 %v1335, %v1336
    %v1627 = vadd.f32 %v1626, %v1337
    %v1628 = vadd.f32 %v1627, %v1338
    %v1629 = vadd.f32 %v1628, %v1339
    %v1630 = vadd.f32 %v1629, %v1340
    %1631 = vadd.xlane.f32.xlu0 %v1630
    %v1632 = vpop.xlane.xlu0 %1631
    %v1633 = vadd.f32 %v1341, %v1342
    %v1634 = vadd.f32 %v1633, %v1343
    %v1635 = vadd.f32 %v1634, %v1344
    %v1636 = vadd.f32 %v1635, %v1345
    %v1637 = vadd.f32 %v1636, %v1346
    %1638 = vadd.xlane.f32.xlu0 %v1637
    %v1639 = vpop.xlane.xlu0 %1638
    %v1640 = vadd.f32 %v1347, %v1348
    %v1641 = vadd.f32 %v1640, %v1349
    %v1642 = vadd.f32 %v1641, %v1350
    %v1643 = vadd.f32 %v1642, %v1351
    %v1644 = vadd.f32 %v1643, %v1352
    %1645 = vadd.xlane.f32.xlu0 %v1644
    %v1646 = vpop.xlane.xlu0 %1645
    %v1647 = vadd.f32 %v1353, %v1354
    %v1648 = vadd.f32 %v1647, %v1355
    %v1649 = vadd.f32 %v1648, %v1356
    %v1650 = vadd.f32 %v1649, %v1357
    %v1651 = vadd.f32 %v1650, %v1358
    %1652 = vadd.xlane.f32.xlu0 %v1651
    %v1653 = vpop.xlane.xlu0 %1652
    %v1654 = vadd.f32 %v1359, %v1360
    %v1655 = vadd.f32 %v1654, %v1361
    %v1656 = vadd.f32 %v1655, %v1362
    %v1657 = vadd.f32 %v1656, %v1363
    %v1658 = vadd.f32 %v1657, %v1364
    %1659 = vadd.xlane.f32.xlu0 %v1658
    %v1660 = vpop.xlane.xlu0 %1659
    %v1661 = vadd.f32 %v1365, %v1366
    %v1662 = vadd.f32 %v1661, %v1367
    %v1663 = vadd.f32 %v1662, %v1368
    %v1664 = vadd.f32 %v1663, %v1369
    %v1665 = vadd.f32 %v1664, %v1370
    %1666 = vadd.xlane.f32.xlu0 %v1665
    %v1667 = vpop.xlane.xlu0 %1666
    %v1668 = vadd.f32 %v1371, %v1372
    %v1669 = vadd.f32 %v1668, %v1373
    %v1670 = vadd.f32 %v1669, %v1374
    %v1671 = vadd.f32 %v1670, %v1375
    %v1672 = vadd.f32 %v1671, %v1376
    %1673 = vadd.xlane.f32.xlu0 %v1672
    %v1674 = vpop.xlane.xlu0 %1673
    %v1675 = vadd.f32 %v1377, %v1378
    %v1676 = vadd.f32 %v1675, %v1379
    %v1677 = vadd.f32 %v1676, %v1380
    %v1678 = vadd.f32 %v1677, %v1381
    %v1679 = vadd.f32 %v1678, %v1382
    %1680 = vadd.xlane.f32.xlu0 %v1679
    %v1681 = vpop.xlane.xlu0 %1680
    %v1682 = vadd.f32 %v1383, %v1384
    %v1683 = vadd.f32 %v1682, %v1385
    %v1684 = vadd.f32 %v1683, %v1386
    %v1685 = vadd.f32 %v1684, %v1387
    %v1686 = vadd.f32 %v1685, %v1388
    %1687 = vadd.xlane.f32.xlu0 %v1686
    %v1688 = vpop.xlane.xlu0 %1687
    %v1689 = vadd.f32 %v1389, %v1390
    %v1690 = vadd.f32 %v1689, %v1391
    %v1691 = vadd.f32 %v1690, %v1392
    %v1692 = vadd.f32 %v1691, %v1393
    %v1693 = vadd.f32 %v1692, %v1394
    %1694 = vadd.xlane.f32.xlu0 %v1693
    %v1695 = vpop.xlane.xlu0 %1694
    %v1696 = vadd.f32 %v1395, %v1396
    %v1697 = vadd.f32 %v1696, %v1397
    %v1698 = vadd.f32 %v1697, %v1398
    %v1699 = vadd.f32 %v1698, %v1399
    %v1700 = vadd.f32 %v1699, %v1400
    %1701 = vadd.xlane.f32.xlu0 %v1700
    %v1702 = vpop.xlane.xlu0 %1701
    %v1703 = vadd.f32 %v1401, %v1402
    %v1704 = vadd.f32 %v1703, %v1403
    %v1705 = vadd.f32 %v1704, %v1404
    %v1706 = vadd.f32 %v1705, %v1405
    %v1707 = vadd.f32 %v1706, %v1406
    %1708 = vadd.xlane.f32.xlu0 %v1707
    %v1709 = vpop.xlane.xlu0 %1708
    %v1710 = vadd.f32 %v1407, %v1408
    %v1711 = vadd.f32 %v1710, %v1409
    %v1712 = vadd.f32 %v1711, %v1410
    %v1713 = vadd.f32 %v1712, %v1411
    %v1714 = vadd.f32 %v1713, %v1412
    %1715 = vadd.xlane.f32.xlu0 %v1714
    %v1716 = vpop.xlane.xlu0 %1715
    %v1717 = vadd.f32 %v1413, %v1414
    %v1718 = vadd.f32 %v1717, %v1415
    %v1719 = vadd.f32 %v1718, %v1416
    %v1720 = vadd.f32 %v1719, %v1417
    %v1721 = vadd.f32 %v1720, %v1418
    %1722 = vadd.xlane.f32.xlu0 %v1721
    %v1723 = vpop.xlane.xlu0 %1722
    %v1724 = vadd.f32 %v1419, %v1420
    %v1725 = vadd.f32 %v1724, %v1421
    %v1726 = vadd.f32 %v1725, %v1422
    %v1727 = vadd.f32 %v1726, %v1423
    %v1728 = vadd.f32 %v1727, %v1424
    %1729 = vadd.xlane.f32.xlu0 %v1728
    %v1730 = vpop.xlane.xlu0 %1729
    %v1731 = vadd.f32 %v1425, %v1426
    %v1732 = vadd.f32 %v1731, %v1427
    %v1733 = vadd.f32 %v1732, %v1428
    %v1734 = vadd.f32 %v1733, %v1429
    %v1735 = vadd.f32 %v1734, %v1430
    %1736 = vadd.xlane.f32.xlu0 %v1735
    %v1737 = vpop.xlane.xlu0 %1736
    %v1738 = vadd.f32 %v1431, %v1432
    %v1739 = vadd.f32 %v1738, %v1433
    %v1740 = vadd.f32 %v1739, %v1434
    %v1741 = vadd.f32 %v1740, %v1435
    %v1742 = vadd.f32 %v1741, %v1436
    %1743 = vadd.xlane.f32.xlu0 %v1742
    %v1744 = vpop.xlane.xlu0 %1743
    %v1745 = vadd.f32 %v1437, %v1438
    %v1746 = vadd.f32 %v1745, %v1439
    %v1747 = vadd.f32 %v1746, %v1440
    %v1748 = vadd.f32 %v1747, %v1441
    %v1749 = vadd.f32 %v1748, %v1442
    %1750 = vadd.xlane.f32.xlu0 %v1749
    %v1751 = vpop.xlane.xlu0 %1750
    %v1752 = vadd.f32 %v1443, %v1444
    %v1753 = vadd.f32 %v1752, %v1445
    %v1754 = vadd.f32 %v1753, %v1446
    %v1755 = vadd.f32 %v1754, %v1447
    %v1756 = vadd.f32 %v1755, %v1448
    %1757 = vadd.xlane.f32.xlu0 %v1756
    %v1758 = vpop.xlane.xlu0 %1757
    %v1759 = vadd.f32 %v1449, %v1450
    %v1760 = vadd.f32 %v1759, %v1451
    %v1761 = vadd.f32 %v1760, %v1452
    %v1762 = vadd.f32 %v1761, %v1453
    %v1763 = vadd.f32 %v1762, %v1454
    %1764 = vadd.xlane.f32.xlu0 %v1763
    %v1765 = vpop.xlane.xlu0 %1764
    %v1766 = vadd.f32 %v1455, %v1456
    %v1767 = vadd.f32 %v1766, %v1457
    %v1768 = vadd.f32 %v1767, %v1458
    %v1769 = vadd.f32 %v1768, %v1459
    %v1770 = vadd.f32 %v1769, %v1460
    %1771 = vadd.xlane.f32.xlu0 %v1770
    %v1772 = vpop.xlane.xlu0 %1771
    %v1773 = vadd.f32 %v1461, %v1462
    %v1774 = vadd.f32 %v1773, %v1463
    %v1775 = vadd.f32 %v1774, %v1464
    %v1776 = vadd.f32 %v1775, %v1465
    %v1777 = vadd.f32 %v1776, %v1466
    %1778 = vadd.xlane.f32.xlu0 %v1777
    %v1779 = vpop.xlane.xlu0 %1778
    %v1780 = vadd.f32 %v1467, %v1468
    %v1781 = vadd.f32 %v1780, %v1469
    %v1782 = vadd.f32 %v1781, %v1470
    %v1783 = vadd.f32 %v1782, %v1471
    %v1784 = vadd.f32 %v1783, %v1472
    %1785 = vadd.xlane.f32.xlu0 %v1784
    %v1786 = vpop.xlane.xlu0 %1785
    %v1787 = vadd.f32 %v1473, %v1474
    %v1788 = vadd.f32 %v1787, %v1475
    %v1789 = vadd.f32 %v1788, %v1476
    %v1790 = vadd.f32 %v1789, %v1477
    %v1791 = vadd.f32 %v1790, %v1478
    %1792 = vadd.xlane.f32.xlu0 %v1791
    %v1793 = vpop.xlane.xlu0 %1792
    %v1794 = vadd.f32 %v1479, %v1480
    %v1795 = vadd.f32 %v1794, %v1481
    %v1796 = vadd.f32 %v1795, %v1482
    %v1797 = vadd.f32 %v1796, %v1483
    %v1798 = vadd.f32 %v1797, %v1484
    %1799 = vadd.xlane.f32.xlu0 %v1798
    %v1800 = vpop.xlane.xlu0 %1799
    %v1801 = vadd.f32 %v1485, %v1486
    %v1802 = vadd.f32 %v1801, %v1487
    %v1803 = vadd.f32 %v1802, %v1488
    %v1804 = vadd.f32 %v1803, %v1489
    %v1805 = vadd.f32 %v1804, %v1490
    %1806 = vadd.xlane.f32.xlu0 %v1805
    %v1807 = vpop.xlane.xlu0 %1806
    %v1808 = vadd.f32 %v1491, %v1492
    %v1809 = vadd.f32 %v1808, %v1493
    %v1810 = vadd.f32 %v1809, %v1494
    %v1811 = vadd.f32 %v1810, %v1495
    %v1812 = vadd.f32 %v1811, %v1496
    %1813 = vadd.xlane.f32.xlu0 %v1812
    %v1814 = vpop.xlane.xlu0 %1813
    %v1815 = vadd.f32 %v1497, %v1498
    %v1816 = vadd.f32 %v1815, %v1499
    %v1817 = vadd.f32 %v1816, %v1500
    %v1818 = vadd.f32 %v1817, %v1501
    %v1819 = vadd.f32 %v1818, %v1502
    %1820 = vadd.xlane.f32.xlu0 %v1819
    %v1821 = vpop.xlane.xlu0 %1820
    %v1822 = vadd.f32 %v1503, %v1504
    %v1823 = vadd.f32 %v1822, %v1505
    %v1824 = vadd.f32 %v1823, %v1506
    %v1825 = vadd.f32 %v1824, %v1507
    %v1826 = vadd.f32 %v1825, %v1508
    %1827 = vadd.xlane.f32.xlu0 %v1826
    %v1828 = vpop.xlane.xlu0 %1827
    %v1829 = vadd.f32 %v1509, %v1510
    %v1830 = vadd.f32 %v1829, %v1511
    %v1831 = vadd.f32 %v1830, %v1512
    %v1832 = vadd.f32 %v1831, %v1513
    %v1833 = vadd.f32 %v1832, %v1514
    %1834 = vadd.xlane.f32.xlu0 %v1833
    %v1835 = vpop.xlane.xlu0 %1834
    %v1836 = vadd.f32 %v1515, %v1516
    %v1837 = vadd.f32 %v1836, %v1517
    %v1838 = vadd.f32 %v1837, %v1518
    %v1839 = vadd.f32 %v1838, %v1519
    %v1840 = vadd.f32 %v1839, %v1520
    %1841 = vadd.xlane.f32.xlu0 %v1840
    %v1842 = vpop.xlane.xlu0 %1841
    %v1843 = vadd.f32 %v1521, %v1522
    %v1844 = vadd.f32 %v1843, %v1523
    %v1845 = vadd.f32 %v1844, %v1524
    %v1846 = vadd.f32 %v1845, %v1525
    %v1847 = vadd.f32 %v1846, %v1526
    %1848 = vadd.xlane.f32.xlu0 %v1847
    %v1849 = vpop.xlane.xlu0 %1848
    %v1850 = vadd.f32 %v1527, %v1528
    %v1851 = vadd.f32 %v1850, %v1529
    %v1852 = vadd.f32 %v1851, %v1530
    %v1853 = vadd.f32 %v1852, %v1531
    %v1854 = vadd.f32 %v1853, %v1532
    %1855 = vadd.xlane.f32.xlu0 %v1854
    %v1856 = vpop.xlane.xlu0 %1855
    %v1857 = vadd.f32 %v1533, %v1534
    %v1858 = vadd.f32 %v1857, %v1535
    %v1859 = vadd.f32 %v1858, %v1536
    %v1860 = vadd.f32 %v1859, %v1537
    %v1861 = vadd.f32 %v1860, %v1538
    %1862 = vadd.xlane.f32.xlu0 %v1861
    %v1863 = vpop.xlane.xlu0 %1862
    %v1864 = vadd.f32 %v1539, %v1540
    %v1865 = vadd.f32 %v1864, %v1541
    %v1866 = vadd.f32 %v1865, %v1542
    %v1867 = vadd.f32 %v1866, %v1543
    %v1868 = vadd.f32 %v1867, %v1544
    %1869 = vadd.xlane.f32.xlu0 %v1868
    %v1870 = vpop.xlane.xlu0 %1869
    %v1871 = vadd.f32 %v1545, %v1546
    %v1872 = vadd.f32 %v1871, %v1547
    %v1873 = vadd.f32 %v1872, %v1548
    %v1874 = vadd.f32 %v1873, %v1549
    %v1875 = vadd.f32 %v1874, %v1550
    %1876 = vadd.xlane.f32.xlu0 %v1875
    %v1877 = vpop.xlane.xlu0 %1876
    %v1878 = vadd.f32 %v1551, %v1552
    %v1879 = vadd.f32 %v1878, %v1553
    %v1880 = vadd.f32 %v1879, %v1554
    %v1881 = vadd.f32 %v1880, %v1555
    %v1882 = vadd.f32 %v1881, %v1556
    %1883 = vadd.xlane.f32.xlu0 %v1882
    %v1884 = vpop.xlane.xlu0 %1883
    %v1885 = vadd.f32 %v1557, %v1558
    %v1886 = vadd.f32 %v1885, %v1559
    %v1887 = vadd.f32 %v1886, %v1560
    %v1888 = vadd.f32 %v1887, %v1561
    %v1889 = vadd.f32 %v1888, %v1562
    %1890 = vadd.xlane.f32.xlu0 %v1889
    %v1891 = vpop.xlane.xlu0 %1890
    %v1892 = vadd.f32 %v1563, %v1564
    %v1893 = vadd.f32 %v1892, %v1565
    %v1894 = vadd.f32 %v1893, %v1566
    %v1895 = vadd.f32 %v1894, %v1567
    %v1896 = vadd.f32 %v1895, %v1568
    %1897 = vadd.xlane.f32.xlu0 %v1896
    %v1898 = vpop.xlane.xlu0 %1897
    %v1899 = vadd.f32 %v1569, %v1570
    %v1900 = vadd.f32 %v1899, %v1571
    %v1901 = vadd.f32 %v1900, %v1572
    %v1902 = vadd.f32 %v1901, %v1573
    %v1903 = vadd.f32 %v1902, %v1574
    %1904 = vadd.xlane.f32.xlu0 %v1903
    %v1905 = vpop.xlane.xlu0 %1904
    %v1906 = vadd.f32 %v1575, %v1576
    %v1907 = vadd.f32 %v1906, %v1577
    %v1908 = vadd.f32 %v1907, %v1578
    %v1909 = vadd.f32 %v1908, %v1579
    %v1910 = vadd.f32 %v1909, %v1580
    %1911 = vadd.xlane.f32.xlu0 %v1910
    %v1912 = vpop.xlane.xlu0 %1911
    %v1913 = vadd.f32 %v1581, %v1582
    %v1914 = vadd.f32 %v1913, %v1583
    %v1915 = vadd.f32 %v1914, %v1584
    %v1916 = vadd.f32 %v1915, %v1585
    %v1917 = vadd.f32 %v1916, %v1586
    %1918 = vadd.xlane.f32.xlu0 %v1917
    %v1919 = vpop.xlane.xlu0 %1918
    %v1920 = vadd.f32 %v1587, %v1588
    %v1921 = vadd.f32 %v1920, %v1589
    %v1922 = vadd.f32 %v1921, %v1590
    %v1923 = vadd.f32 %v1922, %v1591
    %v1924 = vadd.f32 %v1923, %v1592
    %1925 = vadd.xlane.f32.xlu0 %v1924
    %v1926 = vpop.xlane.xlu0 %1925
    %v1927 = vadd.f32 %v1593, %v1594
    %v1928 = vadd.f32 %v1927, %v1595
    %v1929 = vadd.f32 %v1928, %v1596
    %v1930 = vadd.f32 %v1929, %v1597
    %v1931 = vadd.f32 %v1930, %v1598
    %1932 = vadd.xlane.f32.xlu0 %v1931
    %v1933 = vpop.xlane.xlu0 %1932
    %v1934 = vadd.f32 %v1599, %v1600
    %v1935 = vadd.f32 %v1934, %v1601
    %v1936 = vadd.f32 %v1935, %v1602
    %v1937 = vadd.f32 %v1936, %v1603
    %v1938 = vadd.f32 %v1937, %v1604
    %1939 = vadd.xlane.f32.xlu0 %v1938
    %v1940 = vpop.xlane.xlu0 %1939
    %v1941 = vmul.f32 %v1611, 0.0013020834
    %v1942 = vmul.f32 %v1618, 0.0013020834
    %v1943 = vmul.f32 %v1625, 0.0013020834
    %v1944 = vmul.f32 %v1632, 0.0013020834
    %v1945 = vmul.f32 %v1639, 0.0013020834
    %v1946 = vmul.f32 %v1646, 0.0013020834
    %v1947 = vmul.f32 %v1653, 0.0013020834
    %v1948 = vmul.f32 %v1660, 0.0013020834
    %v1949 = vmul.f32 %v1667, 0.0013020834
    %v1950 = vmul.f32 %v1674, 0.0013020834
    %v1951 = vmul.f32 %v1681, 0.0013020834
    %v1952 = vmul.f32 %v1688, 0.0013020834
    %v1953 = vmul.f32 %v1695, 0.0013020834
    %v1954 = vmul.f32 %v1702, 0.0013020834
    %v1955 = vmul.f32 %v1709, 0.0013020834
    %v1956 = vmul.f32 %v1716, 0.0013020834
    %v1957 = vmul.f32 %v1723, 0.0013020834
    %v1958 = vmul.f32 %v1730, 0.0013020834
    %v1959 = vmul.f32 %v1737, 0.0013020834
    %v1960 = vmul.f32 %v1744, 0.0013020834
    %v1961 = vmul.f32 %v1751, 0.0013020834
    %v1962 = vmul.f32 %v1758, 0.0013020834
    %v1963 = vmul.f32 %v1765, 0.0013020834
    %v1964 = vmul.f32 %v1772, 0.0013020834
    %v1965 = vmul.f32 %v1779, 0.0013020834
    %v1966 = vmul.f32 %v1786, 0.0013020834
    %v1967 = vmul.f32 %v1793, 0.0013020834
    %v1968 = vmul.f32 %v1800, 0.0013020834
    %v1969 = vmul.f32 %v1807, 0.0013020834
    %v1970 = vmul.f32 %v1814, 0.0013020834
    %v1971 = vmul.f32 %v1821, 0.0013020834
    %v1972 = vmul.f32 %v1828, 0.0013020834
    %v1973 = vmul.f32 %v1835, 0.0013020834
    %v1974 = vmul.f32 %v1842, 0.0013020834
    %v1975 = vmul.f32 %v1849, 0.0013020834
    %v1976 = vmul.f32 %v1856, 0.0013020834
    %v1977 = vmul.f32 %v1863, 0.0013020834
    %v1978 = vmul.f32 %v1870, 0.0013020834
    %v1979 = vmul.f32 %v1877, 0.0013020834
    %v1980 = vmul.f32 %v1884, 0.0013020834
    %v1981 = vmul.f32 %v1891, 0.0013020834
    %v1982 = vmul.f32 %v1898, 0.0013020834
    %v1983 = vmul.f32 %v1905, 0.0013020834
    %v1984 = vmul.f32 %v1912, 0.0013020834
    %v1985 = vmul.f32 %v1919, 0.0013020834
    %v1986 = vmul.f32 %v1926, 0.0013020834
    %v1987 = vmul.f32 %v1933, 0.0013020834
    %v1988 = vmul.f32 %v1940, 0.0013020834
    %v1989 = vmul.f32 %v1269, %v1269
    %v1990 = vmul.f32 %v1270, %v1270
    %v1991 = vmul.f32 %v1271, %v1271
    %v1992 = vmul.f32 %v1272, %v1272
    %v1993 = vmul.f32 %v1273, %v1273
    %v1994 = vmul.f32 %v1274, %v1274
    %v1995 = vmul.f32 %v1275, %v1275
    %v1996 = vmul.f32 %v1276, %v1276
    %v1997 = vmul.f32 %v1277, %v1277
    %v1998 = vmul.f32 %v1278, %v1278
    %v1999 = vmul.f32 %v1279, %v1279
    %v2000 = vmul.f32 %v1280, %v1280
    %v2001 = vmul.f32 %v1281, %v1281
    %v2002 = vmul.f32 %v1282, %v1282
    %v2003 = vmul.f32 %v1283, %v1283
    %v2004 = vmul.f32 %v1284, %v1284
    %v2005 = vmul.f32 %v1285, %v1285
    %v2006 = vmul.f32 %v1286, %v1286
    %v2007 = vmul.f32 %v1287, %v1287
    %v2008 = vmul.f32 %v1288, %v1288
    %v2009 = vmul.f32 %v1289, %v1289
    %v2010 = vmul.f32 %v1290, %v1290
    %v2011 = vmul.f32 %v1291, %v1291
    %v2012 = vmul.f32 %v1292, %v1292
    %v2013 = vmul.f32 %v1293, %v1293
    %v2014 = vmul.f32 %v1294, %v1294
    %v2015 = vmul.f32 %v1295, %v1295
    %v2016 = vmul.f32 %v1296, %v1296
    %v2017 = vmul.f32 %v1297, %v1297
    %v2018 = vmul.f32 %v1298, %v1298
    %v2019 = vmul.f32 %v1299, %v1299
    %v2020 = vmul.f32 %v1300, %v1300
    %v2021 = vmul.f32 %v1301, %v1301
    %v2022 = vmul.f32 %v1302, %v1302
    %v2023 = vmul.f32 %v1303, %v1303
    %v2024 = vmul.f32 %v1304, %v1304
    %v2025 = vmul.f32 %v1305, %v1305
    %v2026 = vmul.f32 %v1306, %v1306
    %v2027 = vmul.f32 %v1307, %v1307
    %v2028 = vmul.f32 %v1308, %v1308
    %v2029 = vmul.f32 %v1309, %v1309
    %v2030 = vmul.f32 %v1310, %v1310
    %v2031 = vmul.f32 %v1311, %v1311
    %v2032 = vmul.f32 %v1312, %v1312
    %v2033 = vmul.f32 %v1313, %v1313
    %v2034 = vmul.f32 %v1314, %v1314
    %v2035 = vmul.f32 %v1315, %v1315
    %v2036 = vmul.f32 %v1316, %v1316
    %v2037 = vsub.f32 %v1941, %v1989
    %v2038 = vsub.f32 %v1942, %v1990
    %v2039 = vsub.f32 %v1943, %v1991
    %v2040 = vsub.f32 %v1944, %v1992
    %v2041 = vsub.f32 %v1945, %v1993
    %v2042 = vsub.f32 %v1946, %v1994
    %v2043 = vsub.f32 %v1947, %v1995
    %v2044 = vsub.f32 %v1948, %v1996
    %v2045 = vsub.f32 %v1949, %v1997
    %v2046 = vsub.f32 %v1950, %v1998
    %v2047 = vsub.f32 %v1951, %v1999
    %v2048 = vsub.f32 %v1952, %v2000
    %v2049 = vsub.f32 %v1953, %v2001
    %v2050 = vsub.f32 %v1954, %v2002
    %v2051 = vsub.f32 %v1955, %v2003
    %v2052 = vsub.f32 %v1956, %v2004
    %v2053 = vsub.f32 %v1957, %v2005
    %v2054 = vsub.f32 %v1958, %v2006
    %v2055 = vsub.f32 %v1959, %v2007
    %v2056 = vsub.f32 %v1960, %v2008
    %v2057 = vsub.f32 %v1961, %v2009
    %v2058 = vsub.f32 %v1962, %v2010
    %v2059 = vsub.f32 %v1963, %v2011
    %v2060 = vsub.f32 %v1964, %v2012
    %v2061 = vsub.f32 %v1965, %v2013
    %v2062 = vsub.f32 %v1966, %v2014
    %v2063 = vsub.f32 %v1967, %v2015
    %v2064 = vsub.f32 %v1968, %v2016
    %v2065 = vsub.f32 %v1969, %v2017
    %v2066 = vsub.f32 %v1970, %v2018
    %v2067 = vsub.f32 %v1971, %v2019
    %v2068 = vsub.f32 %v1972, %v2020
    %v2069 = vsub.f32 %v1973, %v2021
    %v2070 = vsub.f32 %v1974, %v2022
    %v2071 = vsub.f32 %v1975, %v2023
    %v2072 = vsub.f32 %v1976, %v2024
    %v2073 = vsub.f32 %v1977, %v2025
    %v2074 = vsub.f32 %v1978, %v2026
    %v2075 = vsub.f32 %v1979, %v2027
    %v2076 = vsub.f32 %v1980, %v2028
    %v2077 = vsub.f32 %v1981, %v2029
    %v2078 = vsub.f32 %v1982, %v2030
    %v2079 = vsub.f32 %v1983, %v2031
    %v2080 = vsub.f32 %v1984, %v2032
    %v2081 = vsub.f32 %v1985, %v2033
    %v2082 = vsub.f32 %v1986, %v2034
    %v2083 = vsub.f32 %v1987, %v2035
    %v2084 = vsub.f32 %v1988, %v2036
    %v2085 = vmax.f32 %v2037, 0.0
    %v2086 = vmax.f32 %v2038, 0.0
    %v2087 = vmax.f32 %v2039, 0.0
    %v2088 = vmax.f32 %v2040, 0.0
    %v2089 = vmax.f32 %v2041, 0.0
    %v2090 = vmax.f32 %v2042, 0.0
    %v2091 = vmax.f32 %v2043, 0.0
    %v2092 = vmax.f32 %v2044, 0.0
    %v2093 = vmax.f32 %v2045, 0.0
    %v2094 = vmax.f32 %v2046, 0.0
    %v2095 = vmax.f32 %v2047, 0.0
    %v2096 = vmax.f32 %v2048, 0.0
    %v2097 = vmax.f32 %v2049, 0.0
    %v2098 = vmax.f32 %v2050, 0.0
    %v2099 = vmax.f32 %v2051, 0.0
    %v2100 = vmax.f32 %v2052, 0.0
    %v2101 = vmax.f32 %v2053, 0.0
    %v2102 = vmax.f32 %v2054, 0.0
    %v2103 = vmax.f32 %v2055, 0.0
    %v2104 = vmax.f32 %v2056, 0.0
    %v2105 = vmax.f32 %v2057, 0.0
    %v2106 = vmax.f32 %v2058, 0.0
    %v2107 = vmax.f32 %v2059, 0.0
    %v2108 = vmax.f32 %v2060, 0.0
    %v2109 = vmax.f32 %v2061, 0.0
    %v2110 = vmax.f32 %v2062, 0.0
    %v2111 = vmax.f32 %v2063, 0.0
    %v2112 = vmax.f32 %v2064, 0.0
    %v2113 = vmax.f32 %v2065, 0.0
    %v2114 = vmax.f32 %v2066, 0.0
    %v2115 = vmax.f32 %v2067, 0.0
    %v2116 = vmax.f32 %v2068, 0.0
    %v2117 = vmax.f32 %v2069, 0.0
    %v2118 = vmax.f32 %v2070, 0.0
    %v2119 = vmax.f32 %v2071, 0.0
    %v2120 = vmax.f32 %v2072, 0.0
    %v2121 = vmax.f32 %v2073, 0.0
    %v2122 = vmax.f32 %v2074, 0.0
    %v2123 = vmax.f32 %v2075, 0.0
    %v2124 = vmax.f32 %v2076, 0.0
    %v2125 = vmax.f32 %v2077, 0.0
    %v2126 = vmax.f32 %v2078, 0.0
    %v2127 = vmax.f32 %v2079, 0.0
    %v2128 = vmax.f32 %v2080, 0.0
    %v2129 = vmax.f32 %v2081, 0.0
    %v2130 = vmax.f32 %v2082, 0.0
    %v2131 = vmax.f32 %v2083, 0.0
    %v2132 = vmax.f32 %v2084, 0.0
    %v2133 = vadd.f32 %v2085, 1e-12
    %v2134 = vadd.f32 %v2086, 1e-12
    %v2135 = vadd.f32 %v2087, 1e-12
    %v2136 = vadd.f32 %v2088, 1e-12
    %v2137 = vadd.f32 %v2089, 1e-12
    %v2138 = vadd.f32 %v2090, 1e-12
    %v2139 = vadd.f32 %v2091, 1e-12
    %v2140 = vadd.f32 %v2092, 1e-12
    %v2141 = vadd.f32 %v2093, 1e-12
    %v2142 = vadd.f32 %v2094, 1e-12
    %v2143 = vadd.f32 %v2095, 1e-12
    %v2144 = vadd.f32 %v2096, 1e-12
    %v2145 = vadd.f32 %v2097, 1e-12
    %v2146 = vadd.f32 %v2098, 1e-12
    %v2147 = vadd.f32 %v2099, 1e-12
    %v2148 = vadd.f32 %v2100, 1e-12
    %v2149 = vadd.f32 %v2101, 1e-12
    %v2150 = vadd.f32 %v2102, 1e-12
    %v2151 = vadd.f32 %v2103, 1e-12
    %v2152 = vadd.f32 %v2104, 1e-12
    %v2153 = vadd.f32 %v2105, 1e-12
    %v2154 = vadd.f32 %v2106, 1e-12
    %v2155 = vadd.f32 %v2107, 1e-12
    %v2156 = vadd.f32 %v2108, 1e-12
    %v2157 = vadd.f32 %v2109, 1e-12
    %v2158 = vadd.f32 %v2110, 1e-12
    %v2159 = vadd.f32 %v2111, 1e-12
    %v2160 = vadd.f32 %v2112, 1e-12
    %v2161 = vadd.f32 %v2113, 1e-12
    %v2162 = vadd.f32 %v2114, 1e-12
    %v2163 = vadd.f32 %v2115, 1e-12
    %v2164 = vadd.f32 %v2116, 1e-12
    %v2165 = vadd.f32 %v2117, 1e-12
    %v2166 = vadd.f32 %v2118, 1e-12
    %v2167 = vadd.f32 %v2119, 1e-12
    %v2168 = vadd.f32 %v2120, 1e-12
    %v2169 = vadd.f32 %v2121, 1e-12
    %v2170 = vadd.f32 %v2122, 1e-12
    %v2171 = vadd.f32 %v2123, 1e-12
    %v2172 = vadd.f32 %v2124, 1e-12
    %v2173 = vadd.f32 %v2125, 1e-12
    %v2174 = vadd.f32 %v2126, 1e-12
    %v2175 = vadd.f32 %v2127, 1e-12
    %v2176 = vadd.f32 %v2128, 1e-12
    %v2177 = vadd.f32 %v2129, 1e-12
    %v2178 = vadd.f32 %v2130, 1e-12
    %v2179 = vadd.f32 %v2131, 1e-12
    %v2180 = vadd.f32 %v2132, 1e-12
    %v2181 = vrsqrt.pop %v2133
    %v2182 = vrsqrt.pop %v2134
    %v2183 = vrsqrt.pop %v2135
    %v2184 = vrsqrt.pop %v2136
    %v2185 = vrsqrt.pop %v2137
    %v2186 = vrsqrt.pop %v2138
    %v2187 = vrsqrt.pop %v2139
    %v2188 = vrsqrt.pop %v2140
    %v2189 = vrsqrt.pop %v2141
    %v2190 = vrsqrt.pop %v2142
    %v2191 = vrsqrt.pop %v2143
    %v2192 = vrsqrt.pop %v2144
    %v2193 = vrsqrt.pop %v2145
    %v2194 = vrsqrt.pop %v2146
    %v2195 = vrsqrt.pop %v2147
    %v2196 = vrsqrt.pop %v2148
    %v2197 = vrsqrt.pop %v2149
    %v2198 = vrsqrt.pop %v2150
    %v2199 = vrsqrt.pop %v2151
    %v2200 = vrsqrt.pop %v2152
    %v2201 = vrsqrt.pop %v2153
    %v2202 = vrsqrt.pop %v2154
    %v2203 = vrsqrt.pop %v2155
    %v2204 = vrsqrt.pop %v2156
    %v2205 = vrsqrt.pop %v2157
    %v2206 = vrsqrt.pop %v2158
    %v2207 = vrsqrt.pop %v2159
    %v2208 = vrsqrt.pop %v2160
    %v2209 = vrsqrt.pop %v2161
    %v2210 = vrsqrt.pop %v2162
    %v2211 = vrsqrt.pop %v2163
    %v2212 = vrsqrt.pop %v2164
    %v2213 = vrsqrt.pop %v2165
    %v2214 = vrsqrt.pop %v2166
    %v2215 = vrsqrt.pop %v2167
    %v2216 = vrsqrt.pop %v2168
    %v2217 = vrsqrt.pop %v2169
    %v2218 = vrsqrt.pop %v2170
    %v2219 = vrsqrt.pop %v2171
    %v2220 = vrsqrt.pop %v2172
    %v2221 = vrsqrt.pop %v2173
    %v2222 = vrsqrt.pop %v2174
    %v2223 = vrsqrt.pop %v2175
    %v2224 = vrsqrt.pop %v2176
    %v2225 = vrsqrt.pop %v2177
    %v2226 = vrsqrt.pop %v2178
    %v2227 = vrsqrt.pop %v2179
    %v2228 = vrsqrt.pop %v2180
    %v2229 = vsub.f32 %v645, %v1269
    %v2230 = vsub.f32 %v646, %v1269
    %v2231 = vsub.f32 %v647, %v1269
    %v2232 = vsub.f32 %v648, %v1269
    %v2233 = vsub.f32 %v649, %v1269
    %v2234 = vsub.f32 %v650, %v1269
    %v2235 = vsub.f32 %v651, %v1270
    %v2236 = vsub.f32 %v652, %v1270
    %v2237 = vsub.f32 %v653, %v1270
    %v2238 = vsub.f32 %v654, %v1270
    %v2239 = vsub.f32 %v655, %v1270
    %v2240 = vsub.f32 %v656, %v1270
    %v2241 = vsub.f32 %v657, %v1271
    %v2242 = vsub.f32 %v658, %v1271
    %v2243 = vsub.f32 %v659, %v1271
    %v2244 = vsub.f32 %v660, %v1271
    %v2245 = vsub.f32 %v661, %v1271
    %v2246 = vsub.f32 %v662, %v1271
    %v2247 = vsub.f32 %v663, %v1272
    %v2248 = vsub.f32 %v664, %v1272
    %v2249 = vsub.f32 %v665, %v1272
    %v2250 = vsub.f32 %v666, %v1272
    %v2251 = vsub.f32 %v667, %v1272
    %v2252 = vsub.f32 %v668, %v1272
    %v2253 = vsub.f32 %v669, %v1273
    %v2254 = vsub.f32 %v670, %v1273
    %v2255 = vsub.f32 %v671, %v1273
    %v2256 = vsub.f32 %v672, %v1273
    %v2257 = vsub.f32 %v673, %v1273
    %v2258 = vsub.f32 %v674, %v1273
    %v2259 = vsub.f32 %v675, %v1274
    %v2260 = vsub.f32 %v676, %v1274
    %v2261 = vsub.f32 %v677, %v1274
    %v2262 = vsub.f32 %v678, %v1274
    %v2263 = vsub.f32 %v679, %v1274
    %v2264 = vsub.f32 %v680, %v1274
    %v2265 = vsub.f32 %v681, %v1275
    %v2266 = vsub.f32 %v682, %v1275
    %v2267 = vsub.f32 %v683, %v1275
    %v2268 = vsub.f32 %v684, %v1275
    %v2269 = vsub.f32 %v685, %v1275
    %v2270 = vsub.f32 %v686, %v1275
    %v2271 = vsub.f32 %v687, %v1276
    %v2272 = vsub.f32 %v688, %v1276
    %v2273 = vsub.f32 %v689, %v1276
    %v2274 = vsub.f32 %v690, %v1276
    %v2275 = vsub.f32 %v691, %v1276
    %v2276 = vsub.f32 %v692, %v1276
    %v2277 = vsub.f32 %v693, %v1277
    %v2278 = vsub.f32 %v694, %v1277
    %v2279 = vsub.f32 %v695, %v1277
    %v2280 = vsub.f32 %v696, %v1277
    %v2281 = vsub.f32 %v697, %v1277
    %v2282 = vsub.f32 %v698, %v1277
    %v2283 = vsub.f32 %v699, %v1278
    %v2284 = vsub.f32 %v700, %v1278
    %v2285 = vsub.f32 %v701, %v1278
    %v2286 = vsub.f32 %v702, %v1278
    %v2287 = vsub.f32 %v703, %v1278
    %v2288 = vsub.f32 %v704, %v1278
    %v2289 = vsub.f32 %v705, %v1279
    %v2290 = vsub.f32 %v706, %v1279
    %v2291 = vsub.f32 %v707, %v1279
    %v2292 = vsub.f32 %v708, %v1279
    %v2293 = vsub.f32 %v709, %v1279
    %v2294 = vsub.f32 %v710, %v1279
    %v2295 = vsub.f32 %v711, %v1280
    %v2296 = vsub.f32 %v712, %v1280
    %v2297 = vsub.f32 %v713, %v1280
    %v2298 = vsub.f32 %v714, %v1280
    %v2299 = vsub.f32 %v715, %v1280
    %v2300 = vsub.f32 %v716, %v1280
    %v2301 = vsub.f32 %v717, %v1281
    %v2302 = vsub.f32 %v718, %v1281
    %v2303 = vsub.f32 %v719, %v1281
    %v2304 = vsub.f32 %v720, %v1281
    %v2305 = vsub.f32 %v721, %v1281
    %v2306 = vsub.f32 %v722, %v1281
    %v2307 = vsub.f32 %v723, %v1282
    %v2308 = vsub.f32 %v724, %v1282
    %v2309 = vsub.f32 %v725, %v1282
    %v2310 = vsub.f32 %v726, %v1282
    %v2311 = vsub.f32 %v727, %v1282
    %v2312 = vsub.f32 %v728, %v1282
    %v2313 = vsub.f32 %v729, %v1283
    %v2314 = vsub.f32 %v730, %v1283
    %v2315 = vsub.f32 %v731, %v1283
    %v2316 = vsub.f32 %v732, %v1283
    %v2317 = vsub.f32 %v733, %v1283
    %v2318 = vsub.f32 %v734, %v1283
    %v2319 = vsub.f32 %v735, %v1284
    %v2320 = vsub.f32 %v736, %v1284
    %v2321 = vsub.f32 %v737, %v1284
    %v2322 = vsub.f32 %v738, %v1284
    %v2323 = vsub.f32 %v739, %v1284
    %v2324 = vsub.f32 %v740, %v1284
    %v2325 = vsub.f32 %v741, %v1285
    %v2326 = vsub.f32 %v742, %v1285
    %v2327 = vsub.f32 %v743, %v1285
    %v2328 = vsub.f32 %v744, %v1285
    %v2329 = vsub.f32 %v745, %v1285
    %v2330 = vsub.f32 %v746, %v1285
    %v2331 = vsub.f32 %v747, %v1286
    %v2332 = vsub.f32 %v748, %v1286
    %v2333 = vsub.f32 %v749, %v1286
    %v2334 = vsub.f32 %v750, %v1286
    %v2335 = vsub.f32 %v751, %v1286
    %v2336 = vsub.f32 %v752, %v1286
    %v2337 = vsub.f32 %v753, %v1287
    %v2338 = vsub.f32 %v754, %v1287
    %v2339 = vsub.f32 %v755, %v1287
    %v2340 = vsub.f32 %v756, %v1287
    %v2341 = vsub.f32 %v757, %v1287
    %v2342 = vsub.f32 %v758, %v1287
    %v2343 = vsub.f32 %v759, %v1288
    %v2344 = vsub.f32 %v760, %v1288
    %v2345 = vsub.f32 %v761, %v1288
    %v2346 = vsub.f32 %v762, %v1288
    %v2347 = vsub.f32 %v763, %v1288
    %v2348 = vsub.f32 %v764, %v1288
    %v2349 = vsub.f32 %v765, %v1289
    %v2350 = vsub.f32 %v766, %v1289
    %v2351 = vsub.f32 %v767, %v1289
    %v2352 = vsub.f32 %v768, %v1289
    %v2353 = vsub.f32 %v769, %v1289
    %v2354 = vsub.f32 %v770, %v1289
    %v2355 = vsub.f32 %v771, %v1290
    %v2356 = vsub.f32 %v772, %v1290
    %v2357 = vsub.f32 %v773, %v1290
    %v2358 = vsub.f32 %v774, %v1290
    %v2359 = vsub.f32 %v775, %v1290
    %v2360 = vsub.f32 %v776, %v1290
    %v2361 = vsub.f32 %v777, %v1291
    %v2362 = vsub.f32 %v778, %v1291
    %v2363 = vsub.f32 %v779, %v1291
    %v2364 = vsub.f32 %v780, %v1291
    %v2365 = vsub.f32 %v781, %v1291
    %v2366 = vsub.f32 %v782, %v1291
    %v2367 = vsub.f32 %v783, %v1292
    %v2368 = vsub.f32 %v784, %v1292
    %v2369 = vsub.f32 %v785, %v1292
    %v2370 = vsub.f32 %v786, %v1292
    %v2371 = vsub.f32 %v787, %v1292
    %v2372 = vsub.f32 %v788, %v1292
    %v2373 = vsub.f32 %v789, %v1293
    %v2374 = vsub.f32 %v790, %v1293
    %v2375 = vsub.f32 %v791, %v1293
    %v2376 = vsub.f32 %v792, %v1293
    %v2377 = vsub.f32 %v793, %v1293
    %v2378 = vsub.f32 %v794, %v1293
    %v2379 = vsub.f32 %v795, %v1294
    %v2380 = vsub.f32 %v796, %v1294
    %v2381 = vsub.f32 %v797, %v1294
    %v2382 = vsub.f32 %v798, %v1294
    %v2383 = vsub.f32 %v799, %v1294
    %v2384 = vsub.f32 %v800, %v1294
    %v2385 = vsub.f32 %v801, %v1295
    %v2386 = vsub.f32 %v802, %v1295
    %v2387 = vsub.f32 %v803, %v1295
    %v2388 = vsub.f32 %v804, %v1295
    %v2389 = vsub.f32 %v805, %v1295
    %v2390 = vsub.f32 %v806, %v1295
    %v2391 = vsub.f32 %v807, %v1296
    %v2392 = vsub.f32 %v808, %v1296
    %v2393 = vsub.f32 %v809, %v1296
    %v2394 = vsub.f32 %v810, %v1296
    %v2395 = vsub.f32 %v811, %v1296
    %v2396 = vsub.f32 %v812, %v1296
    %v2397 = vsub.f32 %v813, %v1297
    %v2398 = vsub.f32 %v814, %v1297
    %v2399 = vsub.f32 %v815, %v1297
    %v2400 = vsub.f32 %v816, %v1297
    %v2401 = vsub.f32 %v817, %v1297
    %v2402 = vsub.f32 %v818, %v1297
    %v2403 = vsub.f32 %v819, %v1298
    %v2404 = vsub.f32 %v820, %v1298
    %v2405 = vsub.f32 %v821, %v1298
    %v2406 = vsub.f32 %v822, %v1298
    %v2407 = vsub.f32 %v823, %v1298
    %v2408 = vsub.f32 %v824, %v1298
    %v2409 = vsub.f32 %v825, %v1299
    %v2410 = vsub.f32 %v826, %v1299
    %v2411 = vsub.f32 %v827, %v1299
    %v2412 = vsub.f32 %v828, %v1299
    %v2413 = vsub.f32 %v829, %v1299
    %v2414 = vsub.f32 %v830, %v1299
    %v2415 = vsub.f32 %v831, %v1300
    %v2416 = vsub.f32 %v832, %v1300
    %v2417 = vsub.f32 %v833, %v1300
    %v2418 = vsub.f32 %v834, %v1300
    %v2419 = vsub.f32 %v835, %v1300
    %v2420 = vsub.f32 %v836, %v1300
    %v2421 = vsub.f32 %v837, %v1301
    %v2422 = vsub.f32 %v838, %v1301
    %v2423 = vsub.f32 %v839, %v1301
    %v2424 = vsub.f32 %v840, %v1301
    %v2425 = vsub.f32 %v841, %v1301
    %v2426 = vsub.f32 %v842, %v1301
    %v2427 = vsub.f32 %v843, %v1302
    %v2428 = vsub.f32 %v844, %v1302
    %v2429 = vsub.f32 %v845, %v1302
    %v2430 = vsub.f32 %v846, %v1302
    %v2431 = vsub.f32 %v847, %v1302
    %v2432 = vsub.f32 %v848, %v1302
    %v2433 = vsub.f32 %v849, %v1303
    %v2434 = vsub.f32 %v850, %v1303
    %v2435 = vsub.f32 %v851, %v1303
    %v2436 = vsub.f32 %v852, %v1303
    %v2437 = vsub.f32 %v853, %v1303
    %v2438 = vsub.f32 %v854, %v1303
    %v2439 = vsub.f32 %v855, %v1304
    %v2440 = vsub.f32 %v856, %v1304
    %v2441 = vsub.f32 %v857, %v1304
    %v2442 = vsub.f32 %v858, %v1304
    %v2443 = vsub.f32 %v859, %v1304
    %v2444 = vsub.f32 %v860, %v1304
    %v2445 = vsub.f32 %v861, %v1305
    %v2446 = vsub.f32 %v862, %v1305
    %v2447 = vsub.f32 %v863, %v1305
    %v2448 = vsub.f32 %v864, %v1305
    %v2449 = vsub.f32 %v865, %v1305
    %v2450 = vsub.f32 %v866, %v1305
    %v2451 = vsub.f32 %v867, %v1306
    %v2452 = vsub.f32 %v868, %v1306
    %v2453 = vsub.f32 %v869, %v1306
    %v2454 = vsub.f32 %v870, %v1306
    %v2455 = vsub.f32 %v871, %v1306
    %v2456 = vsub.f32 %v872, %v1306
    %v2457 = vsub.f32 %v873, %v1307
    %v2458 = vsub.f32 %v874, %v1307
    %v2459 = vsub.f32 %v875, %v1307
    %v2460 = vsub.f32 %v876, %v1307
    %v2461 = vsub.f32 %v877, %v1307
    %v2462 = vsub.f32 %v878, %v1307
    %v2463 = vsub.f32 %v879, %v1308
    %v2464 = vsub.f32 %v880, %v1308
    %v2465 = vsub.f32 %v881, %v1308
    %v2466 = vsub.f32 %v882, %v1308
    %v2467 = vsub.f32 %v883, %v1308
    %v2468 = vsub.f32 %v884, %v1308
    %v2469 = vsub.f32 %v885, %v1309
    %v2470 = vsub.f32 %v886, %v1309
    %v2471 = vsub.f32 %v887, %v1309
    %v2472 = vsub.f32 %v888, %v1309
    %v2473 = vsub.f32 %v889, %v1309
    %v2474 = vsub.f32 %v890, %v1309
    %v2475 = vsub.f32 %v891, %v1310
    %v2476 = vsub.f32 %v892, %v1310
    %v2477 = vsub.f32 %v893, %v1310
    %v2478 = vsub.f32 %v894, %v1310
    %v2479 = vsub.f32 %v895, %v1310
    %v2480 = vsub.f32 %v896, %v1310
    %v2481 = vsub.f32 %v897, %v1311
    %v2482 = vsub.f32 %v898, %v1311
    %v2483 = vsub.f32 %v899, %v1311
    %v2484 = vsub.f32 %v900, %v1311
    %v2485 = vsub.f32 %v901, %v1311
    %v2486 = vsub.f32 %v902, %v1311
    %v2487 = vsub.f32 %v903, %v1312
    %v2488 = vsub.f32 %v904, %v1312
    %v2489 = vsub.f32 %v905, %v1312
    %v2490 = vsub.f32 %v906, %v1312
    %v2491 = vsub.f32 %v907, %v1312
    %v2492 = vsub.f32 %v908, %v1312
    %v2493 = vsub.f32 %v909, %v1313
    %v2494 = vsub.f32 %v910, %v1313
    %v2495 = vsub.f32 %v911, %v1313
    %v2496 = vsub.f32 %v912, %v1313
    %v2497 = vsub.f32 %v913, %v1313
    %v2498 = vsub.f32 %v914, %v1313
    %v2499 = vsub.f32 %v915, %v1314
    %v2500 = vsub.f32 %v916, %v1314
    %v2501 = vsub.f32 %v917, %v1314
    %v2502 = vsub.f32 %v918, %v1314
    %v2503 = vsub.f32 %v919, %v1314
    %v2504 = vsub.f32 %v920, %v1314
    %v2505 = vsub.f32 %v921, %v1315
    %v2506 = vsub.f32 %v922, %v1315
    %v2507 = vsub.f32 %v923, %v1315
    %v2508 = vsub.f32 %v924, %v1315
    %v2509 = vsub.f32 %v925, %v1315
    %v2510 = vsub.f32 %v926, %v1315
    %v2511 = vsub.f32 %v927, %v1316
    %v2512 = vsub.f32 %v928, %v1316
    %v2513 = vsub.f32 %v929, %v1316
    %v2514 = vsub.f32 %v930, %v1316
    %v2515 = vsub.f32 %v931, %v1316
    %v2516 = vsub.f32 %v932, %v1316
    %v2517 = vmul.f32 %v2229, %v2181
    %v2518 = vmul.f32 %v2230, %v2181
    %v2519 = vmul.f32 %v2231, %v2181
    %v2520 = vmul.f32 %v2232, %v2181
    %v2521 = vmul.f32 %v2233, %v2181
    %v2522 = vmul.f32 %v2234, %v2181
    %v2523 = vmul.f32 %v2235, %v2182
    %v2524 = vmul.f32 %v2236, %v2182
    %v2525 = vmul.f32 %v2237, %v2182
    %v2526 = vmul.f32 %v2238, %v2182
    %v2527 = vmul.f32 %v2239, %v2182
    %v2528 = vmul.f32 %v2240, %v2182
    %v2529 = vmul.f32 %v2241, %v2183
    %v2530 = vmul.f32 %v2242, %v2183
    %v2531 = vmul.f32 %v2243, %v2183
    %v2532 = vmul.f32 %v2244, %v2183
    %v2533 = vmul.f32 %v2245, %v2183
    %v2534 = vmul.f32 %v2246, %v2183
    %v2535 = vmul.f32 %v2247, %v2184
    %v2536 = vmul.f32 %v2248, %v2184
    %v2537 = vmul.f32 %v2249, %v2184
    %v2538 = vmul.f32 %v2250, %v2184
    %v2539 = vmul.f32 %v2251, %v2184
    %v2540 = vmul.f32 %v2252, %v2184
    %v2541 = vmul.f32 %v2253, %v2185
    %v2542 = vmul.f32 %v2254, %v2185
    %v2543 = vmul.f32 %v2255, %v2185
    %v2544 = vmul.f32 %v2256, %v2185
    %v2545 = vmul.f32 %v2257, %v2185
    %v2546 = vmul.f32 %v2258, %v2185
    %v2547 = vmul.f32 %v2259, %v2186
    %v2548 = vmul.f32 %v2260, %v2186
    %v2549 = vmul.f32 %v2261, %v2186
    %v2550 = vmul.f32 %v2262, %v2186
    %v2551 = vmul.f32 %v2263, %v2186
    %v2552 = vmul.f32 %v2264, %v2186
    %v2553 = vmul.f32 %v2265, %v2187
    %v2554 = vmul.f32 %v2266, %v2187
    %v2555 = vmul.f32 %v2267, %v2187
    %v2556 = vmul.f32 %v2268, %v2187
    %v2557 = vmul.f32 %v2269, %v2187
    %v2558 = vmul.f32 %v2270, %v2187
    %v2559 = vmul.f32 %v2271, %v2188
    %v2560 = vmul.f32 %v2272, %v2188
    %v2561 = vmul.f32 %v2273, %v2188
    %v2562 = vmul.f32 %v2274, %v2188
    %v2563 = vmul.f32 %v2275, %v2188
    %v2564 = vmul.f32 %v2276, %v2188
    %v2565 = vmul.f32 %v2277, %v2189
    %v2566 = vmul.f32 %v2278, %v2189
    %v2567 = vmul.f32 %v2279, %v2189
    %v2568 = vmul.f32 %v2280, %v2189
    %v2569 = vmul.f32 %v2281, %v2189
    %v2570 = vmul.f32 %v2282, %v2189
    %v2571 = vmul.f32 %v2283, %v2190
    %v2572 = vmul.f32 %v2284, %v2190
    %v2573 = vmul.f32 %v2285, %v2190
    %v2574 = vmul.f32 %v2286, %v2190
    %v2575 = vmul.f32 %v2287, %v2190
    %v2576 = vmul.f32 %v2288, %v2190
    %v2577 = vmul.f32 %v2289, %v2191
    %v2578 = vmul.f32 %v2290, %v2191
    %v2579 = vmul.f32 %v2291, %v2191
    %v2580 = vmul.f32 %v2292, %v2191
    %v2581 = vmul.f32 %v2293, %v2191
    %v2582 = vmul.f32 %v2294, %v2191
    %v2583 = vmul.f32 %v2295, %v2192
    %v2584 = vmul.f32 %v2296, %v2192
    %v2585 = vmul.f32 %v2297, %v2192
    %v2586 = vmul.f32 %v2298, %v2192
    %v2587 = vmul.f32 %v2299, %v2192
    %v2588 = vmul.f32 %v2300, %v2192
    %v2589 = vmul.f32 %v2301, %v2193
    %v2590 = vmul.f32 %v2302, %v2193
    %v2591 = vmul.f32 %v2303, %v2193
    %v2592 = vmul.f32 %v2304, %v2193
    %v2593 = vmul.f32 %v2305, %v2193
    %v2594 = vmul.f32 %v2306, %v2193
    %v2595 = vmul.f32 %v2307, %v2194
    %v2596 = vmul.f32 %v2308, %v2194
    %v2597 = vmul.f32 %v2309, %v2194
    %v2598 = vmul.f32 %v2310, %v2194
    %v2599 = vmul.f32 %v2311, %v2194
    %v2600 = vmul.f32 %v2312, %v2194
    %v2601 = vmul.f32 %v2313, %v2195
    %v2602 = vmul.f32 %v2314, %v2195
    %v2603 = vmul.f32 %v2315, %v2195
    %v2604 = vmul.f32 %v2316, %v2195
    %v2605 = vmul.f32 %v2317, %v2195
    %v2606 = vmul.f32 %v2318, %v2195
    %v2607 = vmul.f32 %v2319, %v2196
    %v2608 = vmul.f32 %v2320, %v2196
    %v2609 = vmul.f32 %v2321, %v2196
    %v2610 = vmul.f32 %v2322, %v2196
    %v2611 = vmul.f32 %v2323, %v2196
    %v2612 = vmul.f32 %v2324, %v2196
    %v2613 = vmul.f32 %v2325, %v2197
    %v2614 = vmul.f32 %v2326, %v2197
    %v2615 = vmul.f32 %v2327, %v2197
    %v2616 = vmul.f32 %v2328, %v2197
    %v2617 = vmul.f32 %v2329, %v2197
    %v2618 = vmul.f32 %v2330, %v2197
    %v2619 = vmul.f32 %v2331, %v2198
    %v2620 = vmul.f32 %v2332, %v2198
    %v2621 = vmul.f32 %v2333, %v2198
    %v2622 = vmul.f32 %v2334, %v2198
    %v2623 = vmul.f32 %v2335, %v2198
    %v2624 = vmul.f32 %v2336, %v2198
    %v2625 = vmul.f32 %v2337, %v2199
    %v2626 = vmul.f32 %v2338, %v2199
    %v2627 = vmul.f32 %v2339, %v2199
    %v2628 = vmul.f32 %v2340, %v2199
    %v2629 = vmul.f32 %v2341, %v2199
    %v2630 = vmul.f32 %v2342, %v2199
    %v2631 = vmul.f32 %v2343, %v2200
    %v2632 = vmul.f32 %v2344, %v2200
    %v2633 = vmul.f32 %v2345, %v2200
    %v2634 = vmul.f32 %v2346, %v2200
    %v2635 = vmul.f32 %v2347, %v2200
    %v2636 = vmul.f32 %v2348, %v2200
    %v2637 = vmul.f32 %v2349, %v2201
    %v2638 = vmul.f32 %v2350, %v2201
    %v2639 = vmul.f32 %v2351, %v2201
    %v2640 = vmul.f32 %v2352, %v2201
    %v2641 = vmul.f32 %v2353, %v2201
    %v2642 = vmul.f32 %v2354, %v2201
    %v2643 = vmul.f32 %v2355, %v2202
    %v2644 = vmul.f32 %v2356, %v2202
    %v2645 = vmul.f32 %v2357, %v2202
    %v2646 = vmul.f32 %v2358, %v2202
    %v2647 = vmul.f32 %v2359, %v2202
    %v2648 = vmul.f32 %v2360, %v2202
    %v2649 = vmul.f32 %v2361, %v2203
    %v2650 = vmul.f32 %v2362, %v2203
    %v2651 = vmul.f32 %v2363, %v2203
    %v2652 = vmul.f32 %v2364, %v2203
    %v2653 = vmul.f32 %v2365, %v2203
    %v2654 = vmul.f32 %v2366, %v2203
    %v2655 = vmul.f32 %v2367, %v2204
    %v2656 = vmul.f32 %v2368, %v2204
    %v2657 = vmul.f32 %v2369, %v2204
    %v2658 = vmul.f32 %v2370, %v2204
    %v2659 = vmul.f32 %v2371, %v2204
    %v2660 = vmul.f32 %v2372, %v2204
    %v2661 = vmul.f32 %v2373, %v2205
    %v2662 = vmul.f32 %v2374, %v2205
    %v2663 = vmul.f32 %v2375, %v2205
    %v2664 = vmul.f32 %v2376, %v2205
    %v2665 = vmul.f32 %v2377, %v2205
    %v2666 = vmul.f32 %v2378, %v2205
    %v2667 = vmul.f32 %v2379, %v2206
    %v2668 = vmul.f32 %v2380, %v2206
    %v2669 = vmul.f32 %v2381, %v2206
    %v2670 = vmul.f32 %v2382, %v2206
    %v2671 = vmul.f32 %v2383, %v2206
    %v2672 = vmul.f32 %v2384, %v2206
    %v2673 = vmul.f32 %v2385, %v2207
    %v2674 = vmul.f32 %v2386, %v2207
    %v2675 = vmul.f32 %v2387, %v2207
    %v2676 = vmul.f32 %v2388, %v2207
    %v2677 = vmul.f32 %v2389, %v2207
    %v2678 = vmul.f32 %v2390, %v2207
    %v2679 = vmul.f32 %v2391, %v2208
    %v2680 = vmul.f32 %v2392, %v2208
    %v2681 = vmul.f32 %v2393, %v2208
    %v2682 = vmul.f32 %v2394, %v2208
    %v2683 = vmul.f32 %v2395, %v2208
    %v2684 = vmul.f32 %v2396, %v2208
    %v2685 = vmul.f32 %v2397, %v2209
    %v2686 = vmul.f32 %v2398, %v2209
    %v2687 = vmul.f32 %v2399, %v2209
    %v2688 = vmul.f32 %v2400, %v2209
    %v2689 = vmul.f32 %v2401, %v2209
    %v2690 = vmul.f32 %v2402, %v2209
    %v2691 = vmul.f32 %v2403, %v2210
    %v2692 = vmul.f32 %v2404, %v2210
    %v2693 = vmul.f32 %v2405, %v2210
    %v2694 = vmul.f32 %v2406, %v2210
    %v2695 = vmul.f32 %v2407, %v2210
    %v2696 = vmul.f32 %v2408, %v2210
    %v2697 = vmul.f32 %v2409, %v2211
    %v2698 = vmul.f32 %v2410, %v2211
    %v2699 = vmul.f32 %v2411, %v2211
    %v2700 = vmul.f32 %v2412, %v2211
    %v2701 = vmul.f32 %v2413, %v2211
    %v2702 = vmul.f32 %v2414, %v2211
    %v2703 = vmul.f32 %v2415, %v2212
    %v2704 = vmul.f32 %v2416, %v2212
    %v2705 = vmul.f32 %v2417, %v2212
    %v2706 = vmul.f32 %v2418, %v2212
    %v2707 = vmul.f32 %v2419, %v2212
    %v2708 = vmul.f32 %v2420, %v2212
    %v2709 = vmul.f32 %v2421, %v2213
    %v2710 = vmul.f32 %v2422, %v2213
    %v2711 = vmul.f32 %v2423, %v2213
    %v2712 = vmul.f32 %v2424, %v2213
    %v2713 = vmul.f32 %v2425, %v2213
    %v2714 = vmul.f32 %v2426, %v2213
    %v2715 = vmul.f32 %v2427, %v2214
    %v2716 = vmul.f32 %v2428, %v2214
    %v2717 = vmul.f32 %v2429, %v2214
    %v2718 = vmul.f32 %v2430, %v2214
    %v2719 = vmul.f32 %v2431, %v2214
    %v2720 = vmul.f32 %v2432, %v2214
    %v2721 = vmul.f32 %v2433, %v2215
    %v2722 = vmul.f32 %v2434, %v2215
    %v2723 = vmul.f32 %v2435, %v2215
    %v2724 = vmul.f32 %v2436, %v2215
    %v2725 = vmul.f32 %v2437, %v2215
    %v2726 = vmul.f32 %v2438, %v2215
    %v2727 = vmul.f32 %v2439, %v2216
    %v2728 = vmul.f32 %v2440, %v2216
    %v2729 = vmul.f32 %v2441, %v2216
    %v2730 = vmul.f32 %v2442, %v2216
    %v2731 = vmul.f32 %v2443, %v2216
    %v2732 = vmul.f32 %v2444, %v2216
    %v2733 = vmul.f32 %v2445, %v2217
    %v2734 = vmul.f32 %v2446, %v2217
    %v2735 = vmul.f32 %v2447, %v2217
    %v2736 = vmul.f32 %v2448, %v2217
    %v2737 = vmul.f32 %v2449, %v2217
    %v2738 = vmul.f32 %v2450, %v2217
    %v2739 = vmul.f32 %v2451, %v2218
    %v2740 = vmul.f32 %v2452, %v2218
    %v2741 = vmul.f32 %v2453, %v2218
    %v2742 = vmul.f32 %v2454, %v2218
    %v2743 = vmul.f32 %v2455, %v2218
    %v2744 = vmul.f32 %v2456, %v2218
    %v2745 = vmul.f32 %v2457, %v2219
    %v2746 = vmul.f32 %v2458, %v2219
    %v2747 = vmul.f32 %v2459, %v2219
    %v2748 = vmul.f32 %v2460, %v2219
    %v2749 = vmul.f32 %v2461, %v2219
    %v2750 = vmul.f32 %v2462, %v2219
    %v2751 = vmul.f32 %v2463, %v2220
    %v2752 = vmul.f32 %v2464, %v2220
    %v2753 = vmul.f32 %v2465, %v2220
    %v2754 = vmul.f32 %v2466, %v2220
    %v2755 = vmul.f32 %v2467, %v2220
    %v2756 = vmul.f32 %v2468, %v2220
    %v2757 = vmul.f32 %v2469, %v2221
    %v2758 = vmul.f32 %v2470, %v2221
    %v2759 = vmul.f32 %v2471, %v2221
    %v2760 = vmul.f32 %v2472, %v2221
    %v2761 = vmul.f32 %v2473, %v2221
    %v2762 = vmul.f32 %v2474, %v2221
    %v2763 = vmul.f32 %v2475, %v2222
    %v2764 = vmul.f32 %v2476, %v2222
    %v2765 = vmul.f32 %v2477, %v2222
    %v2766 = vmul.f32 %v2478, %v2222
    %v2767 = vmul.f32 %v2479, %v2222
    %v2768 = vmul.f32 %v2480, %v2222
    %v2769 = vmul.f32 %v2481, %v2223
    %v2770 = vmul.f32 %v2482, %v2223
    %v2771 = vmul.f32 %v2483, %v2223
    %v2772 = vmul.f32 %v2484, %v2223
    %v2773 = vmul.f32 %v2485, %v2223
    %v2774 = vmul.f32 %v2486, %v2223
    %v2775 = vmul.f32 %v2487, %v2224
    %v2776 = vmul.f32 %v2488, %v2224
    %v2777 = vmul.f32 %v2489, %v2224
    %v2778 = vmul.f32 %v2490, %v2224
    %v2779 = vmul.f32 %v2491, %v2224
    %v2780 = vmul.f32 %v2492, %v2224
    %v2781 = vmul.f32 %v2493, %v2225
    %v2782 = vmul.f32 %v2494, %v2225
    %v2783 = vmul.f32 %v2495, %v2225
    %v2784 = vmul.f32 %v2496, %v2225
    %v2785 = vmul.f32 %v2497, %v2225
    %v2786 = vmul.f32 %v2498, %v2225
    %v2787 = vmul.f32 %v2499, %v2226
    %v2788 = vmul.f32 %v2500, %v2226
    %v2789 = vmul.f32 %v2501, %v2226
    %v2790 = vmul.f32 %v2502, %v2226
    %v2791 = vmul.f32 %v2503, %v2226
    %v2792 = vmul.f32 %v2504, %v2226
    %v2793 = vmul.f32 %v2505, %v2227
    %v2794 = vmul.f32 %v2506, %v2227
    %v2795 = vmul.f32 %v2507, %v2227
    %v2796 = vmul.f32 %v2508, %v2227
    %v2797 = vmul.f32 %v2509, %v2227
    %v2798 = vmul.f32 %v2510, %v2227
    %v2799 = vmul.f32 %v2511, %v2228
    %v2800 = vmul.f32 %v2512, %v2228
    %v2801 = vmul.f32 %v2513, %v2228
    %v2802 = vmul.f32 %v2514, %v2228
    %v2803 = vmul.f32 %v2515, %v2228
    %v2804 = vmul.f32 %v2516, %v2228
    %v2805 = vld [vmem:[#allocation7] sm:$0x3f]
    %v2807 = vlaneseq
    %v2808 = vshrl.u32 %v2807, 7
    %v2809 = vsub.s32 0, %v2808
    %v2810 = vrot.slane %v2805, %v2809
    %v2811 = vlaneseq
    %v2812 = vshrl.u32 %v2811, 7
    %v2813 = vsub.s32 1, %v2812
    %v2814 = vrot.slane %v2805, %v2813
    %v2815 = vlaneseq
    %v2816 = vshrl.u32 %v2815, 7
    %v2817 = vsub.s32 2, %v2816
    %v2818 = vrot.slane %v2805, %v2817
    %v2819 = vlaneseq
    %v2820 = vshrl.u32 %v2819, 7
    %v2821 = vsub.s32 3, %v2820
    %v2822 = vrot.slane %v2805, %v2821
    %v2823 = vlaneseq
    %v2824 = vshrl.u32 %v2823, 7
    %v2825 = vsub.s32 4, %v2824
    %v2826 = vrot.slane %v2805, %v2825
    %v2827 = vlaneseq
    %v2828 = vshrl.u32 %v2827, 7
    %v2829 = vsub.s32 5, %v2828
    %v2830 = vrot.slane %v2805, %v2829
    %v2837 = vmul.f32 %v2517, %v2810
    %v2838 = vmul.f32 %v2518, %v2814
    %v2839 = vmul.f32 %v2519, %v2818
    %v2840 = vmul.f32 %v2520, %v2822
    %v2841 = vmul.f32 %v2521, %v2826
    %v2842 = vmul.f32 %v2522, %v2830
    %v2843 = vmul.f32 %v2523, %v2810
    %v2844 = vmul.f32 %v2524, %v2814
    %v2845 = vmul.f32 %v2525, %v2818
    %v2846 = vmul.f32 %v2526, %v2822
    %v2847 = vmul.f32 %v2527, %v2826
    %v2848 = vmul.f32 %v2528, %v2830
    %v2849 = vmul.f32 %v2529, %v2810
    %v2850 = vmul.f32 %v2530, %v2814
    %v2851 = vmul.f32 %v2531, %v2818
    %v2852 = vmul.f32 %v2532, %v2822
    %v2853 = vmul.f32 %v2533, %v2826
    %v2854 = vmul.f32 %v2534, %v2830
    %v2855 = vmul.f32 %v2535, %v2810
    %v2856 = vmul.f32 %v2536, %v2814
    %v2857 = vmul.f32 %v2537, %v2818
    %v2858 = vmul.f32 %v2538, %v2822
    %v2859 = vmul.f32 %v2539, %v2826
    %v2860 = vmul.f32 %v2540, %v2830
    %v2861 = vmul.f32 %v2541, %v2810
    %v2862 = vmul.f32 %v2542, %v2814
    %v2863 = vmul.f32 %v2543, %v2818
    %v2864 = vmul.f32 %v2544, %v2822
    %v2865 = vmul.f32 %v2545, %v2826
    %v2866 = vmul.f32 %v2546, %v2830
    %v2867 = vmul.f32 %v2547, %v2810
    %v2868 = vmul.f32 %v2548, %v2814
    %v2869 = vmul.f32 %v2549, %v2818
    %v2870 = vmul.f32 %v2550, %v2822
    %v2871 = vmul.f32 %v2551, %v2826
    %v2872 = vmul.f32 %v2552, %v2830
    %v2873 = vmul.f32 %v2553, %v2810
    %v2874 = vmul.f32 %v2554, %v2814
    %v2875 = vmul.f32 %v2555, %v2818
    %v2876 = vmul.f32 %v2556, %v2822
    %v2877 = vmul.f32 %v2557, %v2826
    %v2878 = vmul.f32 %v2558, %v2830
    %v2879 = vmul.f32 %v2559, %v2810
    %v2880 = vmul.f32 %v2560, %v2814
    %v2881 = vmul.f32 %v2561, %v2818
    %v2882 = vmul.f32 %v2562, %v2822
    %v2883 = vmul.f32 %v2563, %v2826
    %v2884 = vmul.f32 %v2564, %v2830
    %v2885 = vmul.f32 %v2565, %v2810
    %v2886 = vmul.f32 %v2566, %v2814
    %v2887 = vmul.f32 %v2567, %v2818
    %v2888 = vmul.f32 %v2568, %v2822
    %v2889 = vmul.f32 %v2569, %v2826
    %v2890 = vmul.f32 %v2570, %v2830
    %v2891 = vmul.f32 %v2571, %v2810
    %v2892 = vmul.f32 %v2572, %v2814
    %v2893 = vmul.f32 %v2573, %v2818
    %v2894 = vmul.f32 %v2574, %v2822
    %v2895 = vmul.f32 %v2575, %v2826
    %v2896 = vmul.f32 %v2576, %v2830
    %v2897 = vmul.f32 %v2577, %v2810
    %v2898 = vmul.f32 %v2578, %v2814
    %v2899 = vmul.f32 %v2579, %v2818
    %v2900 = vmul.f32 %v2580, %v2822
    %v2901 = vmul.f32 %v2581, %v2826
    %v2902 = vmul.f32 %v2582, %v2830
    %v2903 = vmul.f32 %v2583, %v2810
    %v2904 = vmul.f32 %v2584, %v2814
    %v2905 = vmul.f32 %v2585, %v2818
    %v2906 = vmul.f32 %v2586, %v2822
    %v2907 = vmul.f32 %v2587, %v2826
    %v2908 = vmul.f32 %v2588, %v2830
    %v2909 = vmul.f32 %v2589, %v2810
    %v2910 = vmul.f32 %v2590, %v2814
    %v2911 = vmul.f32 %v2591, %v2818
    %v2912 = vmul.f32 %v2592, %v2822
    %v2913 = vmul.f32 %v2593, %v2826
    %v2914 = vmul.f32 %v2594, %v2830
    %v2915 = vmul.f32 %v2595, %v2810
    %v2916 = vmul.f32 %v2596, %v2814
    %v2917 = vmul.f32 %v2597, %v2818
    %v2918 = vmul.f32 %v2598, %v2822
    %v2919 = vmul.f32 %v2599, %v2826
    %v2920 = vmul.f32 %v2600, %v2830
    %v2921 = vmul.f32 %v2601, %v2810
    %v2922 = vmul.f32 %v2602, %v2814
    %v2923 = vmul.f32 %v2603, %v2818
    %v2924 = vmul.f32 %v2604, %v2822
    %v2925 = vmul.f32 %v2605, %v2826
    %v2926 = vmul.f32 %v2606, %v2830
    %v2927 = vmul.f32 %v2607, %v2810
    %v2928 = vmul.f32 %v2608, %v2814
    %v2929 = vmul.f32 %v2609, %v2818
    %v2930 = vmul.f32 %v2610, %v2822
    %v2931 = vmul.f32 %v2611, %v2826
    %v2932 = vmul.f32 %v2612, %v2830
    %v2933 = vmul.f32 %v2613, %v2810
    %v2934 = vmul.f32 %v2614, %v2814
    %v2935 = vmul.f32 %v2615, %v2818
    %v2936 = vmul.f32 %v2616, %v2822
    %v2937 = vmul.f32 %v2617, %v2826
    %v2938 = vmul.f32 %v2618, %v2830
    %v2939 = vmul.f32 %v2619, %v2810
    %v2940 = vmul.f32 %v2620, %v2814
    %v2941 = vmul.f32 %v2621, %v2818
    %v2942 = vmul.f32 %v2622, %v2822
    %v2943 = vmul.f32 %v2623, %v2826
    %v2944 = vmul.f32 %v2624, %v2830
    %v2945 = vmul.f32 %v2625, %v2810
    %v2946 = vmul.f32 %v2626, %v2814
    %v2947 = vmul.f32 %v2627, %v2818
    %v2948 = vmul.f32 %v2628, %v2822
    %v2949 = vmul.f32 %v2629, %v2826
    %v2950 = vmul.f32 %v2630, %v2830
    %v2951 = vmul.f32 %v2631, %v2810
    %v2952 = vmul.f32 %v2632, %v2814
    %v2953 = vmul.f32 %v2633, %v2818
    %v2954 = vmul.f32 %v2634, %v2822
    %v2955 = vmul.f32 %v2635, %v2826
    %v2956 = vmul.f32 %v2636, %v2830
    %v2957 = vmul.f32 %v2637, %v2810
    %v2958 = vmul.f32 %v2638, %v2814
    %v2959 = vmul.f32 %v2639, %v2818
    %v2960 = vmul.f32 %v2640, %v2822
    %v2961 = vmul.f32 %v2641, %v2826
    %v2962 = vmul.f32 %v2642, %v2830
    %v2963 = vmul.f32 %v2643, %v2810
    %v2964 = vmul.f32 %v2644, %v2814
    %v2965 = vmul.f32 %v2645, %v2818
    %v2966 = vmul.f32 %v2646, %v2822
    %v2967 = vmul.f32 %v2647, %v2826
    %v2968 = vmul.f32 %v2648, %v2830
    %v2969 = vmul.f32 %v2649, %v2810
    %v2970 = vmul.f32 %v2650, %v2814
    %v2971 = vmul.f32 %v2651, %v2818
    %v2972 = vmul.f32 %v2652, %v2822
    %v2973 = vmul.f32 %v2653, %v2826
    %v2974 = vmul.f32 %v2654, %v2830
    %v2975 = vmul.f32 %v2655, %v2810
    %v2976 = vmul.f32 %v2656, %v2814
    %v2977 = vmul.f32 %v2657, %v2818
    %v2978 = vmul.f32 %v2658, %v2822
    %v2979 = vmul.f32 %v2659, %v2826
    %v2980 = vmul.f32 %v2660, %v2830
    %v2981 = vmul.f32 %v2661, %v2810
    %v2982 = vmul.f32 %v2662, %v2814
    %v2983 = vmul.f32 %v2663, %v2818
    %v2984 = vmul.f32 %v2664, %v2822
    %v2985 = vmul.f32 %v2665, %v2826
    %v2986 = vmul.f32 %v2666, %v2830
    %v2987 = vmul.f32 %v2667, %v2810
    %v2988 = vmul.f32 %v2668, %v2814
    %v2989 = vmul.f32 %v2669, %v2818
    %v2990 = vmul.f32 %v2670, %v2822
    %v2991 = vmul.f32 %v2671, %v2826
    %v2992 = vmul.f32 %v2672, %v2830
    %v2993 = vmul.f32 %v2673, %v2810
    %v2994 = vmul.f32 %v2674, %v2814
    %v2995 = vmul.f32 %v2675, %v2818
    %v2996 = vmul.f32 %v2676, %v2822
    %v2997 = vmul.f32 %v2677, %v2826
    %v2998 = vmul.f32 %v2678, %v2830
    %v2999 = vmul.f32 %v2679, %v2810
    %v3000 = vmul.f32 %v2680, %v2814
    %v3001 = vmul.f32 %v2681, %v2818
    %v3002 = vmul.f32 %v2682, %v2822
    %v3003 = vmul.f32 %v2683, %v2826
    %v3004 = vmul.f32 %v2684, %v2830
    %v3005 = vmul.f32 %v2685, %v2810
    %v3006 = vmul.f32 %v2686, %v2814
    %v3007 = vmul.f32 %v2687, %v2818
    %v3008 = vmul.f32 %v2688, %v2822
    %v3009 = vmul.f32 %v2689, %v2826
    %v3010 = vmul.f32 %v2690, %v2830
    %v3011 = vmul.f32 %v2691, %v2810
    %v3012 = vmul.f32 %v2692, %v2814
    %v3013 = vmul.f32 %v2693, %v2818
    %v3014 = vmul.f32 %v2694, %v2822
    %v3015 = vmul.f32 %v2695, %v2826
    %v3016 = vmul.f32 %v2696, %v2830
    %v3017 = vmul.f32 %v2697, %v2810
    %v3018 = vmul.f32 %v2698, %v2814
    %v3019 = vmul.f32 %v2699, %v2818
    %v3020 = vmul.f32 %v2700, %v2822
    %v3021 = vmul.f32 %v2701, %v2826
    %v3022 = vmul.f32 %v2702, %v2830
    %v3023 = vmul.f32 %v2703, %v2810
    %v3024 = vmul.f32 %v2704, %v2814
    %v3025 = vmul.f32 %v2705, %v2818
    %v3026 = vmul.f32 %v2706, %v2822
    %v3027 = vmul.f32 %v2707, %v2826
    %v3028 = vmul.f32 %v2708, %v2830
    %v3029 = vmul.f32 %v2709, %v2810
    %v3030 = vmul.f32 %v2710, %v2814
    %v3031 = vmul.f32 %v2711, %v2818
    %v3032 = vmul.f32 %v2712, %v2822
    %v3033 = vmul.f32 %v2713, %v2826
    %v3034 = vmul.f32 %v2714, %v2830
    %v3035 = vmul.f32 %v2715, %v2810
    %v3036 = vmul.f32 %v2716, %v2814
    %v3037 = vmul.f32 %v2717, %v2818
    %v3038 = vmul.f32 %v2718, %v2822
    %v3039 = vmul.f32 %v2719, %v2826
    %v3040 = vmul.f32 %v2720, %v2830
    %v3041 = vmul.f32 %v2721, %v2810
    %v3042 = vmul.f32 %v2722, %v2814
    %v3043 = vmul.f32 %v2723, %v2818
    %v3044 = vmul.f32 %v2724, %v2822
    %v3045 = vmul.f32 %v2725, %v2826
    %v3046 = vmul.f32 %v2726, %v2830
    %v3047 = vmul.f32 %v2727, %v2810
    %v3048 = vmul.f32 %v2728, %v2814
    %v3049 = vmul.f32 %v2729, %v2818
    %v3050 = vmul.f32 %v2730, %v2822
    %v3051 = vmul.f32 %v2731, %v2826
    %v3052 = vmul.f32 %v2732, %v2830
    %v3053 = vmul.f32 %v2733, %v2810
    %v3054 = vmul.f32 %v2734, %v2814
    %v3055 = vmul.f32 %v2735, %v2818
    %v3056 = vmul.f32 %v2736, %v2822
    %v3057 = vmul.f32 %v2737, %v2826
    %v3058 = vmul.f32 %v2738, %v2830
    %v3059 = vmul.f32 %v2739, %v2810
    %v3060 = vmul.f32 %v2740, %v2814
    %v3061 = vmul.f32 %v2741, %v2818
    %v3062 = vmul.f32 %v2742, %v2822
    %v3063 = vmul.f32 %v2743, %v2826
    %v3064 = vmul.f32 %v2744, %v2830
    %v3065 = vmul.f32 %v2745, %v2810
    %v3066 = vmul.f32 %v2746, %v2814
    %v3067 = vmul.f32 %v2747, %v2818
    %v3068 = vmul.f32 %v2748, %v2822
    %v3069 = vmul.f32 %v2749, %v2826
    %v3070 = vmul.f32 %v2750, %v2830
    %v3071 = vmul.f32 %v2751, %v2810
    %v3072 = vmul.f32 %v2752, %v2814
    %v3073 = vmul.f32 %v2753, %v2818
    %v3074 = vmul.f32 %v2754, %v2822
    %v3075 = vmul.f32 %v2755, %v2826
    %v3076 = vmul.f32 %v2756, %v2830
    %v3077 = vmul.f32 %v2757, %v2810
    %v3078 = vmul.f32 %v2758, %v2814
    %v3079 = vmul.f32 %v2759, %v2818
    %v3080 = vmul.f32 %v2760, %v2822
    %v3081 = vmul.f32 %v2761, %v2826
    %v3082 = vmul.f32 %v2762, %v2830
    %v3083 = vmul.f32 %v2763, %v2810
    %v3084 = vmul.f32 %v2764, %v2814
    %v3085 = vmul.f32 %v2765, %v2818
    %v3086 = vmul.f32 %v2766, %v2822
    %v3087 = vmul.f32 %v2767, %v2826
    %v3088 = vmul.f32 %v2768, %v2830
    %v3089 = vmul.f32 %v2769, %v2810
    %v3090 = vmul.f32 %v2770, %v2814
    %v3091 = vmul.f32 %v2771, %v2818
    %v3092 = vmul.f32 %v2772, %v2822
    %v3093 = vmul.f32 %v2773, %v2826
    %v3094 = vmul.f32 %v2774, %v2830
    %v3095 = vmul.f32 %v2775, %v2810
    %v3096 = vmul.f32 %v2776, %v2814
    %v3097 = vmul.f32 %v2777, %v2818
    %v3098 = vmul.f32 %v2778, %v2822
    %v3099 = vmul.f32 %v2779, %v2826
    %v3100 = vmul.f32 %v2780, %v2830
    %v3101 = vmul.f32 %v2781, %v2810
    %v3102 = vmul.f32 %v2782, %v2814
    %v3103 = vmul.f32 %v2783, %v2818
    %v3104 = vmul.f32 %v2784, %v2822
    %v3105 = vmul.f32 %v2785, %v2826
    %v3106 = vmul.f32 %v2786, %v2830
    %v3107 = vmul.f32 %v2787, %v2810
    %v3108 = vmul.f32 %v2788, %v2814
    %v3109 = vmul.f32 %v2789, %v2818
    %v3110 = vmul.f32 %v2790, %v2822
    %v3111 = vmul.f32 %v2791, %v2826
    %v3112 = vmul.f32 %v2792, %v2830
    %v3113 = vmul.f32 %v2793, %v2810
    %v3114 = vmul.f32 %v2794, %v2814
    %v3115 = vmul.f32 %v2795, %v2818
    %v3116 = vmul.f32 %v2796, %v2822
    %v3117 = vmul.f32 %v2797, %v2826
    %v3118 = vmul.f32 %v2798, %v2830
    %v3119 = vmul.f32 %v2799, %v2810
    %v3120 = vmul.f32 %v2800, %v2814
    %v3121 = vmul.f32 %v2801, %v2818
    %v3122 = vmul.f32 %v2802, %v2822
    %v3123 = vmul.f32 %v2803, %v2826
    %v3124 = vmul.f32 %v2804, %v2830
    %v3125 = vld [vmem:[#allocation8] sm:$0x3f]
    %v3127 = vlaneseq
    %v3128 = vshrl.u32 %v3127, 7
    %v3129 = vsub.s32 0, %v3128
    %v3130 = vrot.slane %v3125, %v3129
    %v3131 = vlaneseq
    %v3132 = vshrl.u32 %v3131, 7
    %v3133 = vsub.s32 1, %v3132
    %v3134 = vrot.slane %v3125, %v3133
    %v3135 = vlaneseq
    %v3136 = vshrl.u32 %v3135, 7
    %v3137 = vsub.s32 2, %v3136
    %v3138 = vrot.slane %v3125, %v3137
    %v3139 = vlaneseq
    %v3140 = vshrl.u32 %v3139, 7
    %v3141 = vsub.s32 3, %v3140
    %v3142 = vrot.slane %v3125, %v3141
    %v3143 = vlaneseq
    %v3144 = vshrl.u32 %v3143, 7
    %v3145 = vsub.s32 4, %v3144
    %v3146 = vrot.slane %v3125, %v3145
    %v3147 = vlaneseq
    %v3148 = vshrl.u32 %v3147, 7
    %v3149 = vsub.s32 5, %v3148
    %v3150 = vrot.slane %v3125, %v3149
    %v3157 = vadd.f32 %v2837, %v3130
    %v3158 = vadd.f32 %v2838, %v3134
    %v3159 = vadd.f32 %v2839, %v3138
    %v3160 = vadd.f32 %v2840, %v3142
    %v3161 = vadd.f32 %v2841, %v3146
    %v3162 = vadd.f32 %v2842, %v3150
    %v3163 = vadd.f32 %v2843, %v3130
    %v3164 = vadd.f32 %v2844, %v3134
    %v3165 = vadd.f32 %v2845, %v3138
    %v3166 = vadd.f32 %v2846, %v3142
    %v3167 = vadd.f32 %v2847, %v3146
    %v3168 = vadd.f32 %v2848, %v3150
    %v3169 = vadd.f32 %v2849, %v3130
    %v3170 = vadd.f32 %v2850, %v3134
    %v3171 = vadd.f32 %v2851, %v3138
    %v3172 = vadd.f32 %v2852, %v3142
    %v3173 = vadd.f32 %v2853, %v3146
    %v3174 = vadd.f32 %v2854, %v3150
    %v3175 = vadd.f32 %v2855, %v3130
    %v3176 = vadd.f32 %v2856, %v3134
    %v3177 = vadd.f32 %v2857, %v3138
    %v3178 = vadd.f32 %v2858, %v3142
    %v3179 = vadd.f32 %v2859, %v3146
    %v3180 = vadd.f32 %v2860, %v3150
    %v3181 = vadd.f32 %v2861, %v3130
    %v3182 = vadd.f32 %v2862, %v3134
    %v3183 = vadd.f32 %v2863, %v3138
    %v3184 = vadd.f32 %v2864, %v3142
    %v3185 = vadd.f32 %v2865, %v3146
    %v3186 = vadd.f32 %v2866, %v3150
    %v3187 = vadd.f32 %v2867, %v3130
    %v3188 = vadd.f32 %v2868, %v3134
    %v3189 = vadd.f32 %v2869, %v3138
    %v3190 = vadd.f32 %v2870, %v3142
    %v3191 = vadd.f32 %v2871, %v3146
    %v3192 = vadd.f32 %v2872, %v3150
    %v3193 = vadd.f32 %v2873, %v3130
    %v3194 = vadd.f32 %v2874, %v3134
    %v3195 = vadd.f32 %v2875, %v3138
    %v3196 = vadd.f32 %v2876, %v3142
    %v3197 = vadd.f32 %v2877, %v3146
    %v3198 = vadd.f32 %v2878, %v3150
    %v3199 = vadd.f32 %v2879, %v3130
    %v3200 = vadd.f32 %v2880, %v3134
    %v3201 = vadd.f32 %v2881, %v3138
    %v3202 = vadd.f32 %v2882, %v3142
    %v3203 = vadd.f32 %v2883, %v3146
    %v3204 = vadd.f32 %v2884, %v3150
    %v3205 = vadd.f32 %v2885, %v3130
    %v3206 = vadd.f32 %v2886, %v3134
    %v3207 = vadd.f32 %v2887, %v3138
    %v3208 = vadd.f32 %v2888, %v3142
    %v3209 = vadd.f32 %v2889, %v3146
    %v3210 = vadd.f32 %v2890, %v3150
    %v3211 = vadd.f32 %v2891, %v3130
    %v3212 = vadd.f32 %v2892, %v3134
    %v3213 = vadd.f32 %v2893, %v3138
    %v3214 = vadd.f32 %v2894, %v3142
    %v3215 = vadd.f32 %v2895, %v3146
    %v3216 = vadd.f32 %v2896, %v3150
    %v3217 = vadd.f32 %v2897, %v3130
    %v3218 = vadd.f32 %v2898, %v3134
    %v3219 = vadd.f32 %v2899, %v3138
    %v3220 = vadd.f32 %v2900, %v3142
    %v3221 = vadd.f32 %v2901, %v3146
    %v3222 = vadd.f32 %v2902, %v3150
    %v3223 = vadd.f32 %v2903, %v3130
    %v3224 = vadd.f32 %v2904, %v3134
    %v3225 = vadd.f32 %v2905, %v3138
    %v3226 = vadd.f32 %v2906, %v3142
    %v3227 = vadd.f32 %v2907, %v3146
    %v3228 = vadd.f32 %v2908, %v3150
    %v3229 = vadd.f32 %v2909, %v3130
    %v3230 = vadd.f32 %v2910, %v3134
    %v3231 = vadd.f32 %v2911, %v3138
    %v3232 = vadd.f32 %v2912, %v3142
    %v3233 = vadd.f32 %v2913, %v3146
    %v3234 = vadd.f32 %v2914, %v3150
    %v3235 = vadd.f32 %v2915, %v3130
    %v3236 = vadd.f32 %v2916, %v3134
    %v3237 = vadd.f32 %v2917, %v3138
    %v3238 = vadd.f32 %v2918, %v3142
    %v3239 = vadd.f32 %v2919, %v3146
    %v3240 = vadd.f32 %v2920, %v3150
    %v3241 = vadd.f32 %v2921, %v3130
    %v3242 = vadd.f32 %v2922, %v3134
    %v3243 = vadd.f32 %v2923, %v3138
    %v3244 = vadd.f32 %v2924, %v3142
    %v3245 = vadd.f32 %v2925, %v3146
    %v3246 = vadd.f32 %v2926, %v3150
    %v3247 = vadd.f32 %v2927, %v3130
    %v3248 = vadd.f32 %v2928, %v3134
    %v3249 = vadd.f32 %v2929, %v3138
    %v3250 = vadd.f32 %v2930, %v3142
    %v3251 = vadd.f32 %v2931, %v3146
    %v3252 = vadd.f32 %v2932, %v3150
    %v3253 = vadd.f32 %v2933, %v3130
    %v3254 = vadd.f32 %v2934, %v3134
    %v3255 = vadd.f32 %v2935, %v3138
    %v3256 = vadd.f32 %v2936, %v3142
    %v3257 = vadd.f32 %v2937, %v3146
    %v3258 = vadd.f32 %v2938, %v3150
    %v3259 = vadd.f32 %v2939, %v3130
    %v3260 = vadd.f32 %v2940, %v3134
    %v3261 = vadd.f32 %v2941, %v3138
    %v3262 = vadd.f32 %v2942, %v3142
    %v3263 = vadd.f32 %v2943, %v3146
    %v3264 = vadd.f32 %v2944, %v3150
    %v3265 = vadd.f32 %v2945, %v3130
    %v3266 = vadd.f32 %v2946, %v3134
    %v3267 = vadd.f32 %v2947, %v3138
    %v3268 = vadd.f32 %v2948, %v3142
    %v3269 = vadd.f32 %v2949, %v3146
    %v3270 = vadd.f32 %v2950, %v3150
    %v3271 = vadd.f32 %v2951, %v3130
    %v3272 = vadd.f32 %v2952, %v3134
    %v3273 = vadd.f32 %v2953, %v3138
    %v3274 = vadd.f32 %v2954, %v3142
    %v3275 = vadd.f32 %v2955, %v3146
    %v3276 = vadd.f32 %v2956, %v3150
    %v3277 = vadd.f32 %v2957, %v3130
    %v3278 = vadd.f32 %v2958, %v3134
    %v3279 = vadd.f32 %v2959, %v3138
    %v3280 = vadd.f32 %v2960, %v3142
    %v3281 = vadd.f32 %v2961, %v3146
    %v3282 = vadd.f32 %v2962, %v3150
    %v3283 = vadd.f32 %v2963, %v3130
    %v3284 = vadd.f32 %v2964, %v3134
    %v3285 = vadd.f32 %v2965, %v3138
    %v3286 = vadd.f32 %v2966, %v3142
    %v3287 = vadd.f32 %v2967, %v3146
    %v3288 = vadd.f32 %v2968, %v3150
    %v3289 = vadd.f32 %v2969, %v3130
    %v3290 = vadd.f32 %v2970, %v3134
    %v3291 = vadd.f32 %v2971, %v3138
    %v3292 = vadd.f32 %v2972, %v3142
    %v3293 = vadd.f32 %v2973, %v3146
    %v3294 = vadd.f32 %v2974, %v3150
    %v3295 = vadd.f32 %v2975, %v3130
    %v3296 = vadd.f32 %v2976, %v3134
    %v3297 = vadd.f32 %v2977, %v3138
    %v3298 = vadd.f32 %v2978, %v3142
    %v3299 = vadd.f32 %v2979, %v3146
    %v3300 = vadd.f32 %v2980, %v3150
    %v3301 = vadd.f32 %v2981, %v3130
    %v3302 = vadd.f32 %v2982, %v3134
    %v3303 = vadd.f32 %v2983, %v3138
    %v3304 = vadd.f32 %v2984, %v3142
    %v3305 = vadd.f32 %v2985, %v3146
    %v3306 = vadd.f32 %v2986, %v3150
    %v3307 = vadd.f32 %v2987, %v3130
    %v3308 = vadd.f32 %v2988, %v3134
    %v3309 = vadd.f32 %v2989, %v3138
    %v3310 = vadd.f32 %v2990, %v3142
    %v3311 = vadd.f32 %v2991, %v3146
    %v3312 = vadd.f32 %v2992, %v3150
    %v3313 = vadd.f32 %v2993, %v3130
    %v3314 = vadd.f32 %v2994, %v3134
    %v3315 = vadd.f32 %v2995, %v3138
    %v3316 = vadd.f32 %v2996, %v3142
    %v3317 = vadd.f32 %v2997, %v3146
    %v3318 = vadd.f32 %v2998, %v3150
    %v3319 = vadd.f32 %v2999, %v3130
    %v3320 = vadd.f32 %v3000, %v3134
    %v3321 = vadd.f32 %v3001, %v3138
    %v3322 = vadd.f32 %v3002, %v3142
    %v3323 = vadd.f32 %v3003, %v3146
    %v3324 = vadd.f32 %v3004, %v3150
    %v3325 = vadd.f32 %v3005, %v3130
    %v3326 = vadd.f32 %v3006, %v3134
    %v3327 = vadd.f32 %v3007, %v3138
    %v3328 = vadd.f32 %v3008, %v3142
    %v3329 = vadd.f32 %v3009, %v3146
    %v3330 = vadd.f32 %v3010, %v3150
    %v3331 = vadd.f32 %v3011, %v3130
    %v3332 = vadd.f32 %v3012, %v3134
    %v3333 = vadd.f32 %v3013, %v3138
    %v3334 = vadd.f32 %v3014, %v3142
    %v3335 = vadd.f32 %v3015, %v3146
    %v3336 = vadd.f32 %v3016, %v3150
    %v3337 = vadd.f32 %v3017, %v3130
    %v3338 = vadd.f32 %v3018, %v3134
    %v3339 = vadd.f32 %v3019, %v3138
    %v3340 = vadd.f32 %v3020, %v3142
    %v3341 = vadd.f32 %v3021, %v3146
    %v3342 = vadd.f32 %v3022, %v3150
    %v3343 = vadd.f32 %v3023, %v3130
    %v3344 = vadd.f32 %v3024, %v3134
    %v3345 = vadd.f32 %v3025, %v3138
    %v3346 = vadd.f32 %v3026, %v3142
    %v3347 = vadd.f32 %v3027, %v3146
    %v3348 = vadd.f32 %v3028, %v3150
    %v3349 = vadd.f32 %v3029, %v3130
    %v3350 = vadd.f32 %v3030, %v3134
    %v3351 = vadd.f32 %v3031, %v3138
    %v3352 = vadd.f32 %v3032, %v3142
    %v3353 = vadd.f32 %v3033, %v3146
    %v3354 = vadd.f32 %v3034, %v3150
    %v3355 = vadd.f32 %v3035, %v3130
    %v3356 = vadd.f32 %v3036, %v3134
    %v3357 = vadd.f32 %v3037, %v3138
    %v3358 = vadd.f32 %v3038, %v3142
    %v3359 = vadd.f32 %v3039, %v3146
    %v3360 = vadd.f32 %v3040, %v3150
    %v3361 = vadd.f32 %v3041, %v3130
    %v3362 = vadd.f32 %v3042, %v3134
    %v3363 = vadd.f32 %v3043, %v3138
    %v3364 = vadd.f32 %v3044, %v3142
    %v3365 = vadd.f32 %v3045, %v3146
    %v3366 = vadd.f32 %v3046, %v3150
    %v3367 = vadd.f32 %v3047, %v3130
    %v3368 = vadd.f32 %v3048, %v3134
    %v3369 = vadd.f32 %v3049, %v3138
    %v3370 = vadd.f32 %v3050, %v3142
    %v3371 = vadd.f32 %v3051, %v3146
    %v3372 = vadd.f32 %v3052, %v3150
    %v3373 = vadd.f32 %v3053, %v3130
    %v3374 = vadd.f32 %v3054, %v3134
    %v3375 = vadd.f32 %v3055, %v3138
    %v3376 = vadd.f32 %v3056, %v3142
    %v3377 = vadd.f32 %v3057, %v3146
    %v3378 = vadd.f32 %v3058, %v3150
    %v3379 = vadd.f32 %v3059, %v3130
    %v3380 = vadd.f32 %v3060, %v3134
    %v3381 = vadd.f32 %v3061, %v3138
    %v3382 = vadd.f32 %v3062, %v3142
    %v3383 = vadd.f32 %v3063, %v3146
    %v3384 = vadd.f32 %v3064, %v3150
    %v3385 = vadd.f32 %v3065, %v3130
    %v3386 = vadd.f32 %v3066, %v3134
    %v3387 = vadd.f32 %v3067, %v3138
    %v3388 = vadd.f32 %v3068, %v3142
    %v3389 = vadd.f32 %v3069, %v3146
    %v3390 = vadd.f32 %v3070, %v3150
    %v3391 = vadd.f32 %v3071, %v3130
    %v3392 = vadd.f32 %v3072, %v3134
    %v3393 = vadd.f32 %v3073, %v3138
    %v3394 = vadd.f32 %v3074, %v3142
    %v3395 = vadd.f32 %v3075, %v3146
    %v3396 = vadd.f32 %v3076, %v3150
    %v3397 = vadd.f32 %v3077, %v3130
    %v3398 = vadd.f32 %v3078, %v3134
    %v3399 = vadd.f32 %v3079, %v3138
    %v3400 = vadd.f32 %v3080, %v3142
    %v3401 = vadd.f32 %v3081, %v3146
    %v3402 = vadd.f32 %v3082, %v3150
    %v3403 = vadd.f32 %v3083, %v3130
    %v3404 = vadd.f32 %v3084, %v3134
    %v3405 = vadd.f32 %v3085, %v3138
    %v3406 = vadd.f32 %v3086, %v3142
    %v3407 = vadd.f32 %v3087, %v3146
    %v3408 = vadd.f32 %v3088, %v3150
    %v3409 = vadd.f32 %v3089, %v3130
    %v3410 = vadd.f32 %v3090, %v3134
    %v3411 = vadd.f32 %v3091, %v3138
    %v3412 = vadd.f32 %v3092, %v3142
    %v3413 = vadd.f32 %v3093, %v3146
    %v3414 = vadd.f32 %v3094, %v3150
    %v3415 = vadd.f32 %v3095, %v3130
    %v3416 = vadd.f32 %v3096, %v3134
    %v3417 = vadd.f32 %v3097, %v3138
    %v3418 = vadd.f32 %v3098, %v3142
    %v3419 = vadd.f32 %v3099, %v3146
    %v3420 = vadd.f32 %v3100, %v3150
    %v3421 = vadd.f32 %v3101, %v3130
    %v3422 = vadd.f32 %v3102, %v3134
    %v3423 = vadd.f32 %v3103, %v3138
    %v3424 = vadd.f32 %v3104, %v3142
    %v3425 = vadd.f32 %v3105, %v3146
    %v3426 = vadd.f32 %v3106, %v3150
    %v3427 = vadd.f32 %v3107, %v3130
    %v3428 = vadd.f32 %v3108, %v3134
    %v3429 = vadd.f32 %v3109, %v3138
    %v3430 = vadd.f32 %v3110, %v3142
    %v3431 = vadd.f32 %v3111, %v3146
    %v3432 = vadd.f32 %v3112, %v3150
    %v3433 = vadd.f32 %v3113, %v3130
    %v3434 = vadd.f32 %v3114, %v3134
    %v3435 = vadd.f32 %v3115, %v3138
    %v3436 = vadd.f32 %v3116, %v3142
    %v3437 = vadd.f32 %v3117, %v3146
    %v3438 = vadd.f32 %v3118, %v3150
    %v3439 = vadd.f32 %v3119, %v3130
    %v3440 = vadd.f32 %v3120, %v3134
    %v3441 = vadd.f32 %v3121, %v3138
    %v3442 = vadd.f32 %v3122, %v3142
    %v3443 = vadd.f32 %v3123, %v3146
    %v3444 = vadd.f32 %v3124, %v3150
    %3445 = vst [vmem:[#allocation10] sm:$0xff] %v3157
    %3446 = vst [vmem:[#allocation10 + $0x8] sm:$0xff] %v3158
    %3447 = vst [vmem:[#allocation10 + $0x10] sm:$0xff] %v3159
    %3448 = vst [vmem:[#allocation10 + $0x18] sm:$0xff] %v3160
    %3449 = vst [vmem:[#allocation10 + $0x20] sm:$0xff] %v3161
    %3450 = vst [vmem:[#allocation10 + $0x28] sm:$0xff] %v3162
    %3451 = vst [vmem:[#allocation10 + $0x30] sm:$0xff] %v3163
    %3452 = vst [vmem:[#allocation10 + $0x38] sm:$0xff] %v3164
    %3453 = vst [vmem:[#allocation10 + $0x40] sm:$0xff] %v3165
    %3454 = vst [vmem:[#allocation10 + $0x48] sm:$0xff] %v3166
    %3455 = vst [vmem:[#allocation10 + $0x50] sm:$0xff] %v3167
    %3456 = vst [vmem:[#allocation10 + $0x58] sm:$0xff] %v3168
    %3457 = vst [vmem:[#allocation10 + $0x60] sm:$0xff] %v3169
    %3458 = vst [vmem:[#allocation10 + $0x68] sm:$0xff] %v3170
    %3459 = vst [vmem:[#allocation10 + $0x70] sm:$0xff] %v3171
    %3460 = vst [vmem:[#allocation10 + $0x78] sm:$0xff] %v3172
    %3461 = vst [vmem:[#allocation10 + $0x80] sm:$0xff] %v3173
    %3462 = vst [vmem:[#allocation10 + $0x88] sm:$0xff] %v3174
    %3463 = vst [vmem:[#allocation10 + $0x90] sm:$0xff] %v3175
    %3464 = vst [vmem:[#allocation10 + $0x98] sm:$0xff] %v3176
    %3465 = vst [vmem:[#allocation10 + $0xa0] sm:$0xff] %v3177
    %3466 = vst [vmem:[#allocation10 + $0xa8] sm:$0xff] %v3178
    %3467 = vst [vmem:[#allocation10 + $0xb0] sm:$0xff] %v3179
    %3468 = vst [vmem:[#allocation10 + $0xb8] sm:$0xff] %v3180
    %3469 = vst [vmem:[#allocation10 + $0xc0] sm:$0xff] %v3181
    %3470 = vst [vmem:[#allocation10 + $0xc8] sm:$0xff] %v3182
    %3471 = vst [vmem:[#allocation10 + $0xd0] sm:$0xff] %v3183
    %3472 = vst [vmem:[#allocation10 + $0xd8] sm:$0xff] %v3184
    %3473 = vst [vmem:[#allocation10 + $0xe0] sm:$0xff] %v3185
    %3474 = vst [vmem:[#allocation10 + $0xe8] sm:$0xff] %v3186
    %3475 = vst [vmem:[#allocation10 + $0xf0] sm:$0xff] %v3187
    %3476 = vst [vmem:[#allocation10 + $0xf8] sm:$0xff] %v3188
    %3477 = vst [vmem:[#allocation10 + $0x100] sm:$0xff] %v3189
    %3478 = vst [vmem:[#allocation10 + $0x108] sm:$0xff] %v3190
    %3479 = vst [vmem:[#allocation10 + $0x110] sm:$0xff] %v3191
    %3480 = vst [vmem:[#allocation10 + $0x118] sm:$0xff] %v3192
    %3481 = vst [vmem:[#allocation10 + $0x120] sm:$0xff] %v3193
    %3482 = vst [vmem:[#allocation10 + $0x128] sm:$0xff] %v3194
    %3483 = vst [vmem:[#allocation10 + $0x130] sm:$0xff] %v3195
    %3484 = vst [vmem:[#allocation10 + $0x138] sm:$0xff] %v3196
    %3485 = vst [vmem:[#allocation10 + $0x140] sm:$0xff] %v3197
    %3486 = vst [vmem:[#allocation10 + $0x148] sm:$0xff] %v3198
    %3487 = vst [vmem:[#allocation10 + $0x150] sm:$0xff] %v3199
    %3488 = vst [vmem:[#allocation10 + $0x158] sm:$0xff] %v3200
    %3489 = vst [vmem:[#allocation10 + $0x160] sm:$0xff] %v3201
    %3490 = vst [vmem:[#allocation10 + $0x168] sm:$0xff] %v3202
    %3491 = vst [vmem:[#allocation10 + $0x170] sm:$0xff] %v3203
    %3492 = vst [vmem:[#allocation10 + $0x178] sm:$0xff] %v3204
    %3493 = vst [vmem:[#allocation10 + $0x180] sm:$0xff] %v3205
    %3494 = vst [vmem:[#allocation10 + $0x188] sm:$0xff] %v3206
    %3495 = vst [vmem:[#allocation10 + $0x190] sm:$0xff] %v3207
    %3496 = vst [vmem:[#allocation10 + $0x198] sm:$0xff] %v3208
    %3497 = vst [vmem:[#allocation10 + $0x1a0] sm:$0xff] %v3209
    %3498 = vst [vmem:[#allocation10 + $0x1a8] sm:$0xff] %v3210
    %3499 = vst [vmem:[#allocation10 + $0x1b0] sm:$0xff] %v3211
    %3500 = vst [vmem:[#allocation10 + $0x1b8] sm:$0xff] %v3212
    %3501 = vst [vmem:[#allocation10 + $0x1c0] sm:$0xff] %v3213
    %3502 = vst [vmem:[#allocation10 + $0x1c8] sm:$0xff] %v3214
    %3503 = vst [vmem:[#allocation10 + $0x1d0] sm:$0xff] %v3215
    %3504 = vst [vmem:[#allocation10 + $0x1d8] sm:$0xff] %v3216
    %3505 = vst [vmem:[#allocation10 + $0x1e0] sm:$0xff] %v3217
    %3506 = vst [vmem:[#allocation10 + $0x1e8] sm:$0xff] %v3218
    %3507 = vst [vmem:[#allocation10 + $0x1f0] sm:$0xff] %v3219
    %3508 = vst [vmem:[#allocation10 + $0x1f8] sm:$0xff] %v3220
    %3509 = vst [vmem:[#allocation10 + $0x200] sm:$0xff] %v3221
    %3510 = vst [vmem:[#allocation10 + $0x208] sm:$0xff] %v3222
    %3511 = vst [vmem:[#allocation10 + $0x210] sm:$0xff] %v3223
    %3512 = vst [vmem:[#allocation10 + $0x218] sm:$0xff] %v3224
    %3513 = vst [vmem:[#allocation10 + $0x220] sm:$0xff] %v3225
    %3514 = vst [vmem:[#allocation10 + $0x228] sm:$0xff] %v3226
    %3515 = vst [vmem:[#allocation10 + $0x230] sm:$0xff] %v3227
    %3516 = vst [vmem:[#allocation10 + $0x238] sm:$0xff] %v3228
    %3517 = vst [vmem:[#allocation10 + $0x240] sm:$0xff] %v3229
    %3518 = vst [vmem:[#allocation10 + $0x248] sm:$0xff] %v3230
    %3519 = vst [vmem:[#allocation10 + $0x250] sm:$0xff] %v3231
    %3520 = vst [vmem:[#allocation10 + $0x258] sm:$0xff] %v3232
    %3521 = vst [vmem:[#allocation10 + $0x260] sm:$0xff] %v3233
    %3522 = vst [vmem:[#allocation10 + $0x268] sm:$0xff] %v3234
    %3523 = vst [vmem:[#allocation10 + $0x270] sm:$0xff] %v3235
    %3524 = vst [vmem:[#allocation10 + $0x278] sm:$0xff] %v3236
    %3525 = vst [vmem:[#allocation10 + $0x280] sm:$0xff] %v3237
    %3526 = vst [vmem:[#allocation10 + $0x288] sm:$0xff] %v3238
    %3527 = vst [vmem:[#allocation10 + $0x290] sm:$0xff] %v3239
    %3528 = vst [vmem:[#allocation10 + $0x298] sm:$0xff] %v3240
    %3529 = vst [vmem:[#allocation10 + $0x2a0] sm:$0xff] %v3241
    %3530 = vst [vmem:[#allocation10 + $0x2a8] sm:$0xff] %v3242
    %3531 = vst [vmem:[#allocation10 + $0x2b0] sm:$0xff] %v3243
    %3532 = vst [vmem:[#allocation10 + $0x2b8] sm:$0xff] %v3244
    %3533 = vst [vmem:[#allocation10 + $0x2c0] sm:$0xff] %v3245
    %3534 = vst [vmem:[#allocation10 + $0x2c8] sm:$0xff] %v3246
    %3535 = vst [vmem:[#allocation10 + $0x2d0] sm:$0xff] %v3247
    %3536 = vst [vmem:[#allocation10 + $0x2d8] sm:$0xff] %v3248
    %3537 = vst [vmem:[#allocation10 + $0x2e0] sm:$0xff] %v3249
    %3538 = vst [vmem:[#allocation10 + $0x2e8] sm:$0xff] %v3250
    %3539 = vst [vmem:[#allocation10 + $0x2f0] sm:$0xff] %v3251
    %3540 = vst [vmem:[#allocation10 + $0x2f8] sm:$0xff] %v3252
    %3541 = vst [vmem:[#allocation10 + $0x300] sm:$0xff] %v3253
    %3542 = vst [vmem:[#allocation10 + $0x308] sm:$0xff] %v3254
    %3543 = vst [vmem:[#allocation10 + $0x310] sm:$0xff] %v3255
    %3544 = vst [vmem:[#allocation10 + $0x318] sm:$0xff] %v3256
    %3545 = vst [vmem:[#allocation10 + $0x320] sm:$0xff] %v3257
    %3546 = vst [vmem:[#allocation10 + $0x328] sm:$0xff] %v3258
    %3547 = vst [vmem:[#allocation10 + $0x330] sm:$0xff] %v3259
    %3548 = vst [vmem:[#allocation10 + $0x338] sm:$0xff] %v3260
    %3549 = vst [vmem:[#allocation10 + $0x340] sm:$0xff] %v3261
    %3550 = vst [vmem:[#allocation10 + $0x348] sm:$0xff] %v3262
    %3551 = vst [vmem:[#allocation10 + $0x350] sm:$0xff] %v3263
    %3552 = vst [vmem:[#allocation10 + $0x358] sm:$0xff] %v3264
    %3553 = vst [vmem:[#allocation10 + $0x360] sm:$0xff] %v3265
    %3554 = vst [vmem:[#allocation10 + $0x368] sm:$0xff] %v3266
    %3555 = vst [vmem:[#allocation10 + $0x370] sm:$0xff] %v3267
    %3556 = vst [vmem:[#allocation10 + $0x378] sm:$0xff] %v3268
    %3557 = vst [vmem:[#allocation10 + $0x380] sm:$0xff] %v3269
    %3558 = vst [vmem:[#allocation10 + $0x388] sm:$0xff] %v3270
    %3559 = vst [vmem:[#allocation10 + $0x390] sm:$0xff] %v3271
    %3560 = vst [vmem:[#allocation10 + $0x398] sm:$0xff] %v3272
    %3561 = vst [vmem:[#allocation10 + $0x3a0] sm:$0xff] %v3273
    %3562 = vst [vmem:[#allocation10 + $0x3a8] sm:$0xff] %v3274
    %3563 = vst [vmem:[#allocation10 + $0x3b0] sm:$0xff] %v3275
    %3564 = vst [vmem:[#allocation10 + $0x3b8] sm:$0xff] %v3276
    %3565 = vst [vmem:[#allocation10 + $0x3c0] sm:$0xff] %v3277
    %3566 = vst [vmem:[#allocation10 + $0x3c8] sm:$0xff] %v3278
    %3567 = vst [vmem:[#allocation10 + $0x3d0] sm:$0xff] %v3279
    %3568 = vst [vmem:[#allocation10 + $0x3d8] sm:$0xff] %v3280
    %3569 = vst [vmem:[#allocation10 + $0x3e0] sm:$0xff] %v3281
    %3570 = vst [vmem:[#allocation10 + $0x3e8] sm:$0xff] %v3282
    %3571 = vst [vmem:[#allocation10 + $0x3f0] sm:$0xff] %v3283
    %3572 = vst [vmem:[#allocation10 + $0x3f8] sm:$0xff] %v3284
    %3573 = vst [vmem:[#allocation10 + $0x400] sm:$0xff] %v3285
    %3574 = vst [vmem:[#allocation10 + $0x408] sm:$0xff] %v3286
    %3575 = vst [vmem:[#allocation10 + $0x410] sm:$0xff] %v3287
    %3576 = vst [vmem:[#allocation10 + $0x418] sm:$0xff] %v3288
    %3577 = vst [vmem:[#allocation10 + $0x420] sm:$0xff] %v3289
    %3578 = vst [vmem:[#allocation10 + $0x428] sm:$0xff] %v3290
    %3579 = vst [vmem:[#allocation10 + $0x430] sm:$0xff] %v3291
    %3580 = vst [vmem:[#allocation10 + $0x438] sm:$0xff] %v3292
    %3581 = vst [vmem:[#allocation10 + $0x440] sm:$0xff] %v3293
    %3582 = vst [vmem:[#allocation10 + $0x448] sm:$0xff] %v3294
    %3583 = vst [vmem:[#allocation10 + $0x450] sm:$0xff] %v3295
    %3584 = vst [vmem:[#allocation10 + $0x458] sm:$0xff] %v3296
    %3585 = vst [vmem:[#allocation10 + $0x460] sm:$0xff] %v3297
    %3586 = vst [vmem:[#allocation10 + $0x468] sm:$0xff] %v3298
    %3587 = vst [vmem:[#allocation10 + $0x470] sm:$0xff] %v3299
    %3588 = vst [vmem:[#allocation10 + $0x478] sm:$0xff] %v3300
    %3589 = vst [vmem:[#allocation10 + $0x480] sm:$0xff] %v3301
    %3590 = vst [vmem:[#allocation10 + $0x488] sm:$0xff] %v3302
    %3591 = vst [vmem:[#allocation10 + $0x490] sm:$0xff] %v3303
    %3592 = vst [vmem:[#allocation10 + $0x498] sm:$0xff] %v3304
    %3593 = vst [vmem:[#allocation10 + $0x4a0] sm:$0xff] %v3305
    %3594 = vst [vmem:[#allocation10 + $0x4a8] sm:$0xff] %v3306
    %3595 = vst [vmem:[#allocation10 + $0x4b0] sm:$0xff] %v3307
    %3596 = vst [vmem:[#allocation10 + $0x4b8] sm:$0xff] %v3308
    %3597 = vst [vmem:[#allocation10 + $0x4c0] sm:$0xff] %v3309
    %3598 = vst [vmem:[#allocation10 + $0x4c8] sm:$0xff] %v3310
    %3599 = vst [vmem:[#allocation10 + $0x4d0] sm:$0xff] %v3311
    %3600 = vst [vmem:[#allocation10 + $0x4d8] sm:$0xff] %v3312
    %3601 = vst [vmem:[#allocation10 + $0x4e0] sm:$0xff] %v3313
    %3602 = vst [vmem:[#allocation10 + $0x4e8] sm:$0xff] %v3314
    %3603 = vst [vmem:[#allocation10 + $0x4f0] sm:$0xff] %v3315
    %3604 = vst [vmem:[#allocation10 + $0x4f8] sm:$0xff] %v3316
    %3605 = vst [vmem:[#allocation10 + $0x500] sm:$0xff] %v3317
    %3606 = vst [vmem:[#allocation10 + $0x508] sm:$0xff] %v3318
    %3607 = vst [vmem:[#allocation10 + $0x510] sm:$0xff] %v3319
    %3608 = vst [vmem:[#allocation10 + $0x518] sm:$0xff] %v3320
    %3609 = vst [vmem:[#allocation10 + $0x520] sm:$0xff] %v3321
    %3610 = vst [vmem:[#allocation10 + $0x528] sm:$0xff] %v3322
    %3611 = vst [vmem:[#allocation10 + $0x530] sm:$0xff] %v3323
    %3612 = vst [vmem:[#allocation10 + $0x538] sm:$0xff] %v3324
    %3613 = vst [vmem:[#allocation10 + $0x540] sm:$0xff] %v3325
    %3614 = vst [vmem:[#allocation10 + $0x548] sm:$0xff] %v3326
    %3615 = vst [vmem:[#allocation10 + $0x550] sm:$0xff] %v3327
    %3616 = vst [vmem:[#allocation10 + $0x558] sm:$0xff] %v3328
    %3617 = vst [vmem:[#allocation10 + $0x560] sm:$0xff] %v3329
    %3618 = vst [vmem:[#allocation10 + $0x568] sm:$0xff] %v3330
    %3619 = vst [vmem:[#allocation10 + $0x570] sm:$0xff] %v3331
    %3620 = vst [vmem:[#allocation10 + $0x578] sm:$0xff] %v3332
    %3621 = vst [vmem:[#allocation10 + $0x580] sm:$0xff] %v3333
    %3622 = vst [vmem:[#allocation10 + $0x588] sm:$0xff] %v3334
    %3623 = vst [vmem:[#allocation10 + $0x590] sm:$0xff] %v3335
    %3624 = vst [vmem:[#allocation10 + $0x598] sm:$0xff] %v3336
    %3625 = vst [vmem:[#allocation10 + $0x5a0] sm:$0xff] %v3337
    %3626 = vst [vmem:[#allocation10 + $0x5a8] sm:$0xff] %v3338
    %3627 = vst [vmem:[#allocation10 + $0x5b0] sm:$0xff] %v3339
    %3628 = vst [vmem:[#allocation10 + $0x5b8] sm:$0xff] %v3340
    %3629 = vst [vmem:[#allocation10 + $0x5c0] sm:$0xff] %v3341
    %3630 = vst [vmem:[#allocation10 + $0x5c8] sm:$0xff] %v3342
    %3631 = vst [vmem:[#allocation10 + $0x5d0] sm:$0xff] %v3343
    %3632 = vst [vmem:[#allocation10 + $0x5d8] sm:$0xff] %v3344
    %3633 = vst [vmem:[#allocation10 + $0x5e0] sm:$0xff] %v3345
    %3634 = vst [vmem:[#allocation10 + $0x5e8] sm:$0xff] %v3346
    %3635 = vst [vmem:[#allocation10 + $0x5f0] sm:$0xff] %v3347
    %3636 = vst [vmem:[#allocation10 + $0x5f8] sm:$0xff] %v3348
    %3637 = vst [vmem:[#allocation10 + $0x600] sm:$0xff] %v3349
    %3638 = vst [vmem:[#allocation10 + $0x608] sm:$0xff] %v3350
    %3639 = vst [vmem:[#allocation10 + $0x610] sm:$0xff] %v3351
    %3640 = vst [vmem:[#allocation10 + $0x618] sm:$0xff] %v3352
    %3641 = vst [vmem:[#allocation10 + $0x620] sm:$0xff] %v3353
    %3642 = vst [vmem:[#allocation10 + $0x628] sm:$0xff] %v3354
    %3643 = vst [vmem:[#allocation10 + $0x630] sm:$0xff] %v3355
    %3644 = vst [vmem:[#allocation10 + $0x638] sm:$0xff] %v3356
    %3645 = vst [vmem:[#allocation10 + $0x640] sm:$0xff] %v3357
    %3646 = vst [vmem:[#allocation10 + $0x648] sm:$0xff] %v3358
    %3647 = vst [vmem:[#allocation10 + $0x650] sm:$0xff] %v3359
    %3648 = vst [vmem:[#allocation10 + $0x658] sm:$0xff] %v3360
    %3649 = vst [vmem:[#allocation10 + $0x660] sm:$0xff] %v3361
    %3650 = vst [vmem:[#allocation10 + $0x668] sm:$0xff] %v3362
    %3651 = vst [vmem:[#allocation10 + $0x670] sm:$0xff] %v3363
    %3652 = vst [vmem:[#allocation10 + $0x678] sm:$0xff] %v3364
    %3653 = vst [vmem:[#allocation10 + $0x680] sm:$0xff] %v3365
    %3654 = vst [vmem:[#allocation10 + $0x688] sm:$0xff] %v3366
    %3655 = vst [vmem:[#allocation10 + $0x690] sm:$0xff] %v3367
    %3656 = vst [vmem:[#allocation10 + $0x698] sm:$0xff] %v3368
    %3657 = vst [vmem:[#allocation10 + $0x6a0] sm:$0xff] %v3369
    %3658 = vst [vmem:[#allocation10 + $0x6a8] sm:$0xff] %v3370
    %3659 = vst [vmem:[#allocation10 + $0x6b0] sm:$0xff] %v3371
    %3660 = vst [vmem:[#allocation10 + $0x6b8] sm:$0xff] %v3372
    %3661 = vst [vmem:[#allocation10 + $0x6c0] sm:$0xff] %v3373
    %3662 = vst [vmem:[#allocation10 + $0x6c8] sm:$0xff] %v3374
    %3663 = vst [vmem:[#allocation10 + $0x6d0] sm:$0xff] %v3375
    %3664 = vst [vmem:[#allocation10 + $0x6d8] sm:$0xff] %v3376
    %3665 = vst [vmem:[#allocation10 + $0x6e0] sm:$0xff] %v3377
    %3666 = vst [vmem:[#allocation10 + $0x6e8] sm:$0xff] %v3378
    %3667 = vst [vmem:[#allocation10 + $0x6f0] sm:$0xff] %v3379
    %3668 = vst [vmem:[#allocation10 + $0x6f8] sm:$0xff] %v3380
    %3669 = vst [vmem:[#allocation10 + $0x700] sm:$0xff] %v3381
    %3670 = vst [vmem:[#allocation10 + $0x708] sm:$0xff] %v3382
    %3671 = vst [vmem:[#allocation10 + $0x710] sm:$0xff] %v3383
    %3672 = vst [vmem:[#allocation10 + $0x718] sm:$0xff] %v3384
    %3673 = vst [vmem:[#allocation10 + $0x720] sm:$0xff] %v3385
    %3674 = vst [vmem:[#allocation10 + $0x728] sm:$0xff] %v3386
    %3675 = vst [vmem:[#allocation10 + $0x730] sm:$0xff] %v3387
    %3676 = vst [vmem:[#allocation10 + $0x738] sm:$0xff] %v3388
    %3677 = vst [vmem:[#allocation10 + $0x740] sm:$0xff] %v3389
    %3678 = vst [vmem:[#allocation10 + $0x748] sm:$0xff] %v3390
    %3679 = vst [vmem:[#allocation10 + $0x750] sm:$0xff] %v3391
    %3680 = vst [vmem:[#allocation10 + $0x758] sm:$0xff] %v3392
    %3681 = vst [vmem:[#allocation10 + $0x760] sm:$0xff] %v3393
    %3682 = vst [vmem:[#allocation10 + $0x768] sm:$0xff] %v3394
    %3683 = vst [vmem:[#allocation10 + $0x770] sm:$0xff] %v3395
    %3684 = vst [vmem:[#allocation10 + $0x778] sm:$0xff] %v3396
    %3685 = vst [vmem:[#allocation10 + $0x780] sm:$0xff] %v3397
    %3686 = vst [vmem:[#allocation10 + $0x788] sm:$0xff] %v3398
    %3687 = vst [vmem:[#allocation10 + $0x790] sm:$0xff] %v3399
    %3688 = vst [vmem:[#allocation10 + $0x798] sm:$0xff] %v3400
    %3689 = vst [vmem:[#allocation10 + $0x7a0] sm:$0xff] %v3401
    %3690 = vst [vmem:[#allocation10 + $0x7a8] sm:$0xff] %v3402
    %3691 = vst [vmem:[#allocation10 + $0x7b0] sm:$0xff] %v3403
    %3692 = vst [vmem:[#allocation10 + $0x7b8] sm:$0xff] %v3404
    %3693 = vst [vmem:[#allocation10 + $0x7c0] sm:$0xff] %v3405
    %3694 = vst [vmem:[#allocation10 + $0x7c8] sm:$0xff] %v3406
    %3695 = vst [vmem:[#allocation10 + $0x7d0] sm:$0xff] %v3407
    %3696 = vst [vmem:[#allocation10 + $0x7d8] sm:$0xff] %v3408
    %3697 = vst [vmem:[#allocation10 + $0x7e0] sm:$0xff] %v3409
    %3698 = vst [vmem:[#allocation10 + $0x7e8] sm:$0xff] %v3410
    %3699 = vst [vmem:[#allocation10 + $0x7f0] sm:$0xff] %v3411
    %3700 = vst [vmem:[#allocation10 + $0x7f8] sm:$0xff] %v3412
    %3701 = vst [vmem:[#allocation10 + $0x800] sm:$0xff] %v3413
    %3702 = vst [vmem:[#allocation10 + $0x808] sm:$0xff] %v3414
    %3703 = vst [vmem:[#allocation10 + $0x810] sm:$0xff] %v3415
    %3704 = vst [vmem:[#allocation10 + $0x818] sm:$0xff] %v3416
    %3705 = vst [vmem:[#allocation10 + $0x820] sm:$0xff] %v3417
    %3706 = vst [vmem:[#allocation10 + $0x828] sm:$0xff] %v3418
    %3707 = vst [vmem:[#allocation10 + $0x830] sm:$0xff] %v3419
    %3708 = vst [vmem:[#allocation10 + $0x838] sm:$0xff] %v3420
    %3709 = vst [vmem:[#allocation10 + $0x840] sm:$0xff] %v3421
    %3710 = vst [vmem:[#allocation10 + $0x848] sm:$0xff] %v3422
    %3711 = vst [vmem:[#allocation10 + $0x850] sm:$0xff] %v3423
    %3712 = vst [vmem:[#allocation10 + $0x858] sm:$0xff] %v3424
    %3713 = vst [vmem:[#allocation10 + $0x860] sm:$0xff] %v3425
    %3714 = vst [vmem:[#allocation10 + $0x868] sm:$0xff] %v3426
    %3715 = vst [vmem:[#allocation10 + $0x870] sm:$0xff] %v3427
    %3716 = vst [vmem:[#allocation10 + $0x878] sm:$0xff] %v3428
    %3717 = vst [vmem:[#allocation10 + $0x880] sm:$0xff] %v3429
    %3718 = vst [vmem:[#allocation10 + $0x888] sm:$0xff] %v3430
    %3719 = vst [vmem:[#allocation10 + $0x890] sm:$0xff] %v3431
    %3720 = vst [vmem:[#allocation10 + $0x898] sm:$0xff] %v3432
    %3721 = vst [vmem:[#allocation10 + $0x8a0] sm:$0xff] %v3433
    %3722 = vst [vmem:[#allocation10 + $0x8a8] sm:$0xff] %v3434
    %3723 = vst [vmem:[#allocation10 + $0x8b0] sm:$0xff] %v3435
    %3724 = vst [vmem:[#allocation10 + $0x8b8] sm:$0xff] %v3436
    %3725 = vst [vmem:[#allocation10 + $0x8c0] sm:$0xff] %v3437
    %3726 = vst [vmem:[#allocation10 + $0x8c8] sm:$0xff] %v3438
    %3727 = vst [vmem:[#allocation10 + $0x8d0] sm:$0xff] %v3439
    %3728 = vst [vmem:[#allocation10 + $0x8d8] sm:$0xff] %v3440
    %3729 = vst [vmem:[#allocation10 + $0x8e0] sm:$0xff] %v3441
    %3730 = vst [vmem:[#allocation10 + $0x8e8] sm:$0xff] %v3442
    %3731 = vst [vmem:[#allocation10 + $0x8f0] sm:$0xff] %v3443
    %3732 = vst [vmem:[#allocation10 + $0x8f8] sm:$0xff] %v3444
    // Predicated region
    $region34: #{tpu_custom_call.1} parent=1 // pred_check
      _
    $region35: #{tpu_custom_call.1} parent=1 // pred_check_branch
      %3734 = sbr.rel (0) target = $region37
    $region36: #{tpu_custom_call.1} parent=1 // pred_region
      %s3736 = ssub.s32 36864, 36864
      %3737 = vsyncadd [#allocation4], %s3736
      %s3738 = sshll.u32 [#allocation10], 4
      %s3739 = int_to_ptr.vmem [resolvable:$true] %s3738
      %3744 = dma.vmem_to_hbm [thread:$0]  %s3739, 36864, %s4, [#allocation4], 768, 768, 48
    $region37: #{tpu_custom_call.1} parent=1 // pred_fallthru
      _
    // Predicated region
    $region38: #{tpu_custom_call.1} parent=1 // pred_check
      _
    $region39: #{tpu_custom_call.1} parent=1 // pred_check_branch
      %3746 = sbr.rel (0) target = $region41
    $region40: #{tpu_custom_call.1} parent=1 // pred_region
      %3747 = dma.done [#allocation4], 36864
    $region41: #{tpu_custom_call.1} parent=1 // pred_fallthru
      _
    %3748 = vsyncpa [#allocation3], 1
    %3749 = vsyncpa [#allocation6], 1
    %3750 = vsyncpa [#allocation9], 1
    %3751 = vsyncpa [#allocation4], 1

</llo_original>
